<compile_context>
chip_gen: v7x
topology: tpu7x:2x2x1
jax: 0.10.0
libtpu: 0.0.40
codegen_flags: <defaults>
</compile_context>

<pallas_src>
import functools

import jax
import jax.numpy as jnp
from jax.experimental import pallas as pl
from jax.experimental.pallas import tpu as pltpu


_CDT = jnp.bfloat16   # MXU input dtype for the matmuls (f32 accumulation)


def seq_model_kernel(
    xemb_ref,    # (S*B, E)  f32  embedded tokens, time-major rows
    wih0_ref,    # (E, 4H)   bf16
    b0_ref,      # (1, 4H)   f32   b_ih_l0 + b_hh_l0
    whh0_ref,    # (H, 4H)   bf16
    wcat1_ref,   # (2H, 4H)  bf16  [W_ih_l1 ; W_hh_l1]
    b1_ref,      # (1, 4H)   f32   b_ih_l1 + b_hh_l1
    wlin_ref,    # (H, O)    bf16
    blin_ref,    # (1, O)    f32
    out_ref,     # (B, O)    f32
    *,
    seq_len: int,
    batch: int,
    hidden: int,
):
    H = hidden
    B = batch

    def cell(gates, c):
        """PyTorch LSTM cell nonlinearity. Gate order: i, f, g, o. All f32."""
        i = jax.nn.sigmoid(gates[:, 0 * H:1 * H])
        f = jax.nn.sigmoid(gates[:, 1 * H:2 * H])
        g = jnp.tanh(gates[:, 2 * H:3 * H])
        o = jax.nn.sigmoid(gates[:, 3 * H:4 * H])
        c_new = f * c + i * g
        h_new = o * jnp.tanh(c_new)
        return h_new, c_new

    # Hoisted layer-0 input projection: one big MXU op covering all timesteps.
    xproj = (
        jnp.dot(xemb_ref[...].astype(_CDT), wih0_ref[...],
                preferred_element_type=jnp.float32)
        + b0_ref[...]
    )                                                      # (S*B, 4H) f32

    h0 = jnp.zeros((B, H), jnp.float32)
    c0 = jnp.zeros((B, H), jnp.float32)
    h1 = jnp.zeros((B, H), jnp.float32)
    c1 = jnp.zeros((B, H), jnp.float32)

    # Fully-unrolled in-kernel recurrence; state stays in vregs (no VMEM
    # round-trips, no grid-step overhead).
    for t in range(seq_len):
        # Layer 0: only the recurrent matmul remains on the serial path.
        g0 = xproj[t * B:(t + 1) * B, :] + jnp.dot(
            h0.astype(_CDT), whh0_ref[...],
            preferred_element_type=jnp.float32)
        h0, c0 = cell(g0, c0)

        # Layer 1 (mode=0 -> no inter-layer dropout): single fused matmul on
        # concat([x_t, h]); concat is lane-aligned since H % 128 == 0.
        xin1 = jnp.concatenate([h0, h1], axis=1).astype(_CDT)   # (B, 2H)
        g1 = jnp.dot(xin1, wcat1_ref[...],
                     preferred_element_type=jnp.float32) + b1_ref[...]
        h1, c1 = cell(g1, c1)

    # Final Linear + LogSoftmax(dim=1) on the last timestep's hidden state.
    logits = jnp.dot(h1.astype(_CDT), wlin_ref[...],
                     preferred_element_type=jnp.float32) + blin_ref[...]
    m = jnp.max(logits, axis=1, keepdims=True)
    z = logits - m
    lse = jnp.log(jnp.sum(jnp.exp(z), axis=1, keepdims=True))
    out_ref[...] = (z - lse).astype(out_ref.dtype)


@jax.jit
def seq_model_forward(x_tokens, params):
    """x_tokens: (seq, batch) int32 token ids. Returns (batch, output) log-probs."""
    S, B = x_tokens.shape
    emb = params["embedding"]                     # (V, E) f32
    E = emb.shape[1]
    H = params["whh0"].shape[0]
    O = params["wlin"].shape[1]

    # Pad batch up to the 8-row sublane granularity (free MXU/VPU rows).
    B_pad = max(8, -(-B // 8) * 8)
    if B_pad != B:
        x_tokens = jnp.pad(x_tokens, ((0, 0), (0, B_pad - B)))

    # Embedding gather stays as tiny plain-XLA glue; rows are time-major.
    # TODO(synk): move the gather in-kernel (scalar-prefetched token ids +
    # VMEM-resident table) if profiling shows the separate XLA gather matters.
    x_emb = emb[x_tokens].reshape(S * B_pad, E)   # (S*B, E) f32

    # bf16 matmul weights, f32 biases; layer-1 input/recurrent weights fused.
    wih0 = params["wih0"].astype(_CDT)
    whh0 = params["whh0"].astype(_CDT)
    wcat1 = jnp.concatenate([params["wih1"], params["whh1"]],
                            axis=0).astype(_CDT)
    wlin = params["wlin"].astype(_CDT)

    kernel = functools.partial(seq_model_kernel, seq_len=S, batch=B_pad,
                               hidden=H)

    vmem = pl.BlockSpec(memory_space=pltpu.MemorySpace.VMEM)
    out = pl.pallas_call(
        kernel,
        out_shape=jax.ShapeDtypeStruct((B_pad, O), jnp.float32),
        in_specs=[vmem] * 8,
        out_specs=vmem,
    )(x_emb, wih0, params["b0"], whh0, wcat1, params["b1"], wlin,
      params["blin"])

    return out[:B]


def _reference_forward(x_tokens, params):
    """Pure-JAX reference mirroring the kernel precision (bf16 matmul inputs,
    f32 accumulation / gate math) -- direct transcription of torch's LSTM."""
    emb = params["embedding"][x_tokens]           # (S, B, E)
    S, B, _ = emb.shape
    H = params["whh0"].shape[0]

    def dot(a, b):
        return jnp.dot(a.astype(_CDT), b.astype(_CDT),
                       preferred_element_type=jnp.float32)

    def cell(gates, c):
        i = jax.nn.sigmoid(gates[:, 0 * H:1 * H])
        f = jax.nn.sigmoid(gates[:, 1 * H:2 * H])
        g = jnp.tanh(gates[:, 2 * H:3 * H])
        o = jax.nn.sigmoid(gates[:, 3 * H:4 * H])
        c_new = f * c + i * g
        return o * jnp.tanh(c_new), c_new

    h0 = c0 = h1 = c1 = jnp.zeros((B, H), jnp.float32)
    for t in range(S):
        g0 = (dot(emb[t], params["wih0"]) + dot(h0, params["whh0"])
              + params["b0"])
        h0, c0 = cell(g0, c0)
        g1 = (dot(h0, params["wih1"]) + dot(h1, params["whh1"])
              + params["b1"])
        h1, c1 = cell(g1, c1)

    logits = dot(h1, params["wlin"]) + params["blin"]
    return jax.nn.log_softmax(logits, axis=1)


def init_params(key, vocab_size, embedding_size, hidden_size, output_size):
    ks = jax.random.split(key, 10)
    H, E = hidden_size, embedding_size
    u = lambda k, shape, s: jax.random.uniform(k, shape, jnp.float32, -s, s)
    scale = 1.0 / jnp.sqrt(H)
    return {
        # Embedding.weight.data.normal_(0.0, 0.05)
        "embedding": 0.05 * jax.random.normal(ks[0], (vocab_size, E),
                                              jnp.float32),
        # LSTM weights, stored pre-transposed: (input_dim, 4H)
        "wih0": u(ks[1], (E, 4 * H), scale),
        "whh0": u(ks[2], (H, 4 * H), scale),
        "b0":   u(ks[3], (1, 4 * H), scale),   # b_ih_l0 + b_hh_l0 combined
        "wih1": u(ks[4], (H, 4 * H), scale),
        "whh1": u(ks[5], (H, 4 * H), scale),
        "b1":   u(ks[6], (1, 4 * H), scale),   # b_ih_l1 + b_hh_l1 combined
        # Linear: stored as (H, O)
        "wlin": u(ks[7], (H, output_size), 1.0 / jnp.sqrt(H)),
        "blin": u(ks[8], (1, output_size), 1.0 / jnp.sqrt(H)),
    }


if __name__ == "__main__":
    # Small but lane-aligned shapes (H, E multiples of 128 keep gate slices
    # and the layer-1 concat on vreg-tile boundaries).
    SEQ, BATCH = 8, 2
    VOCAB, EMB, HIDDEN, OUT = 300, 128, 128, 5

    key = jax.random.PRNGKey(0)
    k_params, k_tokens = jax.random.split(key)
    params = init_params(k_params, VOCAB, EMB, HIDDEN, OUT)

    x_tokens = jax.random.randint(k_tokens, (SEQ, BATCH), 0, VOCAB,
                                  dtype=jnp.int32)

    out = seq_model_forward(x_tokens, params)
    out = jax.block_until_ready(out)

    ref = _reference_forward(x_tokens, params)
    assert out.shape == (BATCH, OUT)
    assert jnp.allclose(out, ref, atol=5e-3, rtol=5e-3), "mismatch vs reference"

    print("KERNEL_OK")
</pallas_src>

<mosaic_0001>
module attributes {stable_mosaic.version = 11 : i64} {
  func.func @seq_model_kernel(%arg0: memref<64x128xf32, #tpu.memory_space<vmem>>, %arg1: memref<128x512xbf16, #tpu.memory_space<vmem>>, %arg2: memref<1x512xf32, #tpu.memory_space<vmem>>, %arg3: memref<128x512xbf16, #tpu.memory_space<vmem>>, %arg4: memref<256x512xbf16, #tpu.memory_space<vmem>>, %arg5: memref<1x512xf32, #tpu.memory_space<vmem>>, %arg6: memref<128x5xbf16, #tpu.memory_space<vmem>>, %arg7: memref<1x5xf32, #tpu.memory_space<vmem>>, %arg8: memref<8x5xf32, #tpu.memory_space<vmem>>) attributes {dimension_semantics = [], scalar_prefetch = 0 : i64, scratch_operands = 0 : i64, tpu.core_type = #tpu.core_type<tc>} {
    %c0 = arith.constant 0 : index
    %c0_0 = arith.constant 0 : index
    %0 = vector.load %arg0[%c0, %c0_0] : memref<64x128xf32, #tpu.memory_space<vmem>>, vector<64x128xf32>
    %1 = arith.truncf %0 : vector<64x128xf32> to vector<64x128xbf16>
    %c0_1 = arith.constant 0 : index
    %c0_2 = arith.constant 0 : index
    %2 = vector.load %arg1[%c0_1, %c0_2] : memref<128x512xbf16, #tpu.memory_space<vmem>>, vector<128x512xbf16>
    %cst = arith.constant dense<0.000000e+00> : vector<64x512xf32>
    %3 = tpu.matmul %1, %2, %cst {dimension_numbers = #tpu.dot_dimension_numbers<[1], [0], [0], [1], [0, 0, 1, 1], [], []>} : vector<64x128xbf16>, vector<128x512xbf16>, vector<64x512xf32> -> vector<64x512xf32>
    %c0_3 = arith.constant 0 : index
    %c0_4 = arith.constant 0 : index
    %4 = vector.load %arg2[%c0_3, %c0_4] : memref<1x512xf32, #tpu.memory_space<vmem>>, vector<1x512xf32>
    %5 = vector.broadcast %4 : vector<1x512xf32> to vector<64x512xf32>
    %6 = arith.addf %3, %5 : vector<64x512xf32>
    %cst_5 = arith.constant 0.000000e+00 : f32
    %7 = vector.broadcast %cst_5 : f32 to vector<8x128xf32>
    %cst_6 = arith.constant 0.000000e+00 : f32
    %8 = vector.broadcast %cst_6 : f32 to vector<8x128xf32>
    %cst_7 = arith.constant 0.000000e+00 : f32
    %9 = vector.broadcast %cst_7 : f32 to vector<8x128xf32>
    %cst_8 = arith.constant 0.000000e+00 : f32
    %10 = vector.broadcast %cst_8 : f32 to vector<8x128xf32>
    %11 = vector.extract_strided_slice %6 {offsets = [0, 0], sizes = [8, 512], strides = [1, 1]} : vector<64x512xf32> to vector<8x512xf32>
    %12 = arith.truncf %7 : vector<8x128xf32> to vector<8x128xbf16>
    %c0_9 = arith.constant 0 : index
    %c0_10 = arith.constant 0 : index
    %13 = vector.load %arg3[%c0_9, %c0_10] : memref<128x512xbf16, #tpu.memory_space<vmem>>, vector<128x512xbf16>
    %cst_11 = arith.constant dense<0.000000e+00> : vector<8x512xf32>
    %14 = tpu.matmul %12, %13, %cst_11 {dimension_numbers = #tpu.dot_dimension_numbers<[1], [0], [0], [1], [0, 0, 1, 1], [], []>} : vector<8x128xbf16>, vector<128x512xbf16>, vector<8x512xf32> -> vector<8x512xf32>
    %15 = arith.addf %11, %14 : vector<8x512xf32>
    %16 = vector.extract_strided_slice %15 {offsets = [0, 0], sizes = [8, 128], strides = [1, 1]} : vector<8x512xf32> to vector<8x128xf32>
    %17 = arith.negf %16 : vector<8x128xf32>
    %18 = math.exp %17 : vector<8x128xf32>
    %cst_12 = arith.constant 1.000000e+00 : f32
    %19 = vector.broadcast %cst_12 : f32 to vector<8x128xf32>
    %20 = arith.addf %19, %18 : vector<8x128xf32>
    %21 = arith.divf %19, %20 : vector<8x128xf32>
    %22 = vector.extract_strided_slice %15 {offsets = [0, 128], sizes = [8, 128], strides = [1, 1]} : vector<8x512xf32> to vector<8x128xf32>
    %23 = arith.negf %22 : vector<8x128xf32>
    %24 = math.exp %23 : vector<8x128xf32>
    %cst_13 = arith.constant 1.000000e+00 : f32
    %25 = vector.broadcast %cst_13 : f32 to vector<8x128xf32>
    %26 = arith.addf %25, %24 : vector<8x128xf32>
    %27 = arith.divf %25, %26 : vector<8x128xf32>
    %28 = vector.extract_strided_slice %15 {offsets = [0, 256], sizes = [8, 128], strides = [1, 1]} : vector<8x512xf32> to vector<8x128xf32>
    %29 = math.tanh %28 : vector<8x128xf32>
    %30 = vector.extract_strided_slice %15 {offsets = [0, 384], sizes = [8, 128], strides = [1, 1]} : vector<8x512xf32> to vector<8x128xf32>
    %31 = arith.negf %30 : vector<8x128xf32>
    %32 = math.exp %31 : vector<8x128xf32>
    %cst_14 = arith.constant 1.000000e+00 : f32
    %33 = vector.broadcast %cst_14 : f32 to vector<8x128xf32>
    %34 = arith.addf %33, %32 : vector<8x128xf32>
    %35 = arith.divf %33, %34 : vector<8x128xf32>
    %36 = arith.mulf %27, %8 : vector<8x128xf32>
    %37 = arith.mulf %21, %29 : vector<8x128xf32>
    %38 = arith.addf %36, %37 : vector<8x128xf32>
    %39 = math.tanh %38 : vector<8x128xf32>
    %40 = arith.mulf %35, %39 : vector<8x128xf32>
    %41 = tpu.concatenate %40, %9 in 1 : vector<8x128xf32>, vector<8x128xf32> -> vector<8x256xf32>
    %42 = arith.truncf %41 : vector<8x256xf32> to vector<8x256xbf16>
    %c0_15 = arith.constant 0 : index
    %c0_16 = arith.constant 0 : index
    %43 = vector.load %arg4[%c0_15, %c0_16] : memref<256x512xbf16, #tpu.memory_space<vmem>>, vector<256x512xbf16>
    %cst_17 = arith.constant dense<0.000000e+00> : vector<8x512xf32>
    %44 = tpu.matmul %42, %43, %cst_17 {dimension_numbers = #tpu.dot_dimension_numbers<[1], [0], [0], [1], [0, 0, 1, 1], [], []>} : vector<8x256xbf16>, vector<256x512xbf16>, vector<8x512xf32> -> vector<8x512xf32>
    %c0_18 = arith.constant 0 : index
    %c0_19 = arith.constant 0 : index
    %45 = vector.load %arg5[%c0_18, %c0_19] : memref<1x512xf32, #tpu.memory_space<vmem>>, vector<1x512xf32>
    %46 = vector.broadcast %45 : vector<1x512xf32> to vector<8x512xf32>
    %47 = arith.addf %44, %46 : vector<8x512xf32>
    %48 = vector.extract_strided_slice %47 {offsets = [0, 0], sizes = [8, 128], strides = [1, 1]} : vector<8x512xf32> to vector<8x128xf32>
    %49 = arith.negf %48 : vector<8x128xf32>
    %50 = math.exp %49 : vector<8x128xf32>
    %cst_20 = arith.constant 1.000000e+00 : f32
    %51 = vector.broadcast %cst_20 : f32 to vector<8x128xf32>
    %52 = arith.addf %51, %50 : vector<8x128xf32>
    %53 = arith.divf %51, %52 : vector<8x128xf32>
    %54 = vector.extract_strided_slice %47 {offsets = [0, 128], sizes = [8, 128], strides = [1, 1]} : vector<8x512xf32> to vector<8x128xf32>
    %55 = arith.negf %54 : vector<8x128xf32>
    %56 = math.exp %55 : vector<8x128xf32>
    %cst_21 = arith.constant 1.000000e+00 : f32
    %57 = vector.broadcast %cst_21 : f32 to vector<8x128xf32>
    %58 = arith.addf %57, %56 : vector<8x128xf32>
    %59 = arith.divf %57, %58 : vector<8x128xf32>
    %60 = vector.extract_strided_slice %47 {offsets = [0, 256], sizes = [8, 128], strides = [1, 1]} : vector<8x512xf32> to vector<8x128xf32>
    %61 = math.tanh %60 : vector<8x128xf32>
    %62 = vector.extract_strided_slice %47 {offsets = [0, 384], sizes = [8, 128], strides = [1, 1]} : vector<8x512xf32> to vector<8x128xf32>
    %63 = arith.negf %62 : vector<8x128xf32>
    %64 = math.exp %63 : vector<8x128xf32>
    %cst_22 = arith.constant 1.000000e+00 : f32
    %65 = vector.broadcast %cst_22 : f32 to vector<8x128xf32>
    %66 = arith.addf %65, %64 : vector<8x128xf32>
    %67 = arith.divf %65, %66 : vector<8x128xf32>
    %68 = arith.mulf %59, %10 : vector<8x128xf32>
    %69 = arith.mulf %53, %61 : vector<8x128xf32>
    %70 = arith.addf %68, %69 : vector<8x128xf32>
    %71 = math.tanh %70 : vector<8x128xf32>
    %72 = arith.mulf %67, %71 : vector<8x128xf32>
    %73 = vector.extract_strided_slice %6 {offsets = [8, 0], sizes = [8, 512], strides = [1, 1]} : vector<64x512xf32> to vector<8x512xf32>
    %74 = arith.truncf %40 : vector<8x128xf32> to vector<8x128xbf16>
    %c0_23 = arith.constant 0 : index
    %c0_24 = arith.constant 0 : index
    %75 = vector.load %arg3[%c0_23, %c0_24] : memref<128x512xbf16, #tpu.memory_space<vmem>>, vector<128x512xbf16>
    %cst_25 = arith.constant dense<0.000000e+00> : vector<8x512xf32>
    %76 = tpu.matmul %74, %75, %cst_25 {dimension_numbers = #tpu.dot_dimension_numbers<[1], [0], [0], [1], [0, 0, 1, 1], [], []>} : vector<8x128xbf16>, vector<128x512xbf16>, vector<8x512xf32> -> vector<8x512xf32>
    %77 = arith.addf %73, %76 : vector<8x512xf32>
    %78 = vector.extract_strided_slice %77 {offsets = [0, 0], sizes = [8, 128], strides = [1, 1]} : vector<8x512xf32> to vector<8x128xf32>
    %79 = arith.negf %78 : vector<8x128xf32>
    %80 = math.exp %79 : vector<8x128xf32>
    %cst_26 = arith.constant 1.000000e+00 : f32
    %81 = vector.broadcast %cst_26 : f32 to vector<8x128xf32>
    %82 = arith.addf %81, %80 : vector<8x128xf32>
    %83 = arith.divf %81, %82 : vector<8x128xf32>
    %84 = vector.extract_strided_slice %77 {offsets = [0, 128], sizes = [8, 128], strides = [1, 1]} : vector<8x512xf32> to vector<8x128xf32>
    %85 = arith.negf %84 : vector<8x128xf32>
    %86 = math.exp %85 : vector<8x128xf32>
    %cst_27 = arith.constant 1.000000e+00 : f32
    %87 = vector.broadcast %cst_27 : f32 to vector<8x128xf32>
    %88 = arith.addf %87, %86 : vector<8x128xf32>
    %89 = arith.divf %87, %88 : vector<8x128xf32>
    %90 = vector.extract_strided_slice %77 {offsets = [0, 256], sizes = [8, 128], strides = [1, 1]} : vector<8x512xf32> to vector<8x128xf32>
    %91 = math.tanh %90 : vector<8x128xf32>
    %92 = vector.extract_strided_slice %77 {offsets = [0, 384], sizes = [8, 128], strides = [1, 1]} : vector<8x512xf32> to vector<8x128xf32>
    %93 = arith.negf %92 : vector<8x128xf32>
    %94 = math.exp %93 : vector<8x128xf32>
    %cst_28 = arith.constant 1.000000e+00 : f32
    %95 = vector.broadcast %cst_28 : f32 to vector<8x128xf32>
    %96 = arith.addf %95, %94 : vector<8x128xf32>
    %97 = arith.divf %95, %96 : vector<8x128xf32>
    %98 = arith.mulf %89, %38 : vector<8x128xf32>
    %99 = arith.mulf %83, %91 : vector<8x128xf32>
    %100 = arith.addf %98, %99 : vector<8x128xf32>
    %101 = math.tanh %100 : vector<8x128xf32>
    %102 = arith.mulf %97, %101 : vector<8x128xf32>
    %103 = tpu.concatenate %102, %72 in 1 : vector<8x128xf32>, vector<8x128xf32> -> vector<8x256xf32>
    %104 = arith.truncf %103 : vector<8x256xf32> to vector<8x256xbf16>
    %c0_29 = arith.constant 0 : index
    %c0_30 = arith.constant 0 : index
    %105 = vector.load %arg4[%c0_29, %c0_30] : memref<256x512xbf16, #tpu.memory_space<vmem>>, vector<256x512xbf16>
    %cst_31 = arith.constant dense<0.000000e+00> : vector<8x512xf32>
    %106 = tpu.matmul %104, %105, %cst_31 {dimension_numbers = #tpu.dot_dimension_numbers<[1], [0], [0], [1], [0, 0, 1, 1], [], []>} : vector<8x256xbf16>, vector<256x512xbf16>, vector<8x512xf32> -> vector<8x512xf32>
    %c0_32 = arith.constant 0 : index
    %c0_33 = arith.constant 0 : index
    %107 = vector.load %arg5[%c0_32, %c0_33] : memref<1x512xf32, #tpu.memory_space<vmem>>, vector<1x512xf32>
    %108 = vector.broadcast %107 : vector<1x512xf32> to vector<8x512xf32>
    %109 = arith.addf %106, %108 : vector<8x512xf32>
    %110 = vector.extract_strided_slice %109 {offsets = [0, 0], sizes = [8, 128], strides = [1, 1]} : vector<8x512xf32> to vector<8x128xf32>
    %111 = arith.negf %110 : vector<8x128xf32>
    %112 = math.exp %111 : vector<8x128xf32>
    %cst_34 = arith.constant 1.000000e+00 : f32
    %113 = vector.broadcast %cst_34 : f32 to vector<8x128xf32>
    %114 = arith.addf %113, %112 : vector<8x128xf32>
    %115 = arith.divf %113, %114 : vector<8x128xf32>
    %116 = vector.extract_strided_slice %109 {offsets = [0, 128], sizes = [8, 128], strides = [1, 1]} : vector<8x512xf32> to vector<8x128xf32>
    %117 = arith.negf %116 : vector<8x128xf32>
    %118 = math.exp %117 : vector<8x128xf32>
    %cst_35 = arith.constant 1.000000e+00 : f32
    %119 = vector.broadcast %cst_35 : f32 to vector<8x128xf32>
    %120 = arith.addf %119, %118 : vector<8x128xf32>
    %121 = arith.divf %119, %120 : vector<8x128xf32>
    %122 = vector.extract_strided_slice %109 {offsets = [0, 256], sizes = [8, 128], strides = [1, 1]} : vector<8x512xf32> to vector<8x128xf32>
    %123 = math.tanh %122 : vector<8x128xf32>
    %124 = vector.extract_strided_slice %109 {offsets = [0, 384], sizes = [8, 128], strides = [1, 1]} : vector<8x512xf32> to vector<8x128xf32>
    %125 = arith.negf %124 : vector<8x128xf32>
    %126 = math.exp %125 : vector<8x128xf32>
    %cst_36 = arith.constant 1.000000e+00 : f32
    %127 = vector.broadcast %cst_36 : f32 to vector<8x128xf32>
    %128 = arith.addf %127, %126 : vector<8x128xf32>
    %129 = arith.divf %127, %128 : vector<8x128xf32>
    %130 = arith.mulf %121, %70 : vector<8x128xf32>
    %131 = arith.mulf %115, %123 : vector<8x128xf32>
    %132 = arith.addf %130, %131 : vector<8x128xf32>
    %133 = math.tanh %132 : vector<8x128xf32>
    %134 = arith.mulf %129, %133 : vector<8x128xf32>
    %135 = vector.extract_strided_slice %6 {offsets = [16, 0], sizes = [8, 512], strides = [1, 1]} : vector<64x512xf32> to vector<8x512xf32>
    %136 = arith.truncf %102 : vector<8x128xf32> to vector<8x128xbf16>
    %c0_37 = arith.constant 0 : index
    %c0_38 = arith.constant 0 : index
    %137 = vector.load %arg3[%c0_37, %c0_38] : memref<128x512xbf16, #tpu.memory_space<vmem>>, vector<128x512xbf16>
    %cst_39 = arith.constant dense<0.000000e+00> : vector<8x512xf32>
    %138 = tpu.matmul %136, %137, %cst_39 {dimension_numbers = #tpu.dot_dimension_numbers<[1], [0], [0], [1], [0, 0, 1, 1], [], []>} : vector<8x128xbf16>, vector<128x512xbf16>, vector<8x512xf32> -> vector<8x512xf32>
    %139 = arith.addf %135, %138 : vector<8x512xf32>
    %140 = vector.extract_strided_slice %139 {offsets = [0, 0], sizes = [8, 128], strides = [1, 1]} : vector<8x512xf32> to vector<8x128xf32>
    %141 = arith.negf %140 : vector<8x128xf32>
    %142 = math.exp %141 : vector<8x128xf32>
    %cst_40 = arith.constant 1.000000e+00 : f32
    %143 = vector.broadcast %cst_40 : f32 to vector<8x128xf32>
    %144 = arith.addf %143, %142 : vector<8x128xf32>
    %145 = arith.divf %143, %144 : vector<8x128xf32>
    %146 = vector.extract_strided_slice %139 {offsets = [0, 128], sizes = [8, 128], strides = [1, 1]} : vector<8x512xf32> to vector<8x128xf32>
    %147 = arith.negf %146 : vector<8x128xf32>
    %148 = math.exp %147 : vector<8x128xf32>
    %cst_41 = arith.constant 1.000000e+00 : f32
    %149 = vector.broadcast %cst_41 : f32 to vector<8x128xf32>
    %150 = arith.addf %149, %148 : vector<8x128xf32>
    %151 = arith.divf %149, %150 : vector<8x128xf32>
    %152 = vector.extract_strided_slice %139 {offsets = [0, 256], sizes = [8, 128], strides = [1, 1]} : vector<8x512xf32> to vector<8x128xf32>
    %153 = math.tanh %152 : vector<8x128xf32>
    %154 = vector.extract_strided_slice %139 {offsets = [0, 384], sizes = [8, 128], strides = [1, 1]} : vector<8x512xf32> to vector<8x128xf32>
    %155 = arith.negf %154 : vector<8x128xf32>
    %156 = math.exp %155 : vector<8x128xf32>
    %cst_42 = arith.constant 1.000000e+00 : f32
    %157 = vector.broadcast %cst_42 : f32 to vector<8x128xf32>
    %158 = arith.addf %157, %156 : vector<8x128xf32>
    %159 = arith.divf %157, %158 : vector<8x128xf32>
    %160 = arith.mulf %151, %100 : vector<8x128xf32>
    %161 = arith.mulf %145, %153 : vector<8x128xf32>
    %162 = arith.addf %160, %161 : vector<8x128xf32>
    %163 = math.tanh %162 : vector<8x128xf32>
    %164 = arith.mulf %159, %163 : vector<8x128xf32>
    %165 = tpu.concatenate %164, %134 in 1 : vector<8x128xf32>, vector<8x128xf32> -> vector<8x256xf32>
    %166 = arith.truncf %165 : vector<8x256xf32> to vector<8x256xbf16>
    %c0_43 = arith.constant 0 : index
    %c0_44 = arith.constant 0 : index
    %167 = vector.load %arg4[%c0_43, %c0_44] : memref<256x512xbf16, #tpu.memory_space<vmem>>, vector<256x512xbf16>
    %cst_45 = arith.constant dense<0.000000e+00> : vector<8x512xf32>
    %168 = tpu.matmul %166, %167, %cst_45 {dimension_numbers = #tpu.dot_dimension_numbers<[1], [0], [0], [1], [0, 0, 1, 1], [], []>} : vector<8x256xbf16>, vector<256x512xbf16>, vector<8x512xf32> -> vector<8x512xf32>
    %c0_46 = arith.constant 0 : index
    %c0_47 = arith.constant 0 : index
    %169 = vector.load %arg5[%c0_46, %c0_47] : memref<1x512xf32, #tpu.memory_space<vmem>>, vector<1x512xf32>
    %170 = vector.broadcast %169 : vector<1x512xf32> to vector<8x512xf32>
    %171 = arith.addf %168, %170 : vector<8x512xf32>
    %172 = vector.extract_strided_slice %171 {offsets = [0, 0], sizes = [8, 128], strides = [1, 1]} : vector<8x512xf32> to vector<8x128xf32>
    %173 = arith.negf %172 : vector<8x128xf32>
    %174 = math.exp %173 : vector<8x128xf32>
    %cst_48 = arith.constant 1.000000e+00 : f32
    %175 = vector.broadcast %cst_48 : f32 to vector<8x128xf32>
    %176 = arith.addf %175, %174 : vector<8x128xf32>
    %177 = arith.divf %175, %176 : vector<8x128xf32>
    %178 = vector.extract_strided_slice %171 {offsets = [0, 128], sizes = [8, 128], strides = [1, 1]} : vector<8x512xf32> to vector<8x128xf32>
    %179 = arith.negf %178 : vector<8x128xf32>
    %180 = math.exp %179 : vector<8x128xf32>
    %cst_49 = arith.constant 1.000000e+00 : f32
    %181 = vector.broadcast %cst_49 : f32 to vector<8x128xf32>
    %182 = arith.addf %181, %180 : vector<8x128xf32>
    %183 = arith.divf %181, %182 : vector<8x128xf32>
    %184 = vector.extract_strided_slice %171 {offsets = [0, 256], sizes = [8, 128], strides = [1, 1]} : vector<8x512xf32> to vector<8x128xf32>
    %185 = math.tanh %184 : vector<8x128xf32>
    %186 = vector.extract_strided_slice %171 {offsets = [0, 384], sizes = [8, 128], strides = [1, 1]} : vector<8x512xf32> to vector<8x128xf32>
    %187 = arith.negf %186 : vector<8x128xf32>
    %188 = math.exp %187 : vector<8x128xf32>
    %cst_50 = arith.constant 1.000000e+00 : f32
    %189 = vector.broadcast %cst_50 : f32 to vector<8x128xf32>
    %190 = arith.addf %189, %188 : vector<8x128xf32>
    %191 = arith.divf %189, %190 : vector<8x128xf32>
    %192 = arith.mulf %183, %132 : vector<8x128xf32>
    %193 = arith.mulf %177, %185 : vector<8x128xf32>
    %194 = arith.addf %192, %193 : vector<8x128xf32>
    %195 = math.tanh %194 : vector<8x128xf32>
    %196 = arith.mulf %191, %195 : vector<8x128xf32>
    %197 = vector.extract_strided_slice %6 {offsets = [24, 0], sizes = [8, 512], strides = [1, 1]} : vector<64x512xf32> to vector<8x512xf32>
    %198 = arith.truncf %164 : vector<8x128xf32> to vector<8x128xbf16>
    %c0_51 = arith.constant 0 : index
    %c0_52 = arith.constant 0 : index
    %199 = vector.load %arg3[%c0_51, %c0_52] : memref<128x512xbf16, #tpu.memory_space<vmem>>, vector<128x512xbf16>
    %cst_53 = arith.constant dense<0.000000e+00> : vector<8x512xf32>
    %200 = tpu.matmul %198, %199, %cst_53 {dimension_numbers = #tpu.dot_dimension_numbers<[1], [0], [0], [1], [0, 0, 1, 1], [], []>} : vector<8x128xbf16>, vector<128x512xbf16>, vector<8x512xf32> -> vector<8x512xf32>
    %201 = arith.addf %197, %200 : vector<8x512xf32>
    %202 = vector.extract_strided_slice %201 {offsets = [0, 0], sizes = [8, 128], strides = [1, 1]} : vector<8x512xf32> to vector<8x128xf32>
    %203 = arith.negf %202 : vector<8x128xf32>
    %204 = math.exp %203 : vector<8x128xf32>
    %cst_54 = arith.constant 1.000000e+00 : f32
    %205 = vector.broadcast %cst_54 : f32 to vector<8x128xf32>
    %206 = arith.addf %205, %204 : vector<8x128xf32>
    %207 = arith.divf %205, %206 : vector<8x128xf32>
    %208 = vector.extract_strided_slice %201 {offsets = [0, 128], sizes = [8, 128], strides = [1, 1]} : vector<8x512xf32> to vector<8x128xf32>
    %209 = arith.negf %208 : vector<8x128xf32>
    %210 = math.exp %209 : vector<8x128xf32>
    %cst_55 = arith.constant 1.000000e+00 : f32
    %211 = vector.broadcast %cst_55 : f32 to vector<8x128xf32>
    %212 = arith.addf %211, %210 : vector<8x128xf32>
    %213 = arith.divf %211, %212 : vector<8x128xf32>
    %214 = vector.extract_strided_slice %201 {offsets = [0, 256], sizes = [8, 128], strides = [1, 1]} : vector<8x512xf32> to vector<8x128xf32>
    %215 = math.tanh %214 : vector<8x128xf32>
    %216 = vector.extract_strided_slice %201 {offsets = [0, 384], sizes = [8, 128], strides = [1, 1]} : vector<8x512xf32> to vector<8x128xf32>
    %217 = arith.negf %216 : vector<8x128xf32>
    %218 = math.exp %217 : vector<8x128xf32>
    %cst_56 = arith.constant 1.000000e+00 : f32
    %219 = vector.broadcast %cst_56 : f32 to vector<8x128xf32>
    %220 = arith.addf %219, %218 : vector<8x128xf32>
    %221 = arith.divf %219, %220 : vector<8x128xf32>
    %222 = arith.mulf %213, %162 : vector<8x128xf32>
    %223 = arith.mulf %207, %215 : vector<8x128xf32>
    %224 = arith.addf %222, %223 : vector<8x128xf32>
    %225 = math.tanh %224 : vector<8x128xf32>
    %226 = arith.mulf %221, %225 : vector<8x128xf32>
    %227 = tpu.concatenate %226, %196 in 1 : vector<8x128xf32>, vector<8x128xf32> -> vector<8x256xf32>
    %228 = arith.truncf %227 : vector<8x256xf32> to vector<8x256xbf16>
    %c0_57 = arith.constant 0 : index
    %c0_58 = arith.constant 0 : index
    %229 = vector.load %arg4[%c0_57, %c0_58] : memref<256x512xbf16, #tpu.memory_space<vmem>>, vector<256x512xbf16>
    %cst_59 = arith.constant dense<0.000000e+00> : vector<8x512xf32>
    %230 = tpu.matmul %228, %229, %cst_59 {dimension_numbers = #tpu.dot_dimension_numbers<[1], [0], [0], [1], [0, 0, 1, 1], [], []>} : vector<8x256xbf16>, vector<256x512xbf16>, vector<8x512xf32> -> vector<8x512xf32>
    %c0_60 = arith.constant 0 : index
    %c0_61 = arith.constant 0 : index
    %231 = vector.load %arg5[%c0_60, %c0_61] : memref<1x512xf32, #tpu.memory_space<vmem>>, vector<1x512xf32>
    %232 = vector.broadcast %231 : vector<1x512xf32> to vector<8x512xf32>
    %233 = arith.addf %230, %232 : vector<8x512xf32>
    %234 = vector.extract_strided_slice %233 {offsets = [0, 0], sizes = [8, 128], strides = [1, 1]} : vector<8x512xf32> to vector<8x128xf32>
    %235 = arith.negf %234 : vector<8x128xf32>
    %236 = math.exp %235 : vector<8x128xf32>
    %cst_62 = arith.constant 1.000000e+00 : f32
    %237 = vector.broadcast %cst_62 : f32 to vector<8x128xf32>
    %238 = arith.addf %237, %236 : vector<8x128xf32>
    %239 = arith.divf %237, %238 : vector<8x128xf32>
    %240 = vector.extract_strided_slice %233 {offsets = [0, 128], sizes = [8, 128], strides = [1, 1]} : vector<8x512xf32> to vector<8x128xf32>
    %241 = arith.negf %240 : vector<8x128xf32>
    %242 = math.exp %241 : vector<8x128xf32>
    %cst_63 = arith.constant 1.000000e+00 : f32
    %243 = vector.broadcast %cst_63 : f32 to vector<8x128xf32>
    %244 = arith.addf %243, %242 : vector<8x128xf32>
    %245 = arith.divf %243, %244 : vector<8x128xf32>
    %246 = vector.extract_strided_slice %233 {offsets = [0, 256], sizes = [8, 128], strides = [1, 1]} : vector<8x512xf32> to vector<8x128xf32>
    %247 = math.tanh %246 : vector<8x128xf32>
    %248 = vector.extract_strided_slice %233 {offsets = [0, 384], sizes = [8, 128], strides = [1, 1]} : vector<8x512xf32> to vector<8x128xf32>
    %249 = arith.negf %248 : vector<8x128xf32>
    %250 = math.exp %249 : vector<8x128xf32>
    %cst_64 = arith.constant 1.000000e+00 : f32
    %251 = vector.broadcast %cst_64 : f32 to vector<8x128xf32>
    %252 = arith.addf %251, %250 : vector<8x128xf32>
    %253 = arith.divf %251, %252 : vector<8x128xf32>
    %254 = arith.mulf %245, %194 : vector<8x128xf32>
    %255 = arith.mulf %239, %247 : vector<8x128xf32>
    %256 = arith.addf %254, %255 : vector<8x128xf32>
    %257 = math.tanh %256 : vector<8x128xf32>
    %258 = arith.mulf %253, %257 : vector<8x128xf32>
    %259 = vector.extract_strided_slice %6 {offsets = [32, 0], sizes = [8, 512], strides = [1, 1]} : vector<64x512xf32> to vector<8x512xf32>
    %260 = arith.truncf %226 : vector<8x128xf32> to vector<8x128xbf16>
    %c0_65 = arith.constant 0 : index
    %c0_66 = arith.constant 0 : index
    %261 = vector.load %arg3[%c0_65, %c0_66] : memref<128x512xbf16, #tpu.memory_space<vmem>>, vector<128x512xbf16>
    %cst_67 = arith.constant dense<0.000000e+00> : vector<8x512xf32>
    %262 = tpu.matmul %260, %261, %cst_67 {dimension_numbers = #tpu.dot_dimension_numbers<[1], [0], [0], [1], [0, 0, 1, 1], [], []>} : vector<8x128xbf16>, vector<128x512xbf16>, vector<8x512xf32> -> vector<8x512xf32>
    %263 = arith.addf %259, %262 : vector<8x512xf32>
    %264 = vector.extract_strided_slice %263 {offsets = [0, 0], sizes = [8, 128], strides = [1, 1]} : vector<8x512xf32> to vector<8x128xf32>
    %265 = arith.negf %264 : vector<8x128xf32>
    %266 = math.exp %265 : vector<8x128xf32>
    %cst_68 = arith.constant 1.000000e+00 : f32
    %267 = vector.broadcast %cst_68 : f32 to vector<8x128xf32>
    %268 = arith.addf %267, %266 : vector<8x128xf32>
    %269 = arith.divf %267, %268 : vector<8x128xf32>
    %270 = vector.extract_strided_slice %263 {offsets = [0, 128], sizes = [8, 128], strides = [1, 1]} : vector<8x512xf32> to vector<8x128xf32>
    %271 = arith.negf %270 : vector<8x128xf32>
    %272 = math.exp %271 : vector<8x128xf32>
    %cst_69 = arith.constant 1.000000e+00 : f32
    %273 = vector.broadcast %cst_69 : f32 to vector<8x128xf32>
    %274 = arith.addf %273, %272 : vector<8x128xf32>
    %275 = arith.divf %273, %274 : vector<8x128xf32>
    %276 = vector.extract_strided_slice %263 {offsets = [0, 256], sizes = [8, 128], strides = [1, 1]} : vector<8x512xf32> to vector<8x128xf32>
    %277 = math.tanh %276 : vector<8x128xf32>
    %278 = vector.extract_strided_slice %263 {offsets = [0, 384], sizes = [8, 128], strides = [1, 1]} : vector<8x512xf32> to vector<8x128xf32>
    %279 = arith.negf %278 : vector<8x128xf32>
    %280 = math.exp %279 : vector<8x128xf32>
    %cst_70 = arith.constant 1.000000e+00 : f32
    %281 = vector.broadcast %cst_70 : f32 to vector<8x128xf32>
    %282 = arith.addf %281, %280 : vector<8x128xf32>
    %283 = arith.divf %281, %282 : vector<8x128xf32>
    %284 = arith.mulf %275, %224 : vector<8x128xf32>
    %285 = arith.mulf %269, %277 : vector<8x128xf32>
    %286 = arith.addf %284, %285 : vector<8x128xf32>
    %287 = math.tanh %286 : vector<8x128xf32>
    %288 = arith.mulf %283, %287 : vector<8x128xf32>
    %289 = tpu.concatenate %288, %258 in 1 : vector<8x128xf32>, vector<8x128xf32> -> vector<8x256xf32>
    %290 = arith.truncf %289 : vector<8x256xf32> to vector<8x256xbf16>
    %c0_71 = arith.constant 0 : index
    %c0_72 = arith.constant 0 : index
    %291 = vector.load %arg4[%c0_71, %c0_72] : memref<256x512xbf16, #tpu.memory_space<vmem>>, vector<256x512xbf16>
    %cst_73 = arith.constant dense<0.000000e+00> : vector<8x512xf32>
    %292 = tpu.matmul %290, %291, %cst_73 {dimension_numbers = #tpu.dot_dimension_numbers<[1], [0], [0], [1], [0, 0, 1, 1], [], []>} : vector<8x256xbf16>, vector<256x512xbf16>, vector<8x512xf32> -> vector<8x512xf32>
    %c0_74 = arith.constant 0 : index
    %c0_75 = arith.constant 0 : index
    %293 = vector.load %arg5[%c0_74, %c0_75] : memref<1x512xf32, #tpu.memory_space<vmem>>, vector<1x512xf32>
    %294 = vector.broadcast %293 : vector<1x512xf32> to vector<8x512xf32>
    %295 = arith.addf %292, %294 : vector<8x512xf32>
    %296 = vector.extract_strided_slice %295 {offsets = [0, 0], sizes = [8, 128], strides = [1, 1]} : vector<8x512xf32> to vector<8x128xf32>
    %297 = arith.negf %296 : vector<8x128xf32>
    %298 = math.exp %297 : vector<8x128xf32>
    %cst_76 = arith.constant 1.000000e+00 : f32
    %299 = vector.broadcast %cst_76 : f32 to vector<8x128xf32>
    %300 = arith.addf %299, %298 : vector<8x128xf32>
    %301 = arith.divf %299, %300 : vector<8x128xf32>
    %302 = vector.extract_strided_slice %295 {offsets = [0, 128], sizes = [8, 128], strides = [1, 1]} : vector<8x512xf32> to vector<8x128xf32>
    %303 = arith.negf %302 : vector<8x128xf32>
    %304 = math.exp %303 : vector<8x128xf32>
    %cst_77 = arith.constant 1.000000e+00 : f32
    %305 = vector.broadcast %cst_77 : f32 to vector<8x128xf32>
    %306 = arith.addf %305, %304 : vector<8x128xf32>
    %307 = arith.divf %305, %306 : vector<8x128xf32>
    %308 = vector.extract_strided_slice %295 {offsets = [0, 256], sizes = [8, 128], strides = [1, 1]} : vector<8x512xf32> to vector<8x128xf32>
    %309 = math.tanh %308 : vector<8x128xf32>
    %310 = vector.extract_strided_slice %295 {offsets = [0, 384], sizes = [8, 128], strides = [1, 1]} : vector<8x512xf32> to vector<8x128xf32>
    %311 = arith.negf %310 : vector<8x128xf32>
    %312 = math.exp %311 : vector<8x128xf32>
    %cst_78 = arith.constant 1.000000e+00 : f32
    %313 = vector.broadcast %cst_78 : f32 to vector<8x128xf32>
    %314 = arith.addf %313, %312 : vector<8x128xf32>
    %315 = arith.divf %313, %314 : vector<8x128xf32>
    %316 = arith.mulf %307, %256 : vector<8x128xf32>
    %317 = arith.mulf %301, %309 : vector<8x128xf32>
    %318 = arith.addf %316, %317 : vector<8x128xf32>
    %319 = math.tanh %318 : vector<8x128xf32>
    %320 = arith.mulf %315, %319 : vector<8x128xf32>
    %321 = vector.extract_strided_slice %6 {offsets = [40, 0], sizes = [8, 512], strides = [1, 1]} : vector<64x512xf32> to vector<8x512xf32>
    %322 = arith.truncf %288 : vector<8x128xf32> to vector<8x128xbf16>
    %c0_79 = arith.constant 0 : index
    %c0_80 = arith.constant 0 : index
    %323 = vector.load %arg3[%c0_79, %c0_80] : memref<128x512xbf16, #tpu.memory_space<vmem>>, vector<128x512xbf16>
    %cst_81 = arith.constant dense<0.000000e+00> : vector<8x512xf32>
    %324 = tpu.matmul %322, %323, %cst_81 {dimension_numbers = #tpu.dot_dimension_numbers<[1], [0], [0], [1], [0, 0, 1, 1], [], []>} : vector<8x128xbf16>, vector<128x512xbf16>, vector<8x512xf32> -> vector<8x512xf32>
    %325 = arith.addf %321, %324 : vector<8x512xf32>
    %326 = vector.extract_strided_slice %325 {offsets = [0, 0], sizes = [8, 128], strides = [1, 1]} : vector<8x512xf32> to vector<8x128xf32>
    %327 = arith.negf %326 : vector<8x128xf32>
    %328 = math.exp %327 : vector<8x128xf32>
    %cst_82 = arith.constant 1.000000e+00 : f32
    %329 = vector.broadcast %cst_82 : f32 to vector<8x128xf32>
    %330 = arith.addf %329, %328 : vector<8x128xf32>
    %331 = arith.divf %329, %330 : vector<8x128xf32>
    %332 = vector.extract_strided_slice %325 {offsets = [0, 128], sizes = [8, 128], strides = [1, 1]} : vector<8x512xf32> to vector<8x128xf32>
    %333 = arith.negf %332 : vector<8x128xf32>
    %334 = math.exp %333 : vector<8x128xf32>
    %cst_83 = arith.constant 1.000000e+00 : f32
    %335 = vector.broadcast %cst_83 : f32 to vector<8x128xf32>
    %336 = arith.addf %335, %334 : vector<8x128xf32>
    %337 = arith.divf %335, %336 : vector<8x128xf32>
    %338 = vector.extract_strided_slice %325 {offsets = [0, 256], sizes = [8, 128], strides = [1, 1]} : vector<8x512xf32> to vector<8x128xf32>
    %339 = math.tanh %338 : vector<8x128xf32>
    %340 = vector.extract_strided_slice %325 {offsets = [0, 384], sizes = [8, 128], strides = [1, 1]} : vector<8x512xf32> to vector<8x128xf32>
    %341 = arith.negf %340 : vector<8x128xf32>
    %342 = math.exp %341 : vector<8x128xf32>
    %cst_84 = arith.constant 1.000000e+00 : f32
    %343 = vector.broadcast %cst_84 : f32 to vector<8x128xf32>
    %344 = arith.addf %343, %342 : vector<8x128xf32>
    %345 = arith.divf %343, %344 : vector<8x128xf32>
    %346 = arith.mulf %337, %286 : vector<8x128xf32>
    %347 = arith.mulf %331, %339 : vector<8x128xf32>
    %348 = arith.addf %346, %347 : vector<8x128xf32>
    %349 = math.tanh %348 : vector<8x128xf32>
    %350 = arith.mulf %345, %349 : vector<8x128xf32>
    %351 = tpu.concatenate %350, %320 in 1 : vector<8x128xf32>, vector<8x128xf32> -> vector<8x256xf32>
    %352 = arith.truncf %351 : vector<8x256xf32> to vector<8x256xbf16>
    %c0_85 = arith.constant 0 : index
    %c0_86 = arith.constant 0 : index
    %353 = vector.load %arg4[%c0_85, %c0_86] : memref<256x512xbf16, #tpu.memory_space<vmem>>, vector<256x512xbf16>
    %cst_87 = arith.constant dense<0.000000e+00> : vector<8x512xf32>
    %354 = tpu.matmul %352, %353, %cst_87 {dimension_numbers = #tpu.dot_dimension_numbers<[1], [0], [0], [1], [0, 0, 1, 1], [], []>} : vector<8x256xbf16>, vector<256x512xbf16>, vector<8x512xf32> -> vector<8x512xf32>
    %c0_88 = arith.constant 0 : index
    %c0_89 = arith.constant 0 : index
    %355 = vector.load %arg5[%c0_88, %c0_89] : memref<1x512xf32, #tpu.memory_space<vmem>>, vector<1x512xf32>
    %356 = vector.broadcast %355 : vector<1x512xf32> to vector<8x512xf32>
    %357 = arith.addf %354, %356 : vector<8x512xf32>
    %358 = vector.extract_strided_slice %357 {offsets = [0, 0], sizes = [8, 128], strides = [1, 1]} : vector<8x512xf32> to vector<8x128xf32>
    %359 = arith.negf %358 : vector<8x128xf32>
    %360 = math.exp %359 : vector<8x128xf32>
    %cst_90 = arith.constant 1.000000e+00 : f32
    %361 = vector.broadcast %cst_90 : f32 to vector<8x128xf32>
    %362 = arith.addf %361, %360 : vector<8x128xf32>
    %363 = arith.divf %361, %362 : vector<8x128xf32>
    %364 = vector.extract_strided_slice %357 {offsets = [0, 128], sizes = [8, 128], strides = [1, 1]} : vector<8x512xf32> to vector<8x128xf32>
    %365 = arith.negf %364 : vector<8x128xf32>
    %366 = math.exp %365 : vector<8x128xf32>
    %cst_91 = arith.constant 1.000000e+00 : f32
    %367 = vector.broadcast %cst_91 : f32 to vector<8x128xf32>
    %368 = arith.addf %367, %366 : vector<8x128xf32>
    %369 = arith.divf %367, %368 : vector<8x128xf32>
    %370 = vector.extract_strided_slice %357 {offsets = [0, 256], sizes = [8, 128], strides = [1, 1]} : vector<8x512xf32> to vector<8x128xf32>
    %371 = math.tanh %370 : vector<8x128xf32>
    %372 = vector.extract_strided_slice %357 {offsets = [0, 384], sizes = [8, 128], strides = [1, 1]} : vector<8x512xf32> to vector<8x128xf32>
    %373 = arith.negf %372 : vector<8x128xf32>
    %374 = math.exp %373 : vector<8x128xf32>
    %cst_92 = arith.constant 1.000000e+00 : f32
    %375 = vector.broadcast %cst_92 : f32 to vector<8x128xf32>
    %376 = arith.addf %375, %374 : vector<8x128xf32>
    %377 = arith.divf %375, %376 : vector<8x128xf32>
    %378 = arith.mulf %369, %318 : vector<8x128xf32>
    %379 = arith.mulf %363, %371 : vector<8x128xf32>
    %380 = arith.addf %378, %379 : vector<8x128xf32>
    %381 = math.tanh %380 : vector<8x128xf32>
    %382 = arith.mulf %377, %381 : vector<8x128xf32>
    %383 = vector.extract_strided_slice %6 {offsets = [48, 0], sizes = [8, 512], strides = [1, 1]} : vector<64x512xf32> to vector<8x512xf32>
    %384 = arith.truncf %350 : vector<8x128xf32> to vector<8x128xbf16>
    %c0_93 = arith.constant 0 : index
    %c0_94 = arith.constant 0 : index
    %385 = vector.load %arg3[%c0_93, %c0_94] : memref<128x512xbf16, #tpu.memory_space<vmem>>, vector<128x512xbf16>
    %cst_95 = arith.constant dense<0.000000e+00> : vector<8x512xf32>
    %386 = tpu.matmul %384, %385, %cst_95 {dimension_numbers = #tpu.dot_dimension_numbers<[1], [0], [0], [1], [0, 0, 1, 1], [], []>} : vector<8x128xbf16>, vector<128x512xbf16>, vector<8x512xf32> -> vector<8x512xf32>
    %387 = arith.addf %383, %386 : vector<8x512xf32>
    %388 = vector.extract_strided_slice %387 {offsets = [0, 0], sizes = [8, 128], strides = [1, 1]} : vector<8x512xf32> to vector<8x128xf32>
    %389 = arith.negf %388 : vector<8x128xf32>
    %390 = math.exp %389 : vector<8x128xf32>
    %cst_96 = arith.constant 1.000000e+00 : f32
    %391 = vector.broadcast %cst_96 : f32 to vector<8x128xf32>
    %392 = arith.addf %391, %390 : vector<8x128xf32>
    %393 = arith.divf %391, %392 : vector<8x128xf32>
    %394 = vector.extract_strided_slice %387 {offsets = [0, 128], sizes = [8, 128], strides = [1, 1]} : vector<8x512xf32> to vector<8x128xf32>
    %395 = arith.negf %394 : vector<8x128xf32>
    %396 = math.exp %395 : vector<8x128xf32>
    %cst_97 = arith.constant 1.000000e+00 : f32
    %397 = vector.broadcast %cst_97 : f32 to vector<8x128xf32>
    %398 = arith.addf %397, %396 : vector<8x128xf32>
    %399 = arith.divf %397, %398 : vector<8x128xf32>
    %400 = vector.extract_strided_slice %387 {offsets = [0, 256], sizes = [8, 128], strides = [1, 1]} : vector<8x512xf32> to vector<8x128xf32>
    %401 = math.tanh %400 : vector<8x128xf32>
    %402 = vector.extract_strided_slice %387 {offsets = [0, 384], sizes = [8, 128], strides = [1, 1]} : vector<8x512xf32> to vector<8x128xf32>
    %403 = arith.negf %402 : vector<8x128xf32>
    %404 = math.exp %403 : vector<8x128xf32>
    %cst_98 = arith.constant 1.000000e+00 : f32
    %405 = vector.broadcast %cst_98 : f32 to vector<8x128xf32>
    %406 = arith.addf %405, %404 : vector<8x128xf32>
    %407 = arith.divf %405, %406 : vector<8x128xf32>
    %408 = arith.mulf %399, %348 : vector<8x128xf32>
    %409 = arith.mulf %393, %401 : vector<8x128xf32>
    %410 = arith.addf %408, %409 : vector<8x128xf32>
    %411 = math.tanh %410 : vector<8x128xf32>
    %412 = arith.mulf %407, %411 : vector<8x128xf32>
    %413 = tpu.concatenate %412, %382 in 1 : vector<8x128xf32>, vector<8x128xf32> -> vector<8x256xf32>
    %414 = arith.truncf %413 : vector<8x256xf32> to vector<8x256xbf16>
    %c0_99 = arith.constant 0 : index
    %c0_100 = arith.constant 0 : index
    %415 = vector.load %arg4[%c0_99, %c0_100] : memref<256x512xbf16, #tpu.memory_space<vmem>>, vector<256x512xbf16>
    %cst_101 = arith.constant dense<0.000000e+00> : vector<8x512xf32>
    %416 = tpu.matmul %414, %415, %cst_101 {dimension_numbers = #tpu.dot_dimension_numbers<[1], [0], [0], [1], [0, 0, 1, 1], [], []>} : vector<8x256xbf16>, vector<256x512xbf16>, vector<8x512xf32> -> vector<8x512xf32>
    %c0_102 = arith.constant 0 : index
    %c0_103 = arith.constant 0 : index
    %417 = vector.load %arg5[%c0_102, %c0_103] : memref<1x512xf32, #tpu.memory_space<vmem>>, vector<1x512xf32>
    %418 = vector.broadcast %417 : vector<1x512xf32> to vector<8x512xf32>
    %419 = arith.addf %416, %418 : vector<8x512xf32>
    %420 = vector.extract_strided_slice %419 {offsets = [0, 0], sizes = [8, 128], strides = [1, 1]} : vector<8x512xf32> to vector<8x128xf32>
    %421 = arith.negf %420 : vector<8x128xf32>
    %422 = math.exp %421 : vector<8x128xf32>
    %cst_104 = arith.constant 1.000000e+00 : f32
    %423 = vector.broadcast %cst_104 : f32 to vector<8x128xf32>
    %424 = arith.addf %423, %422 : vector<8x128xf32>
    %425 = arith.divf %423, %424 : vector<8x128xf32>
    %426 = vector.extract_strided_slice %419 {offsets = [0, 128], sizes = [8, 128], strides = [1, 1]} : vector<8x512xf32> to vector<8x128xf32>
    %427 = arith.negf %426 : vector<8x128xf32>
    %428 = math.exp %427 : vector<8x128xf32>
    %cst_105 = arith.constant 1.000000e+00 : f32
    %429 = vector.broadcast %cst_105 : f32 to vector<8x128xf32>
    %430 = arith.addf %429, %428 : vector<8x128xf32>
    %431 = arith.divf %429, %430 : vector<8x128xf32>
    %432 = vector.extract_strided_slice %419 {offsets = [0, 256], sizes = [8, 128], strides = [1, 1]} : vector<8x512xf32> to vector<8x128xf32>
    %433 = math.tanh %432 : vector<8x128xf32>
    %434 = vector.extract_strided_slice %419 {offsets = [0, 384], sizes = [8, 128], strides = [1, 1]} : vector<8x512xf32> to vector<8x128xf32>
    %435 = arith.negf %434 : vector<8x128xf32>
    %436 = math.exp %435 : vector<8x128xf32>
    %cst_106 = arith.constant 1.000000e+00 : f32
    %437 = vector.broadcast %cst_106 : f32 to vector<8x128xf32>
    %438 = arith.addf %437, %436 : vector<8x128xf32>
    %439 = arith.divf %437, %438 : vector<8x128xf32>
    %440 = arith.mulf %431, %380 : vector<8x128xf32>
    %441 = arith.mulf %425, %433 : vector<8x128xf32>
    %442 = arith.addf %440, %441 : vector<8x128xf32>
    %443 = math.tanh %442 : vector<8x128xf32>
    %444 = arith.mulf %439, %443 : vector<8x128xf32>
    %445 = vector.extract_strided_slice %6 {offsets = [56, 0], sizes = [8, 512], strides = [1, 1]} : vector<64x512xf32> to vector<8x512xf32>
    %446 = arith.truncf %412 : vector<8x128xf32> to vector<8x128xbf16>
    %c0_107 = arith.constant 0 : index
    %c0_108 = arith.constant 0 : index
    %447 = vector.load %arg3[%c0_107, %c0_108] : memref<128x512xbf16, #tpu.memory_space<vmem>>, vector<128x512xbf16>
    %cst_109 = arith.constant dense<0.000000e+00> : vector<8x512xf32>
    %448 = tpu.matmul %446, %447, %cst_109 {dimension_numbers = #tpu.dot_dimension_numbers<[1], [0], [0], [1], [0, 0, 1, 1], [], []>} : vector<8x128xbf16>, vector<128x512xbf16>, vector<8x512xf32> -> vector<8x512xf32>
    %449 = arith.addf %445, %448 : vector<8x512xf32>
    %450 = vector.extract_strided_slice %449 {offsets = [0, 0], sizes = [8, 128], strides = [1, 1]} : vector<8x512xf32> to vector<8x128xf32>
    %451 = arith.negf %450 : vector<8x128xf32>
    %452 = math.exp %451 : vector<8x128xf32>
    %cst_110 = arith.constant 1.000000e+00 : f32
    %453 = vector.broadcast %cst_110 : f32 to vector<8x128xf32>
    %454 = arith.addf %453, %452 : vector<8x128xf32>
    %455 = arith.divf %453, %454 : vector<8x128xf32>
    %456 = vector.extract_strided_slice %449 {offsets = [0, 128], sizes = [8, 128], strides = [1, 1]} : vector<8x512xf32> to vector<8x128xf32>
    %457 = arith.negf %456 : vector<8x128xf32>
    %458 = math.exp %457 : vector<8x128xf32>
    %cst_111 = arith.constant 1.000000e+00 : f32
    %459 = vector.broadcast %cst_111 : f32 to vector<8x128xf32>
    %460 = arith.addf %459, %458 : vector<8x128xf32>
    %461 = arith.divf %459, %460 : vector<8x128xf32>
    %462 = vector.extract_strided_slice %449 {offsets = [0, 256], sizes = [8, 128], strides = [1, 1]} : vector<8x512xf32> to vector<8x128xf32>
    %463 = math.tanh %462 : vector<8x128xf32>
    %464 = vector.extract_strided_slice %449 {offsets = [0, 384], sizes = [8, 128], strides = [1, 1]} : vector<8x512xf32> to vector<8x128xf32>
    %465 = arith.negf %464 : vector<8x128xf32>
    %466 = math.exp %465 : vector<8x128xf32>
    %cst_112 = arith.constant 1.000000e+00 : f32
    %467 = vector.broadcast %cst_112 : f32 to vector<8x128xf32>
    %468 = arith.addf %467, %466 : vector<8x128xf32>
    %469 = arith.divf %467, %468 : vector<8x128xf32>
    %470 = arith.mulf %461, %410 : vector<8x128xf32>
    %471 = arith.mulf %455, %463 : vector<8x128xf32>
    %472 = arith.addf %470, %471 : vector<8x128xf32>
    %473 = math.tanh %472 : vector<8x128xf32>
    %474 = arith.mulf %469, %473 : vector<8x128xf32>
    %475 = tpu.concatenate %474, %444 in 1 : vector<8x128xf32>, vector<8x128xf32> -> vector<8x256xf32>
    %476 = arith.truncf %475 : vector<8x256xf32> to vector<8x256xbf16>
    %c0_113 = arith.constant 0 : index
    %c0_114 = arith.constant 0 : index
    %477 = vector.load %arg4[%c0_113, %c0_114] : memref<256x512xbf16, #tpu.memory_space<vmem>>, vector<256x512xbf16>
    %cst_115 = arith.constant dense<0.000000e+00> : vector<8x512xf32>
    %478 = tpu.matmul %476, %477, %cst_115 {dimension_numbers = #tpu.dot_dimension_numbers<[1], [0], [0], [1], [0, 0, 1, 1], [], []>} : vector<8x256xbf16>, vector<256x512xbf16>, vector<8x512xf32> -> vector<8x512xf32>
    %c0_116 = arith.constant 0 : index
    %c0_117 = arith.constant 0 : index
    %479 = vector.load %arg5[%c0_116, %c0_117] : memref<1x512xf32, #tpu.memory_space<vmem>>, vector<1x512xf32>
    %480 = vector.broadcast %479 : vector<1x512xf32> to vector<8x512xf32>
    %481 = arith.addf %478, %480 : vector<8x512xf32>
    %482 = vector.extract_strided_slice %481 {offsets = [0, 0], sizes = [8, 128], strides = [1, 1]} : vector<8x512xf32> to vector<8x128xf32>
    %483 = arith.negf %482 : vector<8x128xf32>
    %484 = math.exp %483 : vector<8x128xf32>
    %cst_118 = arith.constant 1.000000e+00 : f32
    %485 = vector.broadcast %cst_118 : f32 to vector<8x128xf32>
    %486 = arith.addf %485, %484 : vector<8x128xf32>
    %487 = arith.divf %485, %486 : vector<8x128xf32>
    %488 = vector.extract_strided_slice %481 {offsets = [0, 128], sizes = [8, 128], strides = [1, 1]} : vector<8x512xf32> to vector<8x128xf32>
    %489 = arith.negf %488 : vector<8x128xf32>
    %490 = math.exp %489 : vector<8x128xf32>
    %cst_119 = arith.constant 1.000000e+00 : f32
    %491 = vector.broadcast %cst_119 : f32 to vector<8x128xf32>
    %492 = arith.addf %491, %490 : vector<8x128xf32>
    %493 = arith.divf %491, %492 : vector<8x128xf32>
    %494 = vector.extract_strided_slice %481 {offsets = [0, 256], sizes = [8, 128], strides = [1, 1]} : vector<8x512xf32> to vector<8x128xf32>
    %495 = math.tanh %494 : vector<8x128xf32>
    %496 = vector.extract_strided_slice %481 {offsets = [0, 384], sizes = [8, 128], strides = [1, 1]} : vector<8x512xf32> to vector<8x128xf32>
    %497 = arith.negf %496 : vector<8x128xf32>
    %498 = math.exp %497 : vector<8x128xf32>
    %cst_120 = arith.constant 1.000000e+00 : f32
    %499 = vector.broadcast %cst_120 : f32 to vector<8x128xf32>
    %500 = arith.addf %499, %498 : vector<8x128xf32>
    %501 = arith.divf %499, %500 : vector<8x128xf32>
    %502 = arith.mulf %493, %442 : vector<8x128xf32>
    %503 = arith.mulf %487, %495 : vector<8x128xf32>
    %504 = arith.addf %502, %503 : vector<8x128xf32>
    %505 = math.tanh %504 : vector<8x128xf32>
    %506 = arith.mulf %501, %505 : vector<8x128xf32>
    %507 = arith.truncf %506 : vector<8x128xf32> to vector<8x128xbf16>
    %c0_121 = arith.constant 0 : index
    %c0_122 = arith.constant 0 : index
    %508 = vector.load %arg6[%c0_121, %c0_122] : memref<128x5xbf16, #tpu.memory_space<vmem>>, vector<128x5xbf16>
    %cst_123 = arith.constant dense<0.000000e+00> : vector<8x5xf32>
    %509 = tpu.matmul %507, %508, %cst_123 {dimension_numbers = #tpu.dot_dimension_numbers<[1], [0], [0], [1], [0, 0, 1, 1], [], []>} : vector<8x128xbf16>, vector<128x5xbf16>, vector<8x5xf32> -> vector<8x5xf32>
    %c0_124 = arith.constant 0 : index
    %c0_125 = arith.constant 0 : index
    %510 = vector.load %arg7[%c0_124, %c0_125] : memref<1x5xf32, #tpu.memory_space<vmem>>, vector<1x5xf32>
    %511 = vector.broadcast %510 : vector<1x5xf32> to vector<8x5xf32>
    %512 = arith.addf %509, %511 : vector<8x5xf32>
    %cst_126 = arith.constant dense<0xFF800000> : vector<8xf32>
    %513 = vector.multi_reduction <maximumf>, %512, %cst_126 [1] : vector<8x5xf32> to vector<8xf32>
    %514 = vector.shape_cast %513 : vector<8xf32> to vector<8x1xf32>
    %515 = vector.broadcast %514 : vector<8x1xf32> to vector<8x5xf32>
    %516 = arith.subf %512, %515 : vector<8x5xf32>
    %517 = math.exp %516 : vector<8x5xf32>
    %cst_127 = arith.constant dense<0.000000e+00> : vector<8xf32>
    %518 = vector.multi_reduction <add>, %517, %cst_127 [1] : vector<8x5xf32> to vector<8xf32>
    %519 = vector.shape_cast %518 : vector<8xf32> to vector<8x1xf32>
    %520 = math.log %519 : vector<8x1xf32>
    %521 = vector.broadcast %520 : vector<8x1xf32> to vector<8x5xf32>
    %522 = arith.subf %516, %521 : vector<8x5xf32>
    %c0_128 = arith.constant 0 : index
    %c0_129 = arith.constant 0 : index
    %523 = vector.load %arg8[%c0_128, %c0_129] : memref<8x5xf32, #tpu.memory_space<vmem>>, vector<8x5xf32>
    tpu.vector_store %arg8[%c0_128, %c0_129], %522 {strides = array<i32>} : memref<8x5xf32, #tpu.memory_space<vmem>>, vector<8x5xf32>,
    return
  }
}

</mosaic_0001>

<llo_original>
// kernel: seq_model_forward.1
$region0: #{seq_model_forward.1}
  #allocation0 [shape = 'u32[]', space=smem, size = 0x4, offset = 0x4, fixed_abs, tag = 'smem constant byte address 0x4 - core index']
  #allocation1 [shape = 'u32[144,128]{1,0:T(1,128)}', space=vmem, size = 0x12000, scoped, tag = 'internal scratch']
  %s0 = inlined_call_operand.vmem [shape: f32[64,128], index: 0, kind: input, shape index: {}]
  %s1 = inlined_call_operand.vmem [shape: bf16[128,512], index: 1, kind: input, shape index: {}]
  %s2 = inlined_call_operand.vmem [shape: f32[1,512], index: 2, kind: input, shape index: {}]
  %s3 = inlined_call_operand.vmem [shape: bf16[128,512], index: 3, kind: input, shape index: {}]
  %s4 = inlined_call_operand.vmem [shape: bf16[256,512], index: 4, kind: input, shape index: {}]
  %s5 = inlined_call_operand.vmem [shape: f32[1,512], index: 5, kind: input, shape index: {}]
  %s6 = inlined_call_operand.vmem [shape: bf16[128,5], index: 6, kind: input, shape index: {}]
  %s7 = inlined_call_operand.vmem [shape: f32[1,5], index: 7, kind: input, shape index: {}]
  %s8 = inlined_call_operand.vmem [shape: f32[8,5], index: 8, kind: output, shape index: {}]
  %s9 = sld [smem:[#allocation0]]
  $region42: #{seq_model_forward.1} parent=0
    _
  %s11 = ssub.s32 1, %s9
  %s12 = scalar_select 0, %s11, %s9
  // Predicated region
  $region2: #{seq_model_forward.1} parent=0 // pred_check
    _
  $region3: #{seq_model_forward.1} parent=0 // pred_check_branch
    %14 = sbr.rel (0) target = $region5
  $region4: #{seq_model_forward.1} parent=0 // pred_region
    _
  $region5: #{seq_model_forward.1} parent=0 // pred_fallthru
    _
  // Predicated region
  $region6: #{seq_model_forward.1} parent=0 // pred_check
    _
  $region7: #{seq_model_forward.1} parent=0 // pred_check_branch
    %16 = sbr.rel (0) target = $region9
  $region8: #{seq_model_forward.1} parent=0 // pred_region
    _
  $region9: #{seq_model_forward.1} parent=0 // pred_fallthru
    _
  // Predicated region
  $region10: #{seq_model_forward.1} parent=0 // pred_check
    _
  $region11: #{seq_model_forward.1} parent=0 // pred_check_branch
    %18 = sbr.rel (0) target = $region13
  $region12: #{seq_model_forward.1} parent=0 // pred_region
    _
  $region13: #{seq_model_forward.1} parent=0 // pred_fallthru
    _
  // Predicated region
  $region14: #{seq_model_forward.1} parent=0 // pred_check
    _
  $region15: #{seq_model_forward.1} parent=0 // pred_check_branch
    %20 = sbr.rel (0) target = $region17
  $region16: #{seq_model_forward.1} parent=0 // pred_region
    _
  $region17: #{seq_model_forward.1} parent=0 // pred_fallthru
    _
  // Predicated region
  $region18: #{seq_model_forward.1} parent=0 // pred_check
    _
  $region19: #{seq_model_forward.1} parent=0 // pred_check_branch
    %22 = sbr.rel (0) target = $region21
  $region20: #{seq_model_forward.1} parent=0 // pred_region
    _
  $region21: #{seq_model_forward.1} parent=0 // pred_fallthru
    _
  // Predicated region
  $region22: #{seq_model_forward.1} parent=0 // pred_check
    _
  $region23: #{seq_model_forward.1} parent=0 // pred_check_branch
    %24 = sbr.rel (0) target = $region25
  $region24: #{seq_model_forward.1} parent=0 // pred_region
    _
  $region25: #{seq_model_forward.1} parent=0 // pred_fallthru
    _
  // Predicated region
  $region26: #{seq_model_forward.1} parent=0 // pred_check
    _
  $region27: #{seq_model_forward.1} parent=0 // pred_check_branch
    %26 = sbr.rel (0) target = $region29
  $region28: #{seq_model_forward.1} parent=0 // pred_region
    _
  $region29: #{seq_model_forward.1} parent=0 // pred_fallthru
    _
  // Predicated region
  $region30: #{seq_model_forward.1} parent=0 // pred_check
    _
  $region31: #{seq_model_forward.1} parent=0 // pred_check_branch
    %28 = sbr.rel (0) target = $region33
  $region32: #{seq_model_forward.1} parent=0 // pred_region
    _
  $region33: #{seq_model_forward.1} parent=0 // pred_fallthru
    _
  %v30 = vld [vmem:[%s0] sm:$0xff]
  %v31 = vld [vmem:[%s0 + $0x8] sm:$0xff]
  %v32 = vld [vmem:[%s0 + $0x10] sm:$0xff]
  %v33 = vld [vmem:[%s0 + $0x18] sm:$0xff]
  %v34 = vld [vmem:[%s0 + $0x20] sm:$0xff]
  %v35 = vld [vmem:[%s0 + $0x28] sm:$0xff]
  %v36 = vld [vmem:[%s0 + $0x30] sm:$0xff]
  %v37 = vld [vmem:[%s0 + $0x38] sm:$0xff]
  %v38 = vpack.c.bf16 %v31, %v30
  %v39 = vpack.c.bf16 %v33, %v32
  %v40 = vpack.c.bf16 %v35, %v34
  %v41 = vpack.c.bf16 %v37, %v36
  %v42 = vld [vmem:[%s1] sm:$0xff]
  %v43 = vld [vmem:[%s1 + $0x8] sm:$0xff]
  %v44 = vld [vmem:[%s1 + $0x10] sm:$0xff]
  %v45 = vld [vmem:[%s1 + $0x18] sm:$0xff]
  %v46 = vld [vmem:[%s1 + $0x20] sm:$0xff]
  %v47 = vld [vmem:[%s1 + $0x28] sm:$0xff]
  %v48 = vld [vmem:[%s1 + $0x30] sm:$0xff]
  %v49 = vld [vmem:[%s1 + $0x38] sm:$0xff]
  %v50 = vld [vmem:[%s1 + $0x40] sm:$0xff]
  %v51 = vld [vmem:[%s1 + $0x48] sm:$0xff]
  %v52 = vld [vmem:[%s1 + $0x50] sm:$0xff]
  %v53 = vld [vmem:[%s1 + $0x58] sm:$0xff]
  %v54 = vld [vmem:[%s1 + $0x60] sm:$0xff]
  %v55 = vld [vmem:[%s1 + $0x68] sm:$0xff]
  %v56 = vld [vmem:[%s1 + $0x70] sm:$0xff]
  %v57 = vld [vmem:[%s1 + $0x78] sm:$0xff]
  %v58 = vld [vmem:[%s1 + $0x80] sm:$0xff]
  %v59 = vld [vmem:[%s1 + $0x88] sm:$0xff]
  %v60 = vld [vmem:[%s1 + $0x90] sm:$0xff]
  %v61 = vld [vmem:[%s1 + $0x98] sm:$0xff]
  %v62 = vld [vmem:[%s1 + $0xa0] sm:$0xff]
  %v63 = vld [vmem:[%s1 + $0xa8] sm:$0xff]
  %v64 = vld [vmem:[%s1 + $0xb0] sm:$0xff]
  %v65 = vld [vmem:[%s1 + $0xb8] sm:$0xff]
  %v66 = vld [vmem:[%s1 + $0xc0] sm:$0xff]
  %v67 = vld [vmem:[%s1 + $0xc8] sm:$0xff]
  %v68 = vld [vmem:[%s1 + $0xd0] sm:$0xff]
  %v69 = vld [vmem:[%s1 + $0xd8] sm:$0xff]
  %v70 = vld [vmem:[%s1 + $0xe0] sm:$0xff]
  %v71 = vld [vmem:[%s1 + $0xe8] sm:$0xff]
  %v72 = vld [vmem:[%s1 + $0xf0] sm:$0xff]
  %v73 = vld [vmem:[%s1 + $0xf8] sm:$0xff]
  %v74 = vld [vmem:[%s2] sm:$0xf]
  %v76 = vlaneseq
  %v77 = vshrl.u32 %v76, 7
  %v78 = vsub.s32 0, %v77
  %v79 = vrot.slane %v74, %v78
  %v80 = vlaneseq
  %v81 = vshrl.u32 %v80, 7
  %v82 = vsub.s32 1, %v81
  %v83 = vrot.slane %v74, %v82
  %v84 = vlaneseq
  %v85 = vshrl.u32 %v84, 7
  %v86 = vsub.s32 2, %v85
  %v87 = vrot.slane %v74, %v86
  %v88 = vlaneseq
  %v89 = vshrl.u32 %v88, 7
  %v90 = vsub.s32 3, %v89
  %v91 = vrot.slane %v74, %v90
  %v128 = vunpack.c.l.b16 %v42
  %v129 = vunpack.c.h.b16 %v42
  %v130 = vunpack.c.l.b16 %v43
  %v131 = vunpack.c.h.b16 %v43
  %v132 = vunpack.c.l.b16 %v44
  %v133 = vunpack.c.h.b16 %v44
  %v134 = vunpack.c.l.b16 %v45
  %v135 = vunpack.c.h.b16 %v45
  %v136 = vunpack.c.l.b16 %v46
  %v137 = vunpack.c.h.b16 %v46
  %v138 = vunpack.c.l.b16 %v47
  %v139 = vunpack.c.h.b16 %v47
  %v140 = vunpack.c.l.b16 %v48
  %v141 = vunpack.c.h.b16 %v48
  %v142 = vunpack.c.l.b16 %v49
  %v143 = vunpack.c.h.b16 %v49
  %v144 = vunpack.c.l.b16 %v50
  %v145 = vunpack.c.h.b16 %v50
  %v146 = vunpack.c.l.b16 %v51
  %v147 = vunpack.c.h.b16 %v51
  %v148 = vunpack.c.l.b16 %v52
  %v149 = vunpack.c.h.b16 %v52
  %v150 = vunpack.c.l.b16 %v53
  %v151 = vunpack.c.h.b16 %v53
  %v152 = vunpack.c.l.b16 %v54
  %v153 = vunpack.c.h.b16 %v54
  %v154 = vunpack.c.l.b16 %v55
  %v155 = vunpack.c.h.b16 %v55
  %v156 = vunpack.c.l.b16 %v56
  %v157 = vunpack.c.h.b16 %v56
  %v158 = vunpack.c.l.b16 %v57
  %v159 = vunpack.c.h.b16 %v57
  %v160 = vunpack.c.l.b16 %v58
  %v161 = vunpack.c.h.b16 %v58
  %v162 = vunpack.c.l.b16 %v59
  %v163 = vunpack.c.h.b16 %v59
  %v164 = vunpack.c.l.b16 %v60
  %v165 = vunpack.c.h.b16 %v60
  %v166 = vunpack.c.l.b16 %v61
  %v167 = vunpack.c.h.b16 %v61
  %v168 = vunpack.c.l.b16 %v62
  %v169 = vunpack.c.h.b16 %v62
  %v170 = vunpack.c.l.b16 %v63
  %v171 = vunpack.c.h.b16 %v63
  %v172 = vunpack.c.l.b16 %v64
  %v173 = vunpack.c.h.b16 %v64
  %v174 = vunpack.c.l.b16 %v65
  %v175 = vunpack.c.h.b16 %v65
  %v176 = vunpack.c.l.b16 %v66
  %v177 = vunpack.c.h.b16 %v66
  %v178 = vunpack.c.l.b16 %v67
  %v179 = vunpack.c.h.b16 %v67
  %v180 = vunpack.c.l.b16 %v68
  %v181 = vunpack.c.h.b16 %v68
  %v182 = vunpack.c.l.b16 %v69
  %v183 = vunpack.c.h.b16 %v69
  %v184 = vunpack.c.l.b16 %v70
  %v185 = vunpack.c.h.b16 %v70
  %v186 = vunpack.c.l.b16 %v71
  %v187 = vunpack.c.h.b16 %v71
  %v188 = vunpack.c.l.b16 %v72
  %v189 = vunpack.c.h.b16 %v72
  %v190 = vunpack.c.l.b16 %v73
  %v191 = vunpack.c.h.b16 %v73
  %v192 = vpack.c.b16 %v132, %v128
  %v193 = vpack.c.b16 %v133, %v129
  %v194 = vpack.c.b16 %v134, %v130
  %v195 = vpack.c.b16 %v135, %v131
  %v196 = vpack.c.b16 %v140, %v136
  %v197 = vpack.c.b16 %v141, %v137
  %v198 = vpack.c.b16 %v142, %v138
  %v199 = vpack.c.b16 %v143, %v139
  %v200 = vpack.c.b16 %v148, %v144
  %v201 = vpack.c.b16 %v149, %v145
  %v202 = vpack.c.b16 %v150, %v146
  %v203 = vpack.c.b16 %v151, %v147
  %v204 = vpack.c.b16 %v156, %v152
  %v205 = vpack.c.b16 %v157, %v153
  %v206 = vpack.c.b16 %v158, %v154
  %v207 = vpack.c.b16 %v159, %v155
  %v208 = vpack.c.b16 %v164, %v160
  %v209 = vpack.c.b16 %v165, %v161
  %v210 = vpack.c.b16 %v166, %v162
  %v211 = vpack.c.b16 %v167, %v163
  %v212 = vpack.c.b16 %v172, %v168
  %v213 = vpack.c.b16 %v173, %v169
  %v214 = vpack.c.b16 %v174, %v170
  %v215 = vpack.c.b16 %v175, %v171
  %v216 = vpack.c.b16 %v180, %v176
  %v217 = vpack.c.b16 %v181, %v177
  %v218 = vpack.c.b16 %v182, %v178
  %v219 = vpack.c.b16 %v183, %v179
  %v220 = vpack.c.b16 %v188, %v184
  %v221 = vpack.c.b16 %v189, %v185
  %v222 = vpack.c.b16 %v190, %v186
  %v223 = vpack.c.b16 %v191, %v187
  %256 = vmatprep.subr.bf16.mxu0 %v193
  %257 = vmatpush1.bf16.msra.mxu0 %v192
  %258 = vmatprep.subr.bf16.mxu0 %v197
  %259 = vmatpush1.bf16.msra.mxu0 %v196
  %260 = vmatprep.subr.bf16.mxu0 %v201
  %261 = vmatpush1.bf16.msra.mxu0 %v200
  %262 = vmatprep.subr.bf16.mxu0 %v205
  %263 = vmatpush1.bf16.msra.mxu0 %v204
  %264 = vmatprep.subr.bf16.mxu0 %v209
  %265 = vmatpush1.bf16.msra.mxu0 %v208
  %266 = vmatprep.subr.bf16.mxu0 %v213
  %267 = vmatpush1.bf16.msra.mxu0 %v212
  %268 = vmatprep.subr.bf16.mxu0 %v217
  %269 = vmatpush1.bf16.msra.mxu0 %v216
  %270 = vmatprep.subr.bf16.mxu0 %v221
  %271 = vmatpush1.bf16.msra.mxu0 %v220
  %272 = vmatprep.subr.bf16.mxu0 0
  %273 = vmatpush1.bf16.msra.mxu0 0
  %274 = vmatprep.subr.bf16.mxu0 0
  %275 = vmatpush1.bf16.msra.mxu0 0
  %276 = vmatprep.subr.bf16.mxu0 0
  %277 = vmatpush1.bf16.msra.mxu0 0
  %278 = vmatprep.subr.bf16.mxu0 0
  %279 = vmatpush1.bf16.msra.mxu0 0
  %280 = vmatprep.subr.bf16.mxu0 0
  %281 = vmatpush1.bf16.msra.mxu0 0
  %282 = vmatprep.subr.bf16.mxu0 0
  %283 = vmatpush1.bf16.msra.mxu0 0
  %284 = vmatprep.subr.bf16.mxu0 0
  %285 = vmatpush1.bf16.msra.mxu0 0
  %286 = vmatprep.subr.bf16.mxu0 0
  %287 = vmatpush1.bf16.msra.mxu0 0
  %288 = vmatprep.mubr.bf16.mxu0 0
  %289 = vmatmul.mubr.bf16.gmra.mrb[0].mxu0 %v38
  %v290 = vpop.f32.mrb[0].mxu0
  %v291 = vadd.f32 %v79, %v290
  %v292 = vpop.f32.mrb[0].mxu0
  %v293 = vadd.f32 %v83, %v292
  %v294 = vpop.f32.mrb[0].mxu0
  %v295 = vadd.f32 %v79, %v294
  %v296 = vpop.f32.mrb[0].mxu0
  %v297 = vadd.f32 %v83, %v296
  %298 = vmatprep.mubr.bf16.mxu0 0
  %299 = vmatmul.mubr.bf16.gmra.mrb[0].mxu0 %v39
  %v300 = vpop.f32.mrb[0].mxu0
  %v301 = vadd.f32 %v79, %v300
  %v302 = vpop.f32.mrb[0].mxu0
  %v303 = vadd.f32 %v83, %v302
  %v304 = vpop.f32.mrb[0].mxu0
  %v305 = vadd.f32 %v79, %v304
  %v306 = vpop.f32.mrb[0].mxu0
  %v307 = vadd.f32 %v83, %v306
  %308 = vmatprep.mubr.bf16.mxu0 0
  %309 = vmatmul.mubr.bf16.gmra.mrb[0].mxu0 %v40
  %v310 = vpop.f32.mrb[0].mxu0
  %v311 = vadd.f32 %v79, %v310
  %v312 = vpop.f32.mrb[0].mxu0
  %v313 = vadd.f32 %v83, %v312
  %v314 = vpop.f32.mrb[0].mxu0
  %v315 = vadd.f32 %v79, %v314
  %v316 = vpop.f32.mrb[0].mxu0
  %v317 = vadd.f32 %v83, %v316
  %318 = vmatprep.mubr.bf16.mxu0 0
  %319 = vmatmul.mubr.bf16.gmra.mrb[0].mxu0 %v41
  %v320 = vpop.f32.mrb[0].mxu0
  %v321 = vadd.f32 %v79, %v320
  %v322 = vpop.f32.mrb[0].mxu0
  %v323 = vadd.f32 %v83, %v322
  %v324 = vpop.f32.mrb[0].mxu0
  %v325 = vadd.f32 %v79, %v324
  %v326 = vpop.f32.mrb[0].mxu0
  %v327 = vadd.f32 %v83, %v326
  %328 = vdwg.mxu0
  %329 = vmatprep.subr.bf16.mxu0 %v195
  %330 = vmatpush1.bf16.msra.mxu0 %v194
  %331 = vmatprep.subr.bf16.mxu0 %v199
  %332 = vmatpush1.bf16.msra.mxu0 %v198
  %333 = vmatprep.subr.bf16.mxu0 %v203
  %334 = vmatpush1.bf16.msra.mxu0 %v202
  %335 = vmatprep.subr.bf16.mxu0 %v207
  %336 = vmatpush1.bf16.msra.mxu0 %v206
  %337 = vmatprep.subr.bf16.mxu0 %v211
  %338 = vmatpush1.bf16.msra.mxu0 %v210
  %339 = vmatprep.subr.bf16.mxu0 %v215
  %340 = vmatpush1.bf16.msra.mxu0 %v214
  %341 = vmatprep.subr.bf16.mxu0 %v219
  %342 = vmatpush1.bf16.msra.mxu0 %v218
  %343 = vmatprep.subr.bf16.mxu0 %v223
  %344 = vmatpush1.bf16.msra.mxu0 %v222
  %345 = vmatprep.subr.bf16.mxu0 0
  %346 = vmatpush1.bf16.msra.mxu0 0
  %347 = vmatprep.subr.bf16.mxu0 0
  %348 = vmatpush1.bf16.msra.mxu0 0
  %349 = vmatprep.subr.bf16.mxu0 0
  %350 = vmatpush1.bf16.msra.mxu0 0
  %351 = vmatprep.subr.bf16.mxu0 0
  %352 = vmatpush1.bf16.msra.mxu0 0
  %353 = vmatprep.subr.bf16.mxu0 0
  %354 = vmatpush1.bf16.msra.mxu0 0
  %355 = vmatprep.subr.bf16.mxu0 0
  %356 = vmatpush1.bf16.msra.mxu0 0
  %357 = vmatprep.subr.bf16.mxu0 0
  %358 = vmatpush1.bf16.msra.mxu0 0
  %359 = vmatprep.subr.bf16.mxu0 0
  %360 = vmatpush1.bf16.msra.mxu0 0
  %361 = vmatprep.mubr.bf16.mxu0 0
  %362 = vmatmul.mubr.bf16.gmra.mrb[0].mxu0 %v38
  %v363 = vpop.f32.mrb[0].mxu0
  %v364 = vadd.f32 %v87, %v363
  %v365 = vpop.f32.mrb[0].mxu0
  %v366 = vadd.f32 %v91, %v365
  %v367 = vpop.f32.mrb[0].mxu0
  %v368 = vadd.f32 %v87, %v367
  %v369 = vpop.f32.mrb[0].mxu0
  %v370 = vadd.f32 %v91, %v369
  %371 = vmatprep.mubr.bf16.mxu0 0
  %372 = vmatmul.mubr.bf16.gmra.mrb[0].mxu0 %v39
  %v373 = vpop.f32.mrb[0].mxu0
  %v374 = vadd.f32 %v87, %v373
  %v375 = vpop.f32.mrb[0].mxu0
  %v376 = vadd.f32 %v91, %v375
  %v377 = vpop.f32.mrb[0].mxu0
  %v378 = vadd.f32 %v87, %v377
  %v379 = vpop.f32.mrb[0].mxu0
  %v380 = vadd.f32 %v91, %v379
  %381 = vmatprep.mubr.bf16.mxu0 0
  %382 = vmatmul.mubr.bf16.gmra.mrb[0].mxu0 %v40
  %v383 = vpop.f32.mrb[0].mxu0
  %v384 = vadd.f32 %v87, %v383
  %v385 = vpop.f32.mrb[0].mxu0
  %v386 = vadd.f32 %v91, %v385
  %v387 = vpop.f32.mrb[0].mxu0
  %v388 = vadd.f32 %v87, %v387
  %v389 = vpop.f32.mrb[0].mxu0
  %v390 = vadd.f32 %v91, %v389
  %391 = vmatprep.mubr.bf16.mxu0 0
  %392 = vmatmul.mubr.bf16.gmra.mrb[0].mxu0 %v41
  %v393 = vpop.f32.mrb[0].mxu0
  %v394 = vadd.f32 %v87, %v393
  %v395 = vpop.f32.mrb[0].mxu0
  %v396 = vadd.f32 %v91, %v395
  %v397 = vpop.f32.mrb[0].mxu0
  %v398 = vadd.f32 %v87, %v397
  %v399 = vpop.f32.mrb[0].mxu0
  %v400 = vadd.f32 %v91, %v399
  %401 = vdwg.mxu0
  %v402 = vld [vmem:[%s3] sm:$0xff]
  %v403 = vld [vmem:[%s3 + $0x8] sm:$0xff]
  %v404 = vld [vmem:[%s3 + $0x10] sm:$0xff]
  %v405 = vld [vmem:[%s3 + $0x18] sm:$0xff]
  %v406 = vld [vmem:[%s3 + $0x20] sm:$0xff]
  %v407 = vld [vmem:[%s3 + $0x28] sm:$0xff]
  %v408 = vld [vmem:[%s3 + $0x30] sm:$0xff]
  %v409 = vld [vmem:[%s3 + $0x38] sm:$0xff]
  %v410 = vld [vmem:[%s3 + $0x40] sm:$0xff]
  %v411 = vld [vmem:[%s3 + $0x48] sm:$0xff]
  %v412 = vld [vmem:[%s3 + $0x50] sm:$0xff]
  %v413 = vld [vmem:[%s3 + $0x58] sm:$0xff]
  %v414 = vld [vmem:[%s3 + $0x60] sm:$0xff]
  %v415 = vld [vmem:[%s3 + $0x68] sm:$0xff]
  %v416 = vld [vmem:[%s3 + $0x70] sm:$0xff]
  %v417 = vld [vmem:[%s3 + $0x78] sm:$0xff]
  %v418 = vld [vmem:[%s3 + $0x80] sm:$0xff]
  %v419 = vld [vmem:[%s3 + $0x88] sm:$0xff]
  %v420 = vld [vmem:[%s3 + $0x90] sm:$0xff]
  %v421 = vld [vmem:[%s3 + $0x98] sm:$0xff]
  %v422 = vld [vmem:[%s3 + $0xa0] sm:$0xff]
  %v423 = vld [vmem:[%s3 + $0xa8] sm:$0xff]
  %v424 = vld [vmem:[%s3 + $0xb0] sm:$0xff]
  %v425 = vld [vmem:[%s3 + $0xb8] sm:$0xff]
  %v426 = vld [vmem:[%s3 + $0xc0] sm:$0xff]
  %v427 = vld [vmem:[%s3 + $0xc8] sm:$0xff]
  %v428 = vld [vmem:[%s3 + $0xd0] sm:$0xff]
  %v429 = vld [vmem:[%s3 + $0xd8] sm:$0xff]
  %v430 = vld [vmem:[%s3 + $0xe0] sm:$0xff]
  %v431 = vld [vmem:[%s3 + $0xe8] sm:$0xff]
  %v432 = vld [vmem:[%s3 + $0xf0] sm:$0xff]
  %v433 = vld [vmem:[%s3 + $0xf8] sm:$0xff]
  %v466 = vunpack.c.l.b16 %v402
  %v467 = vunpack.c.h.b16 %v402
  %v468 = vunpack.c.l.b16 %v403
  %v469 = vunpack.c.h.b16 %v403
  %v470 = vunpack.c.l.b16 %v404
  %v471 = vunpack.c.h.b16 %v404
  %v472 = vunpack.c.l.b16 %v405
  %v473 = vunpack.c.h.b16 %v405
  %v474 = vunpack.c.l.b16 %v406
  %v475 = vunpack.c.h.b16 %v406
  %v476 = vunpack.c.l.b16 %v407
  %v477 = vunpack.c.h.b16 %v407
  %v478 = vunpack.c.l.b16 %v408
  %v479 = vunpack.c.h.b16 %v408
  %v480 = vunpack.c.l.b16 %v409
  %v481 = vunpack.c.h.b16 %v409
  %v482 = vunpack.c.l.b16 %v410
  %v483 = vunpack.c.h.b16 %v410
  %v484 = vunpack.c.l.b16 %v411
  %v485 = vunpack.c.h.b16 %v411
  %v486 = vunpack.c.l.b16 %v412
  %v487 = vunpack.c.h.b16 %v412
  %v488 = vunpack.c.l.b16 %v413
  %v489 = vunpack.c.h.b16 %v413
  %v490 = vunpack.c.l.b16 %v414
  %v491 = vunpack.c.h.b16 %v414
  %v492 = vunpack.c.l.b16 %v415
  %v493 = vunpack.c.h.b16 %v415
  %v494 = vunpack.c.l.b16 %v416
  %v495 = vunpack.c.h.b16 %v416
  %v496 = vunpack.c.l.b16 %v417
  %v497 = vunpack.c.h.b16 %v417
  %v498 = vunpack.c.l.b16 %v418
  %v499 = vunpack.c.h.b16 %v418
  %v500 = vunpack.c.l.b16 %v419
  %v501 = vunpack.c.h.b16 %v419
  %v502 = vunpack.c.l.b16 %v420
  %v503 = vunpack.c.h.b16 %v420
  %v504 = vunpack.c.l.b16 %v421
  %v505 = vunpack.c.h.b16 %v421
  %v506 = vunpack.c.l.b16 %v422
  %v507 = vunpack.c.h.b16 %v422
  %v508 = vunpack.c.l.b16 %v423
  %v509 = vunpack.c.h.b16 %v423
  %v510 = vunpack.c.l.b16 %v424
  %v511 = vunpack.c.h.b16 %v424
  %v512 = vunpack.c.l.b16 %v425
  %v513 = vunpack.c.h.b16 %v425
  %v514 = vunpack.c.l.b16 %v426
  %v515 = vunpack.c.h.b16 %v426
  %v516 = vunpack.c.l.b16 %v427
  %v517 = vunpack.c.h.b16 %v427
  %v518 = vunpack.c.l.b16 %v428
  %v519 = vunpack.c.h.b16 %v428
  %v520 = vunpack.c.l.b16 %v429
  %v521 = vunpack.c.h.b16 %v429
  %v522 = vunpack.c.l.b16 %v430
  %v523 = vunpack.c.h.b16 %v430
  %v524 = vunpack.c.l.b16 %v431
  %v525 = vunpack.c.h.b16 %v431
  %v526 = vunpack.c.l.b16 %v432
  %v527 = vunpack.c.h.b16 %v432
  %v528 = vunpack.c.l.b16 %v433
  %v529 = vunpack.c.h.b16 %v433
  %v530 = vpack.c.b16 %v470, %v466
  %v531 = vpack.c.b16 %v471, %v467
  %v532 = vpack.c.b16 %v472, %v468
  %v533 = vpack.c.b16 %v473, %v469
  %v534 = vpack.c.b16 %v478, %v474
  %v535 = vpack.c.b16 %v479, %v475
  %v536 = vpack.c.b16 %v480, %v476
  %v537 = vpack.c.b16 %v481, %v477
  %v538 = vpack.c.b16 %v486, %v482
  %v539 = vpack.c.b16 %v487, %v483
  %v540 = vpack.c.b16 %v488, %v484
  %v541 = vpack.c.b16 %v489, %v485
  %v542 = vpack.c.b16 %v494, %v490
  %v543 = vpack.c.b16 %v495, %v491
  %v544 = vpack.c.b16 %v496, %v492
  %v545 = vpack.c.b16 %v497, %v493
  %v546 = vpack.c.b16 %v502, %v498
  %v547 = vpack.c.b16 %v503, %v499
  %v548 = vpack.c.b16 %v504, %v500
  %v549 = vpack.c.b16 %v505, %v501
  %v550 = vpack.c.b16 %v510, %v506
  %v551 = vpack.c.b16 %v511, %v507
  %v552 = vpack.c.b16 %v512, %v508
  %v553 = vpack.c.b16 %v513, %v509
  %v554 = vpack.c.b16 %v518, %v514
  %v555 = vpack.c.b16 %v519, %v515
  %v556 = vpack.c.b16 %v520, %v516
  %v557 = vpack.c.b16 %v521, %v517
  %v558 = vpack.c.b16 %v526, %v522
  %v559 = vpack.c.b16 %v527, %v523
  %v560 = vpack.c.b16 %v528, %v524
  %v561 = vpack.c.b16 %v529, %v525
  %594 = vmatprep.subr.bf16.mxu0 %v531
  %595 = vmatpush1.bf16.msra.mxu0 %v530
  %596 = vmatprep.subr.bf16.mxu0 %v535
  %597 = vmatpush1.bf16.msra.mxu0 %v534
  %598 = vmatprep.subr.bf16.mxu0 %v539
  %599 = vmatpush1.bf16.msra.mxu0 %v538
  %600 = vmatprep.subr.bf16.mxu0 %v543
  %601 = vmatpush1.bf16.msra.mxu0 %v542
  %602 = vmatprep.subr.bf16.mxu0 %v547
  %603 = vmatpush1.bf16.msra.mxu0 %v546
  %604 = vmatprep.subr.bf16.mxu0 %v551
  %605 = vmatpush1.bf16.msra.mxu0 %v550
  %606 = vmatprep.subr.bf16.mxu0 %v555
  %607 = vmatpush1.bf16.msra.mxu0 %v554
  %608 = vmatprep.subr.bf16.mxu0 %v559
  %609 = vmatpush1.bf16.msra.mxu0 %v558
  %610 = vmatprep.subr.bf16.mxu0 0
  %611 = vmatpush1.bf16.msra.mxu0 0
  %612 = vmatprep.subr.bf16.mxu0 0
  %613 = vmatpush1.bf16.msra.mxu0 0
  %614 = vmatprep.subr.bf16.mxu0 0
  %615 = vmatpush1.bf16.msra.mxu0 0
  %616 = vmatprep.subr.bf16.mxu0 0
  %617 = vmatpush1.bf16.msra.mxu0 0
  %618 = vmatprep.subr.bf16.mxu0 0
  %619 = vmatpush1.bf16.msra.mxu0 0
  %620 = vmatprep.subr.bf16.mxu0 0
  %621 = vmatpush1.bf16.msra.mxu0 0
  %622 = vmatprep.subr.bf16.mxu0 0
  %623 = vmatpush1.bf16.msra.mxu0 0
  %624 = vmatprep.subr.bf16.mxu0 0
  %625 = vmatpush1.bf16.msra.mxu0 0
  %626 = vmatprep.mubr.bf16.mxu0 0
  %627 = vmatmul.mubr.bf16.gmra.mrb[0].mxu0 0
  %v628 = vpop.f32.mrb[0].mxu0
  %v629 = vadd.f32 0.0, %v628
  %v630 = vpop.f32.mrb[0].mxu0
  %v631 = vadd.f32 0.0, %v630
  %v632 = vpop.f32.mrb[0].mxu0
  %v633 = vpop.f32.mrb[0].mxu0
  %634 = vdwg.mxu0
  %635 = vmatprep.subr.bf16.mxu0 %v533
  %636 = vmatpush1.bf16.msra.mxu0 %v532
  %637 = vmatprep.subr.bf16.mxu0 %v537
  %638 = vmatpush1.bf16.msra.mxu0 %v536
  %639 = vmatprep.subr.bf16.mxu0 %v541
  %640 = vmatpush1.bf16.msra.mxu0 %v540
  %641 = vmatprep.subr.bf16.mxu0 %v545
  %642 = vmatpush1.bf16.msra.mxu0 %v544
  %643 = vmatprep.subr.bf16.mxu0 %v549
  %644 = vmatpush1.bf16.msra.mxu0 %v548
  %645 = vmatprep.subr.bf16.mxu0 %v553
  %646 = vmatpush1.bf16.msra.mxu0 %v552
  %647 = vmatprep.subr.bf16.mxu0 %v557
  %648 = vmatpush1.bf16.msra.mxu0 %v556
  %649 = vmatprep.subr.bf16.mxu0 %v561
  %650 = vmatpush1.bf16.msra.mxu0 %v560
  %651 = vmatprep.subr.bf16.mxu0 0
  %652 = vmatpush1.bf16.msra.mxu0 0
  %653 = vmatprep.subr.bf16.mxu0 0
  %654 = vmatpush1.bf16.msra.mxu0 0
  %655 = vmatprep.subr.bf16.mxu0 0
  %656 = vmatpush1.bf16.msra.mxu0 0
  %657 = vmatprep.subr.bf16.mxu0 0
  %658 = vmatpush1.bf16.msra.mxu0 0
  %659 = vmatprep.subr.bf16.mxu0 0
  %660 = vmatpush1.bf16.msra.mxu0 0
  %661 = vmatprep.subr.bf16.mxu0 0
  %662 = vmatpush1.bf16.msra.mxu0 0
  %663 = vmatprep.subr.bf16.mxu0 0
  %664 = vmatpush1.bf16.msra.mxu0 0
  %665 = vmatprep.subr.bf16.mxu0 0
  %666 = vmatpush1.bf16.msra.mxu0 0
  %667 = vmatprep.mubr.bf16.mxu0 0
  %668 = vmatmul.mubr.bf16.gmra.mrb[0].mxu0 0
  %v669 = vpop.f32.mrb[0].mxu0
  %v670 = vadd.f32 0.0, %v669
  %v671 = vpop.f32.mrb[0].mxu0
  %v672 = vadd.f32 0.0, %v671
  %v673 = vpop.f32.mrb[0].mxu0
  %v674 = vpop.f32.mrb[0].mxu0
  %675 = vdwg.mxu0
  %v676 = vadd.f32 %v291, %v629
  %v677 = vadd.f32 %v293, %v631
  %v678 = vadd.f32 %v364, %v670
  %v679 = vadd.f32 %v366, %v672
  %v680 = vxor.u32 %v676, 2147483648
  %v681 = vmul.f32 %v680, 1.442695
  %v682 = vpow.pop %v681
  %v683 = vadd.f32 %v682, 1.0
  %v684 = vrcp.pop %v683
  %v685 = vmul.f32 1.0, %v684
  %v686 = vxor.u32 %v677, 2147483648
  %v687 = vmul.f32 %v686, 1.442695
  %v688 = vpow.pop %v687
  %v689 = vadd.f32 %v688, 1.0
  %v690 = vrcp.pop %v689
  %v691 = vmul.f32 1.0, %v690
  %v692 = vtanh.pop %v678
  %v693 = vxor.u32 %v679, 2147483648
  %v694 = vmul.f32 %v693, 1.442695
  %v695 = vpow.pop %v694
  %v696 = vadd.f32 %v695, 1.0
  %v697 = vrcp.pop %v696
  %v698 = vmul.f32 1.0, %v697
  %v699 = vmul.f32 %v691, 0.0
  %v700 = vmul.f32 %v685, %v692
  %v701 = vadd.f32 %v699, %v700
  %v702 = vtanh.pop %v701
  %v703 = vmul.f32 %v698, %v702
  %v704 = vpack.c.bf16 %v703, %v703
  %v705 = vpack.c.bf16 0.0, 0.0
  %v706 = vld [vmem:[%s4] sm:$0xff]
  %v707 = vld [vmem:[%s4 + $0x8] sm:$0xff]
  %v708 = vld [vmem:[%s4 + $0x10] sm:$0xff]
  %v709 = vld [vmem:[%s4 + $0x18] sm:$0xff]
  %v710 = vld [vmem:[%s4 + $0x20] sm:$0xff]
  %v711 = vld [vmem:[%s4 + $0x28] sm:$0xff]
  %v712 = vld [vmem:[%s4 + $0x30] sm:$0xff]
  %v713 = vld [vmem:[%s4 + $0x38] sm:$0xff]
  %v714 = vld [vmem:[%s4 + $0x40] sm:$0xff]
  %v715 = vld [vmem:[%s4 + $0x48] sm:$0xff]
  %v716 = vld [vmem:[%s4 + $0x50] sm:$0xff]
  %v717 = vld [vmem:[%s4 + $0x58] sm:$0xff]
  %v718 = vld [vmem:[%s4 + $0x60] sm:$0xff]
  %v719 = vld [vmem:[%s4 + $0x68] sm:$0xff]
  %v720 = vld [vmem:[%s4 + $0x70] sm:$0xff]
  %v721 = vld [vmem:[%s4 + $0x78] sm:$0xff]
  %v722 = vld [vmem:[%s4 + $0x80] sm:$0xff]
  %v723 = vld [vmem:[%s4 + $0x88] sm:$0xff]
  %v724 = vld [vmem:[%s4 + $0x90] sm:$0xff]
  %v725 = vld [vmem:[%s4 + $0x98] sm:$0xff]
  %v726 = vld [vmem:[%s4 + $0xa0] sm:$0xff]
  %v727 = vld [vmem:[%s4 + $0xa8] sm:$0xff]
  %v728 = vld [vmem:[%s4 + $0xb0] sm:$0xff]
  %v729 = vld [vmem:[%s4 + $0xb8] sm:$0xff]
  %v730 = vld [vmem:[%s4 + $0xc0] sm:$0xff]
  %v731 = vld [vmem:[%s4 + $0xc8] sm:$0xff]
  %v732 = vld [vmem:[%s4 + $0xd0] sm:$0xff]
  %v733 = vld [vmem:[%s4 + $0xd8] sm:$0xff]
  %v734 = vld [vmem:[%s4 + $0xe0] sm:$0xff]
  %v735 = vld [vmem:[%s4 + $0xe8] sm:$0xff]
  %v736 = vld [vmem:[%s4 + $0xf0] sm:$0xff]
  %v737 = vld [vmem:[%s4 + $0xf8] sm:$0xff]
  %v738 = vld [vmem:[%s4 + $0x100] sm:$0xff]
  %v739 = vld [vmem:[%s4 + $0x108] sm:$0xff]
  %v740 = vld [vmem:[%s4 + $0x110] sm:$0xff]
  %v741 = vld [vmem:[%s4 + $0x118] sm:$0xff]
  %v742 = vld [vmem:[%s4 + $0x120] sm:$0xff]
  %v743 = vld [vmem:[%s4 + $0x128] sm:$0xff]
  %v744 = vld [vmem:[%s4 + $0x130] sm:$0xff]
  %v745 = vld [vmem:[%s4 + $0x138] sm:$0xff]
  %v746 = vld [vmem:[%s4 + $0x140] sm:$0xff]
  %v747 = vld [vmem:[%s4 + $0x148] sm:$0xff]
  %v748 = vld [vmem:[%s4 + $0x150] sm:$0xff]
  %v749 = vld [vmem:[%s4 + $0x158] sm:$0xff]
  %v750 = vld [vmem:[%s4 + $0x160] sm:$0xff]
  %v751 = vld [vmem:[%s4 + $0x168] sm:$0xff]
  %v752 = vld [vmem:[%s4 + $0x170] sm:$0xff]
  %v753 = vld [vmem:[%s4 + $0x178] sm:$0xff]
  %v754 = vld [vmem:[%s4 + $0x180] sm:$0xff]
  %v755 = vld [vmem:[%s4 + $0x188] sm:$0xff]
  %v756 = vld [vmem:[%s4 + $0x190] sm:$0xff]
  %v757 = vld [vmem:[%s4 + $0x198] sm:$0xff]
  %v758 = vld [vmem:[%s4 + $0x1a0] sm:$0xff]
  %v759 = vld [vmem:[%s4 + $0x1a8] sm:$0xff]
  %v760 = vld [vmem:[%s4 + $0x1b0] sm:$0xff]
  %v761 = vld [vmem:[%s4 + $0x1b8] sm:$0xff]
  %v762 = vld [vmem:[%s4 + $0x1c0] sm:$0xff]
  %v763 = vld [vmem:[%s4 + $0x1c8] sm:$0xff]
  %v764 = vld [vmem:[%s4 + $0x1d0] sm:$0xff]
  %v765 = vld [vmem:[%s4 + $0x1d8] sm:$0xff]
  %v766 = vld [vmem:[%s4 + $0x1e0] sm:$0xff]
  %v767 = vld [vmem:[%s4 + $0x1e8] sm:$0xff]
  %v768 = vld [vmem:[%s4 + $0x1f0] sm:$0xff]
  %v769 = vld [vmem:[%s4 + $0x1f8] sm:$0xff]
  %v770 = vld [vmem:[%s5] sm:$0xf]
  %v772 = vlaneseq
  %v773 = vshrl.u32 %v772, 7
  %v774 = vsub.s32 0, %v773
  %v775 = vrot.slane %v770, %v774
  %v776 = vlaneseq
  %v777 = vshrl.u32 %v776, 7
  %v778 = vsub.s32 1, %v777
  %v779 = vrot.slane %v770, %v778
  %v780 = vlaneseq
  %v781 = vshrl.u32 %v780, 7
  %v782 = vsub.s32 2, %v781
  %v783 = vrot.slane %v770, %v782
  %v784 = vlaneseq
  %v785 = vshrl.u32 %v784, 7
  %v786 = vsub.s32 3, %v785
  %v787 = vrot.slane %v770, %v786
  %v856 = vunpack.c.l.b16 %v706
  %v857 = vunpack.c.h.b16 %v706
  %v858 = vunpack.c.l.b16 %v707
  %v859 = vunpack.c.h.b16 %v707
  %v860 = vunpack.c.l.b16 %v708
  %v861 = vunpack.c.h.b16 %v708
  %v862 = vunpack.c.l.b16 %v709
  %v863 = vunpack.c.h.b16 %v709
  %v864 = vunpack.c.l.b16 %v710
  %v865 = vunpack.c.h.b16 %v710
  %v866 = vunpack.c.l.b16 %v711
  %v867 = vunpack.c.h.b16 %v711
  %v868 = vunpack.c.l.b16 %v712
  %v869 = vunpack.c.h.b16 %v712
  %v870 = vunpack.c.l.b16 %v713
  %v871 = vunpack.c.h.b16 %v713
  %v872 = vunpack.c.l.b16 %v714
  %v873 = vunpack.c.h.b16 %v714
  %v874 = vunpack.c.l.b16 %v715
  %v875 = vunpack.c.h.b16 %v715
  %v876 = vunpack.c.l.b16 %v716
  %v877 = vunpack.c.h.b16 %v716
  %v878 = vunpack.c.l.b16 %v717
  %v879 = vunpack.c.h.b16 %v717
  %v880 = vunpack.c.l.b16 %v718
  %v881 = vunpack.c.h.b16 %v718
  %v882 = vunpack.c.l.b16 %v719
  %v883 = vunpack.c.h.b16 %v719
  %v884 = vunpack.c.l.b16 %v720
  %v885 = vunpack.c.h.b16 %v720
  %v886 = vunpack.c.l.b16 %v721
  %v887 = vunpack.c.h.b16 %v721
  %v888 = vunpack.c.l.b16 %v722
  %v889 = vunpack.c.h.b16 %v722
  %v890 = vunpack.c.l.b16 %v723
  %v891 = vunpack.c.h.b16 %v723
  %v892 = vunpack.c.l.b16 %v724
  %v893 = vunpack.c.h.b16 %v724
  %v894 = vunpack.c.l.b16 %v725
  %v895 = vunpack.c.h.b16 %v725
  %v896 = vunpack.c.l.b16 %v726
  %v897 = vunpack.c.h.b16 %v726
  %v898 = vunpack.c.l.b16 %v727
  %v899 = vunpack.c.h.b16 %v727
  %v900 = vunpack.c.l.b16 %v728
  %v901 = vunpack.c.h.b16 %v728
  %v902 = vunpack.c.l.b16 %v729
  %v903 = vunpack.c.h.b16 %v729
  %v904 = vunpack.c.l.b16 %v730
  %v905 = vunpack.c.h.b16 %v730
  %v906 = vunpack.c.l.b16 %v731
  %v907 = vunpack.c.h.b16 %v731
  %v908 = vunpack.c.l.b16 %v732
  %v909 = vunpack.c.h.b16 %v732
  %v910 = vunpack.c.l.b16 %v733
  %v911 = vunpack.c.h.b16 %v733
  %v912 = vunpack.c.l.b16 %v734
  %v913 = vunpack.c.h.b16 %v734
  %v914 = vunpack.c.l.b16 %v735
  %v915 = vunpack.c.h.b16 %v735
  %v916 = vunpack.c.l.b16 %v736
  %v917 = vunpack.c.h.b16 %v736
  %v918 = vunpack.c.l.b16 %v737
  %v919 = vunpack.c.h.b16 %v737
  %v920 = vunpack.c.l.b16 %v738
  %v921 = vunpack.c.h.b16 %v738
  %v922 = vunpack.c.l.b16 %v739
  %v923 = vunpack.c.h.b16 %v739
  %v924 = vunpack.c.l.b16 %v740
  %v925 = vunpack.c.h.b16 %v740
  %v926 = vunpack.c.l.b16 %v741
  %v927 = vunpack.c.h.b16 %v741
  %v928 = vunpack.c.l.b16 %v742
  %v929 = vunpack.c.h.b16 %v742
  %v930 = vunpack.c.l.b16 %v743
  %v931 = vunpack.c.h.b16 %v743
  %v932 = vunpack.c.l.b16 %v744
  %v933 = vunpack.c.h.b16 %v744
  %v934 = vunpack.c.l.b16 %v745
  %v935 = vunpack.c.h.b16 %v745
  %v936 = vunpack.c.l.b16 %v746
  %v937 = vunpack.c.h.b16 %v746
  %v938 = vunpack.c.l.b16 %v747
  %v939 = vunpack.c.h.b16 %v747
  %v940 = vunpack.c.l.b16 %v748
  %v941 = vunpack.c.h.b16 %v748
  %v942 = vunpack.c.l.b16 %v749
  %v943 = vunpack.c.h.b16 %v749
  %v944 = vunpack.c.l.b16 %v750
  %v945 = vunpack.c.h.b16 %v750
  %v946 = vunpack.c.l.b16 %v751
  %v947 = vunpack.c.h.b16 %v751
  %v948 = vunpack.c.l.b16 %v752
  %v949 = vunpack.c.h.b16 %v752
  %v950 = vunpack.c.l.b16 %v753
  %v951 = vunpack.c.h.b16 %v753
  %v952 = vunpack.c.l.b16 %v754
  %v953 = vunpack.c.h.b16 %v754
  %v954 = vunpack.c.l.b16 %v755
  %v955 = vunpack.c.h.b16 %v755
  %v956 = vunpack.c.l.b16 %v756
  %v957 = vunpack.c.h.b16 %v756
  %v958 = vunpack.c.l.b16 %v757
  %v959 = vunpack.c.h.b16 %v757
  %v960 = vunpack.c.l.b16 %v758
  %v961 = vunpack.c.h.b16 %v758
  %v962 = vunpack.c.l.b16 %v759
  %v963 = vunpack.c.h.b16 %v759
  %v964 = vunpack.c.l.b16 %v760
  %v965 = vunpack.c.h.b16 %v760
  %v966 = vunpack.c.l.b16 %v761
  %v967 = vunpack.c.h.b16 %v761
  %v968 = vunpack.c.l.b16 %v762
  %v969 = vunpack.c.h.b16 %v762
  %v970 = vunpack.c.l.b16 %v763
  %v971 = vunpack.c.h.b16 %v763
  %v972 = vunpack.c.l.b16 %v764
  %v973 = vunpack.c.h.b16 %v764
  %v974 = vunpack.c.l.b16 %v765
  %v975 = vunpack.c.h.b16 %v765
  %v976 = vunpack.c.l.b16 %v766
  %v977 = vunpack.c.h.b16 %v766
  %v978 = vunpack.c.l.b16 %v767
  %v979 = vunpack.c.h.b16 %v767
  %v980 = vunpack.c.l.b16 %v768
  %v981 = vunpack.c.h.b16 %v768
  %v982 = vunpack.c.l.b16 %v769
  %v983 = vunpack.c.h.b16 %v769
  %v984 = vpack.c.b16 %v860, %v856
  %v985 = vpack.c.b16 %v861, %v857
  %v986 = vpack.c.b16 %v862, %v858
  %v987 = vpack.c.b16 %v863, %v859
  %v988 = vpack.c.b16 %v868, %v864
  %v989 = vpack.c.b16 %v869, %v865
  %v990 = vpack.c.b16 %v870, %v866
  %v991 = vpack.c.b16 %v871, %v867
  %v992 = vpack.c.b16 %v876, %v872
  %v993 = vpack.c.b16 %v877, %v873
  %v994 = vpack.c.b16 %v878, %v874
  %v995 = vpack.c.b16 %v879, %v875
  %v996 = vpack.c.b16 %v884, %v880
  %v997 = vpack.c.b16 %v885, %v881
  %v998 = vpack.c.b16 %v886, %v882
  %v999 = vpack.c.b16 %v887, %v883
  %v1000 = vpack.c.b16 %v892, %v888
  %v1001 = vpack.c.b16 %v893, %v889
  %v1002 = vpack.c.b16 %v894, %v890
  %v1003 = vpack.c.b16 %v895, %v891
  %v1004 = vpack.c.b16 %v900, %v896
  %v1005 = vpack.c.b16 %v901, %v897
  %v1006 = vpack.c.b16 %v902, %v898
  %v1007 = vpack.c.b16 %v903, %v899
  %v1008 = vpack.c.b16 %v908, %v904
  %v1009 = vpack.c.b16 %v909, %v905
  %v1010 = vpack.c.b16 %v910, %v906
  %v1011 = vpack.c.b16 %v911, %v907
  %v1012 = vpack.c.b16 %v916, %v912
  %v1013 = vpack.c.b16 %v917, %v913
  %v1014 = vpack.c.b16 %v918, %v914
  %v1015 = vpack.c.b16 %v919, %v915
  %v1016 = vpack.c.b16 %v924, %v920
  %v1017 = vpack.c.b16 %v925, %v921
  %v1018 = vpack.c.b16 %v926, %v922
  %v1019 = vpack.c.b16 %v927, %v923
  %v1020 = vpack.c.b16 %v932, %v928
  %v1021 = vpack.c.b16 %v933, %v929
  %v1022 = vpack.c.b16 %v934, %v930
  %v1023 = vpack.c.b16 %v935, %v931
  %v1024 = vpack.c.b16 %v940, %v936
  %v1025 = vpack.c.b16 %v941, %v937
  %v1026 = vpack.c.b16 %v942, %v938
  %v1027 = vpack.c.b16 %v943, %v939
  %v1028 = vpack.c.b16 %v948, %v944
  %v1029 = vpack.c.b16 %v949, %v945
  %v1030 = vpack.c.b16 %v950, %v946
  %v1031 = vpack.c.b16 %v951, %v947
  %v1032 = vpack.c.b16 %v956, %v952
  %v1033 = vpack.c.b16 %v957, %v953
  %v1034 = vpack.c.b16 %v958, %v954
  %v1035 = vpack.c.b16 %v959, %v955
  %v1036 = vpack.c.b16 %v964, %v960
  %v1037 = vpack.c.b16 %v965, %v961
  %v1038 = vpack.c.b16 %v966, %v962
  %v1039 = vpack.c.b16 %v967, %v963
  %v1040 = vpack.c.b16 %v972, %v968
  %v1041 = vpack.c.b16 %v973, %v969
  %v1042 = vpack.c.b16 %v974, %v970
  %v1043 = vpack.c.b16 %v975, %v971
  %v1044 = vpack.c.b16 %v980, %v976
  %v1045 = vpack.c.b16 %v981, %v977
  %v1046 = vpack.c.b16 %v982, %v978
  %v1047 = vpack.c.b16 %v983, %v979
  %1112 = vmatprep.subr.bf16.mxu0 %v985
  %1113 = vmatpush1.bf16.msra.mxu0 %v984
  %1114 = vmatprep.subr.bf16.mxu0 %v989
  %1115 = vmatpush1.bf16.msra.mxu0 %v988
  %1116 = vmatprep.subr.bf16.mxu0 %v993
  %1117 = vmatpush1.bf16.msra.mxu0 %v992
  %1118 = vmatprep.subr.bf16.mxu0 %v997
  %1119 = vmatpush1.bf16.msra.mxu0 %v996
  %1120 = vmatprep.subr.bf16.mxu0 %v1001
  %1121 = vmatpush1.bf16.msra.mxu0 %v1000
  %1122 = vmatprep.subr.bf16.mxu0 %v1005
  %1123 = vmatpush1.bf16.msra.mxu0 %v1004
  %1124 = vmatprep.subr.bf16.mxu0 %v1009
  %1125 = vmatpush1.bf16.msra.mxu0 %v1008
  %1126 = vmatprep.subr.bf16.mxu0 %v1013
  %1127 = vmatpush1.bf16.msra.mxu0 %v1012
  %1128 = vmatprep.subr.bf16.mxu0 %v1017
  %1129 = vmatpush1.bf16.msra.mxu0 %v1016
  %1130 = vmatprep.subr.bf16.mxu0 %v1021
  %1131 = vmatpush1.bf16.msra.mxu0 %v1020
  %1132 = vmatprep.subr.bf16.mxu0 %v1025
  %1133 = vmatpush1.bf16.msra.mxu0 %v1024
  %1134 = vmatprep.subr.bf16.mxu0 %v1029
  %1135 = vmatpush1.bf16.msra.mxu0 %v1028
  %1136 = vmatprep.subr.bf16.mxu0 %v1033
  %1137 = vmatpush1.bf16.msra.mxu0 %v1032
  %1138 = vmatprep.subr.bf16.mxu0 %v1037
  %1139 = vmatpush1.bf16.msra.mxu0 %v1036
  %1140 = vmatprep.subr.bf16.mxu0 %v1041
  %1141 = vmatpush1.bf16.msra.mxu0 %v1040
  %1142 = vmatprep.subr.bf16.mxu0 %v1045
  %1143 = vmatpush1.bf16.msra.mxu0 %v1044
  %1144 = vmatprep.mubr.bf16.mxu0 %v705
  %1145 = vmatmul.mubr.bf16.gmra.mrb[0].mxu0 %v704
  %v1146 = vpop.f32.mrb[0].mxu0
  %v1147 = vadd.f32 %v775, %v1146
  %v1148 = vpop.f32.mrb[0].mxu0
  %v1149 = vadd.f32 %v779, %v1148
  %v1150 = vpop.f32.mrb[0].mxu0
  %v1151 = vpop.f32.mrb[0].mxu0
  %1152 = vdwg.mxu0
  %1153 = vmatprep.subr.bf16.mxu0 %v987
  %1154 = vmatpush1.bf16.msra.mxu0 %v986
  %1155 = vmatprep.subr.bf16.mxu0 %v991
  %1156 = vmatpush1.bf16.msra.mxu0 %v990
  %1157 = vmatprep.subr.bf16.mxu0 %v995
  %1158 = vmatpush1.bf16.msra.mxu0 %v994
  %1159 = vmatprep.subr.bf16.mxu0 %v999
  %1160 = vmatpush1.bf16.msra.mxu0 %v998
  %1161 = vmatprep.subr.bf16.mxu0 %v1003
  %1162 = vmatpush1.bf16.msra.mxu0 %v1002
  %1163 = vmatprep.subr.bf16.mxu0 %v1007
  %1164 = vmatpush1.bf16.msra.mxu0 %v1006
  %1165 = vmatprep.subr.bf16.mxu0 %v1011
  %1166 = vmatpush1.bf16.msra.mxu0 %v1010
  %1167 = vmatprep.subr.bf16.mxu0 %v1015
  %1168 = vmatpush1.bf16.msra.mxu0 %v1014
  %1169 = vmatprep.subr.bf16.mxu0 %v1019
  %1170 = vmatpush1.bf16.msra.mxu0 %v1018
  %1171 = vmatprep.subr.bf16.mxu0 %v1023
  %1172 = vmatpush1.bf16.msra.mxu0 %v1022
  %1173 = vmatprep.subr.bf16.mxu0 %v1027
  %1174 = vmatpush1.bf16.msra.mxu0 %v1026
  %1175 = vmatprep.subr.bf16.mxu0 %v1031
  %1176 = vmatpush1.bf16.msra.mxu0 %v1030
  %1177 = vmatprep.subr.bf16.mxu0 %v1035
  %1178 = vmatpush1.bf16.msra.mxu0 %v1034
  %1179 = vmatprep.subr.bf16.mxu0 %v1039
  %1180 = vmatpush1.bf16.msra.mxu0 %v1038
  %1181 = vmatprep.subr.bf16.mxu0 %v1043
  %1182 = vmatpush1.bf16.msra.mxu0 %v1042
  %1183 = vmatprep.subr.bf16.mxu0 %v1047
  %1184 = vmatpush1.bf16.msra.mxu0 %v1046
  %1185 = vmatprep.mubr.bf16.mxu0 %v705
  %1186 = vmatmul.mubr.bf16.gmra.mrb[0].mxu0 %v704
  %v1187 = vpop.f32.mrb[0].mxu0
  %v1188 = vadd.f32 %v783, %v1187
  %v1189 = vpop.f32.mrb[0].mxu0
  %v1190 = vadd.f32 %v787, %v1189
  %v1191 = vpop.f32.mrb[0].mxu0
  %v1192 = vpop.f32.mrb[0].mxu0
  %1193 = vdwg.mxu0
  %v1194 = vxor.u32 %v1147, 2147483648
  %v1195 = vmul.f32 %v1194, 1.442695
  %v1196 = vpow.pop %v1195
  %v1197 = vadd.f32 %v1196, 1.0
  %v1198 = vrcp.pop %v1197
  %v1199 = vmul.f32 1.0, %v1198
  %v1200 = vxor.u32 %v1149, 2147483648
  %v1201 = vmul.f32 %v1200, 1.442695
  %v1202 = vpow.pop %v1201
  %v1203 = vadd.f32 %v1202, 1.0
  %v1204 = vrcp.pop %v1203
  %v1205 = vmul.f32 1.0, %v1204
  %v1206 = vtanh.pop %v1188
  %v1207 = vxor.u32 %v1190, 2147483648
  %v1208 = vmul.f32 %v1207, 1.442695
  %v1209 = vpow.pop %v1208
  %v1210 = vadd.f32 %v1209, 1.0
  %v1211 = vrcp.pop %v1210
  %v1212 = vmul.f32 1.0, %v1211
  %v1213 = vmul.f32 %v1205, 0.0
  %v1214 = vmul.f32 %v1199, %v1206
  %v1215 = vadd.f32 %v1213, %v1214
  %v1216 = vtanh.pop %v1215
  %v1217 = vmul.f32 %v1212, %v1216
  %1218 = vmatprep.subr.bf16.mxu0 %v531
  %1219 = vmatpush1.bf16.msra.mxu0 %v530
  %1220 = vmatprep.subr.bf16.mxu0 %v535
  %1221 = vmatpush1.bf16.msra.mxu0 %v534
  %1222 = vmatprep.subr.bf16.mxu0 %v539
  %1223 = vmatpush1.bf16.msra.mxu0 %v538
  %1224 = vmatprep.subr.bf16.mxu0 %v543
  %1225 = vmatpush1.bf16.msra.mxu0 %v542
  %1226 = vmatprep.subr.bf16.mxu0 %v547
  %1227 = vmatpush1.bf16.msra.mxu0 %v546
  %1228 = vmatprep.subr.bf16.mxu0 %v551
  %1229 = vmatpush1.bf16.msra.mxu0 %v550
  %1230 = vmatprep.subr.bf16.mxu0 %v555
  %1231 = vmatpush1.bf16.msra.mxu0 %v554
  %1232 = vmatprep.subr.bf16.mxu0 %v559
  %1233 = vmatpush1.bf16.msra.mxu0 %v558
  %1234 = vmatprep.subr.bf16.mxu0 0
  %1235 = vmatpush1.bf16.msra.mxu0 0
  %1236 = vmatprep.subr.bf16.mxu0 0
  %1237 = vmatpush1.bf16.msra.mxu0 0
  %1238 = vmatprep.subr.bf16.mxu0 0
  %1239 = vmatpush1.bf16.msra.mxu0 0
  %1240 = vmatprep.subr.bf16.mxu0 0
  %1241 = vmatpush1.bf16.msra.mxu0 0
  %1242 = vmatprep.subr.bf16.mxu0 0
  %1243 = vmatpush1.bf16.msra.mxu0 0
  %1244 = vmatprep.subr.bf16.mxu0 0
  %1245 = vmatpush1.bf16.msra.mxu0 0
  %1246 = vmatprep.subr.bf16.mxu0 0
  %1247 = vmatpush1.bf16.msra.mxu0 0
  %1248 = vmatprep.subr.bf16.mxu0 0
  %1249 = vmatpush1.bf16.msra.mxu0 0
  %1250 = vmatprep.mubr.bf16.mxu0 0
  %1251 = vmatmul.mubr.bf16.gmra.mrb[0].mxu0 %v704
  %v1252 = vpop.f32.mrb[0].mxu0
  %v1253 = vadd.f32 0.0, %v1252
  %v1254 = vpop.f32.mrb[0].mxu0
  %v1255 = vadd.f32 0.0, %v1254
  %v1256 = vpop.f32.mrb[0].mxu0
  %v1257 = vpop.f32.mrb[0].mxu0
  %1258 = vdwg.mxu0
  %1259 = vmatprep.subr.bf16.mxu0 %v533
  %1260 = vmatpush1.bf16.msra.mxu0 %v532
  %1261 = vmatprep.subr.bf16.mxu0 %v537
  %1262 = vmatpush1.bf16.msra.mxu0 %v536
  %1263 = vmatprep.subr.bf16.mxu0 %v541
  %1264 = vmatpush1.bf16.msra.mxu0 %v540
  %1265 = vmatprep.subr.bf16.mxu0 %v545
  %1266 = vmatpush1.bf16.msra.mxu0 %v544
  %1267 = vmatprep.subr.bf16.mxu0 %v549
  %1268 = vmatpush1.bf16.msra.mxu0 %v548
  %1269 = vmatprep.subr.bf16.mxu0 %v553
  %1270 = vmatpush1.bf16.msra.mxu0 %v552
  %1271 = vmatprep.subr.bf16.mxu0 %v557
  %1272 = vmatpush1.bf16.msra.mxu0 %v556
  %1273 = vmatprep.subr.bf16.mxu0 %v561
  %1274 = vmatpush1.bf16.msra.mxu0 %v560
  %1275 = vmatprep.subr.bf16.mxu0 0
  %1276 = vmatpush1.bf16.msra.mxu0 0
  %1277 = vmatprep.subr.bf16.mxu0 0
  %1278 = vmatpush1.bf16.msra.mxu0 0
  %1279 = vmatprep.subr.bf16.mxu0 0
  %1280 = vmatpush1.bf16.msra.mxu0 0
  %1281 = vmatprep.subr.bf16.mxu0 0
  %1282 = vmatpush1.bf16.msra.mxu0 0
  %1283 = vmatprep.subr.bf16.mxu0 0
  %1284 = vmatpush1.bf16.msra.mxu0 0
  %1285 = vmatprep.subr.bf16.mxu0 0
  %1286 = vmatpush1.bf16.msra.mxu0 0
  %1287 = vmatprep.subr.bf16.mxu0 0
  %1288 = vmatpush1.bf16.msra.mxu0 0
  %1289 = vmatprep.subr.bf16.mxu0 0
  %1290 = vmatpush1.bf16.msra.mxu0 0
  %1291 = vmatprep.mubr.bf16.mxu0 0
  %1292 = vmatmul.mubr.bf16.gmra.mrb[0].mxu0 %v704
  %v1293 = vpop.f32.mrb[0].mxu0
  %v1294 = vadd.f32 0.0, %v1293
  %v1295 = vpop.f32.mrb[0].mxu0
  %v1296 = vadd.f32 0.0, %v1295
  %v1297 = vpop.f32.mrb[0].mxu0
  %v1298 = vpop.f32.mrb[0].mxu0
  %1299 = vdwg.mxu0
  %v1300 = vadd.f32 %v295, %v1253
  %v1301 = vadd.f32 %v297, %v1255
  %v1302 = vadd.f32 %v368, %v1294
  %v1303 = vadd.f32 %v370, %v1296
  %v1304 = vxor.u32 %v1300, 2147483648
  %v1305 = vmul.f32 %v1304, 1.442695
  %v1306 = vpow.pop %v1305
  %v1307 = vadd.f32 %v1306, 1.0
  %v1308 = vrcp.pop %v1307
  %v1309 = vmul.f32 1.0, %v1308
  %v1310 = vxor.u32 %v1301, 2147483648
  %v1311 = vmul.f32 %v1310, 1.442695
  %v1312 = vpow.pop %v1311
  %v1313 = vadd.f32 %v1312, 1.0
  %v1314 = vrcp.pop %v1313
  %v1315 = vmul.f32 1.0, %v1314
  %v1316 = vtanh.pop %v1302
  %v1317 = vxor.u32 %v1303, 2147483648
  %v1318 = vmul.f32 %v1317, 1.442695
  %v1319 = vpow.pop %v1318
  %v1320 = vadd.f32 %v1319, 1.0
  %v1321 = vrcp.pop %v1320
  %v1322 = vmul.f32 1.0, %v1321
  %v1323 = vmul.f32 %v1315, %v701
  %v1324 = vmul.f32 %v1309, %v1316
  %v1325 = vadd.f32 %v1323, %v1324
  %v1326 = vtanh.pop %v1325
  %v1327 = vmul.f32 %v1322, %v1326
  %v1328 = vpack.c.bf16 %v1327, %v1327
  %v1329 = vpack.c.bf16 %v1217, %v1217
  %1330 = vmatprep.subr.bf16.mxu0 %v985
  %1331 = vmatpush1.bf16.msra.mxu0 %v984
  %1332 = vmatprep.subr.bf16.mxu0 %v989
  %1333 = vmatpush1.bf16.msra.mxu0 %v988
  %1334 = vmatprep.subr.bf16.mxu0 %v993
  %1335 = vmatpush1.bf16.msra.mxu0 %v992
  %1336 = vmatprep.subr.bf16.mxu0 %v997
  %1337 = vmatpush1.bf16.msra.mxu0 %v996
  %1338 = vmatprep.subr.bf16.mxu0 %v1001
  %1339 = vmatpush1.bf16.msra.mxu0 %v1000
  %1340 = vmatprep.subr.bf16.mxu0 %v1005
  %1341 = vmatpush1.bf16.msra.mxu0 %v1004
  %1342 = vmatprep.subr.bf16.mxu0 %v1009
  %1343 = vmatpush1.bf16.msra.mxu0 %v1008
  %1344 = vmatprep.subr.bf16.mxu0 %v1013
  %1345 = vmatpush1.bf16.msra.mxu0 %v1012
  %1346 = vmatprep.subr.bf16.mxu0 %v1017
  %1347 = vmatpush1.bf16.msra.mxu0 %v1016
  %1348 = vmatprep.subr.bf16.mxu0 %v1021
  %1349 = vmatpush1.bf16.msra.mxu0 %v1020
  %1350 = vmatprep.subr.bf16.mxu0 %v1025
  %1351 = vmatpush1.bf16.msra.mxu0 %v1024
  %1352 = vmatprep.subr.bf16.mxu0 %v1029
  %1353 = vmatpush1.bf16.msra.mxu0 %v1028
  %1354 = vmatprep.subr.bf16.mxu0 %v1033
  %1355 = vmatpush1.bf16.msra.mxu0 %v1032
  %1356 = vmatprep.subr.bf16.mxu0 %v1037
  %1357 = vmatpush1.bf16.msra.mxu0 %v1036
  %1358 = vmatprep.subr.bf16.mxu0 %v1041
  %1359 = vmatpush1.bf16.msra.mxu0 %v1040
  %1360 = vmatprep.subr.bf16.mxu0 %v1045
  %1361 = vmatpush1.bf16.msra.mxu0 %v1044
  %1362 = vmatprep.mubr.bf16.mxu0 %v1329
  %1363 = vmatmul.mubr.bf16.gmra.mrb[0].mxu0 %v1328
  %v1364 = vpop.f32.mrb[0].mxu0
  %v1365 = vadd.f32 %v775, %v1364
  %v1366 = vpop.f32.mrb[0].mxu0
  %v1367 = vadd.f32 %v779, %v1366
  %v1368 = vpop.f32.mrb[0].mxu0
  %v1369 = vpop.f32.mrb[0].mxu0
  %1370 = vdwg.mxu0
  %1371 = vmatprep.subr.bf16.mxu0 %v987
  %1372 = vmatpush1.bf16.msra.mxu0 %v986
  %1373 = vmatprep.subr.bf16.mxu0 %v991
  %1374 = vmatpush1.bf16.msra.mxu0 %v990
  %1375 = vmatprep.subr.bf16.mxu0 %v995
  %1376 = vmatpush1.bf16.msra.mxu0 %v994
  %1377 = vmatprep.subr.bf16.mxu0 %v999
  %1378 = vmatpush1.bf16.msra.mxu0 %v998
  %1379 = vmatprep.subr.bf16.mxu0 %v1003
  %1380 = vmatpush1.bf16.msra.mxu0 %v1002
  %1381 = vmatprep.subr.bf16.mxu0 %v1007
  %1382 = vmatpush1.bf16.msra.mxu0 %v1006
  %1383 = vmatprep.subr.bf16.mxu0 %v1011
  %1384 = vmatpush1.bf16.msra.mxu0 %v1010
  %1385 = vmatprep.subr.bf16.mxu0 %v1015
  %1386 = vmatpush1.bf16.msra.mxu0 %v1014
  %1387 = vmatprep.subr.bf16.mxu0 %v1019
  %1388 = vmatpush1.bf16.msra.mxu0 %v1018
  %1389 = vmatprep.subr.bf16.mxu0 %v1023
  %1390 = vmatpush1.bf16.msra.mxu0 %v1022
  %1391 = vmatprep.subr.bf16.mxu0 %v1027
  %1392 = vmatpush1.bf16.msra.mxu0 %v1026
  %1393 = vmatprep.subr.bf16.mxu0 %v1031
  %1394 = vmatpush1.bf16.msra.mxu0 %v1030
  %1395 = vmatprep.subr.bf16.mxu0 %v1035
  %1396 = vmatpush1.bf16.msra.mxu0 %v1034
  %1397 = vmatprep.subr.bf16.mxu0 %v1039
  %1398 = vmatpush1.bf16.msra.mxu0 %v1038
  %1399 = vmatprep.subr.bf16.mxu0 %v1043
  %1400 = vmatpush1.bf16.msra.mxu0 %v1042
  %1401 = vmatprep.subr.bf16.mxu0 %v1047
  %1402 = vmatpush1.bf16.msra.mxu0 %v1046
  %1403 = vmatprep.mubr.bf16.mxu0 %v1329
  %1404 = vmatmul.mubr.bf16.gmra.mrb[0].mxu0 %v1328
  %v1405 = vpop.f32.mrb[0].mxu0
  %v1406 = vadd.f32 %v783, %v1405
  %v1407 = vpop.f32.mrb[0].mxu0
  %v1408 = vadd.f32 %v787, %v1407
  %v1409 = vpop.f32.mrb[0].mxu0
  %v1410 = vpop.f32.mrb[0].mxu0
  %1411 = vdwg.mxu0
  %v1412 = vxor.u32 %v1365, 2147483648
  %v1413 = vmul.f32 %v1412, 1.442695
  %v1414 = vpow.pop %v1413
  %v1415 = vadd.f32 %v1414, 1.0
  %v1416 = vrcp.pop %v1415
  %v1417 = vmul.f32 1.0, %v1416
  %v1418 = vxor.u32 %v1367, 2147483648
  %v1419 = vmul.f32 %v1418, 1.442695
  %v1420 = vpow.pop %v1419
  %v1421 = vadd.f32 %v1420, 1.0
  %v1422 = vrcp.pop %v1421
  %v1423 = vmul.f32 1.0, %v1422
  %v1424 = vtanh.pop %v1406
  %v1425 = vxor.u32 %v1408, 2147483648
  %v1426 = vmul.f32 %v1425, 1.442695
  %v1427 = vpow.pop %v1426
  %v1428 = vadd.f32 %v1427, 1.0
  %v1429 = vrcp.pop %v1428
  %v1430 = vmul.f32 1.0, %v1429
  %v1431 = vmul.f32 %v1423, %v1215
  %v1432 = vmul.f32 %v1417, %v1424
  %v1433 = vadd.f32 %v1431, %v1432
  %v1434 = vtanh.pop %v1433
  %v1435 = vmul.f32 %v1430, %v1434
  %1436 = vmatprep.subr.bf16.mxu0 %v531
  %1437 = vmatpush1.bf16.msra.mxu0 %v530
  %1438 = vmatprep.subr.bf16.mxu0 %v535
  %1439 = vmatpush1.bf16.msra.mxu0 %v534
  %1440 = vmatprep.subr.bf16.mxu0 %v539
  %1441 = vmatpush1.bf16.msra.mxu0 %v538
  %1442 = vmatprep.subr.bf16.mxu0 %v543
  %1443 = vmatpush1.bf16.msra.mxu0 %v542
  %1444 = vmatprep.subr.bf16.mxu0 %v547
  %1445 = vmatpush1.bf16.msra.mxu0 %v546
  %1446 = vmatprep.subr.bf16.mxu0 %v551
  %1447 = vmatpush1.bf16.msra.mxu0 %v550
  %1448 = vmatprep.subr.bf16.mxu0 %v555
  %1449 = vmatpush1.bf16.msra.mxu0 %v554
  %1450 = vmatprep.subr.bf16.mxu0 %v559
  %1451 = vmatpush1.bf16.msra.mxu0 %v558
  %1452 = vmatprep.subr.bf16.mxu0 0
  %1453 = vmatpush1.bf16.msra.mxu0 0
  %1454 = vmatprep.subr.bf16.mxu0 0
  %1455 = vmatpush1.bf16.msra.mxu0 0
  %1456 = vmatprep.subr.bf16.mxu0 0
  %1457 = vmatpush1.bf16.msra.mxu0 0
  %1458 = vmatprep.subr.bf16.mxu0 0
  %1459 = vmatpush1.bf16.msra.mxu0 0
  %1460 = vmatprep.subr.bf16.mxu0 0
  %1461 = vmatpush1.bf16.msra.mxu0 0
  %1462 = vmatprep.subr.bf16.mxu0 0
  %1463 = vmatpush1.bf16.msra.mxu0 0
  %1464 = vmatprep.subr.bf16.mxu0 0
  %1465 = vmatpush1.bf16.msra.mxu0 0
  %1466 = vmatprep.subr.bf16.mxu0 0
  %1467 = vmatpush1.bf16.msra.mxu0 0
  %1468 = vmatprep.mubr.bf16.mxu0 0
  %1469 = vmatmul.mubr.bf16.gmra.mrb[0].mxu0 %v1328
  %v1470 = vpop.f32.mrb[0].mxu0
  %v1471 = vadd.f32 0.0, %v1470
  %v1472 = vpop.f32.mrb[0].mxu0
  %v1473 = vadd.f32 0.0, %v1472
  %v1474 = vpop.f32.mrb[0].mxu0
  %v1475 = vpop.f32.mrb[0].mxu0
  %1476 = vdwg.mxu0
  %1477 = vmatprep.subr.bf16.mxu0 %v533
  %1478 = vmatpush1.bf16.msra.mxu0 %v532
  %1479 = vmatprep.subr.bf16.mxu0 %v537
  %1480 = vmatpush1.bf16.msra.mxu0 %v536
  %1481 = vmatprep.subr.bf16.mxu0 %v541
  %1482 = vmatpush1.bf16.msra.mxu0 %v540
  %1483 = vmatprep.subr.bf16.mxu0 %v545
  %1484 = vmatpush1.bf16.msra.mxu0 %v544
  %1485 = vmatprep.subr.bf16.mxu0 %v549
  %1486 = vmatpush1.bf16.msra.mxu0 %v548
  %1487 = vmatprep.subr.bf16.mxu0 %v553
  %1488 = vmatpush1.bf16.msra.mxu0 %v552
  %1489 = vmatprep.subr.bf16.mxu0 %v557
  %1490 = vmatpush1.bf16.msra.mxu0 %v556
  %1491 = vmatprep.subr.bf16.mxu0 %v561
  %1492 = vmatpush1.bf16.msra.mxu0 %v560
  %1493 = vmatprep.subr.bf16.mxu0 0
  %1494 = vmatpush1.bf16.msra.mxu0 0
  %1495 = vmatprep.subr.bf16.mxu0 0
  %1496 = vmatpush1.bf16.msra.mxu0 0
  %1497 = vmatprep.subr.bf16.mxu0 0
  %1498 = vmatpush1.bf16.msra.mxu0 0
  %1499 = vmatprep.subr.bf16.mxu0 0
  %1500 = vmatpush1.bf16.msra.mxu0 0
  %1501 = vmatprep.subr.bf16.mxu0 0
  %1502 = vmatpush1.bf16.msra.mxu0 0
  %1503 = vmatprep.subr.bf16.mxu0 0
  %1504 = vmatpush1.bf16.msra.mxu0 0
  %1505 = vmatprep.subr.bf16.mxu0 0
  %1506 = vmatpush1.bf16.msra.mxu0 0
  %1507 = vmatprep.subr.bf16.mxu0 0
  %1508 = vmatpush1.bf16.msra.mxu0 0
  %1509 = vmatprep.mubr.bf16.mxu0 0
  %1510 = vmatmul.mubr.bf16.gmra.mrb[0].mxu0 %v1328
  %v1511 = vpop.f32.mrb[0].mxu0
  %v1512 = vadd.f32 0.0, %v1511
  %v1513 = vpop.f32.mrb[0].mxu0
  %v1514 = vadd.f32 0.0, %v1513
  %v1515 = vpop.f32.mrb[0].mxu0
  %v1516 = vpop.f32.mrb[0].mxu0
  %1517 = vdwg.mxu0
  %v1518 = vadd.f32 %v301, %v1471
  %v1519 = vadd.f32 %v303, %v1473
  %v1520 = vadd.f32 %v374, %v1512
  %v1521 = vadd.f32 %v376, %v1514
  %v1522 = vxor.u32 %v1518, 2147483648
  %v1523 = vmul.f32 %v1522, 1.442695
  %v1524 = vpow.pop %v1523
  %v1525 = vadd.f32 %v1524, 1.0
  %v1526 = vrcp.pop %v1525
  %v1527 = vmul.f32 1.0, %v1526
  %v1528 = vxor.u32 %v1519, 2147483648
  %v1529 = vmul.f32 %v1528, 1.442695
  %v1530 = vpow.pop %v1529
  %v1531 = vadd.f32 %v1530, 1.0
  %v1532 = vrcp.pop %v1531
  %v1533 = vmul.f32 1.0, %v1532
  %v1534 = vtanh.pop %v1520
  %v1535 = vxor.u32 %v1521, 2147483648
  %v1536 = vmul.f32 %v1535, 1.442695
  %v1537 = vpow.pop %v1536
  %v1538 = vadd.f32 %v1537, 1.0
  %v1539 = vrcp.pop %v1538
  %v1540 = vmul.f32 1.0, %v1539
  %v1541 = vmul.f32 %v1533, %v1325
  %v1542 = vmul.f32 %v1527, %v1534
  %v1543 = vadd.f32 %v1541, %v1542
  %v1544 = vtanh.pop %v1543
  %v1545 = vmul.f32 %v1540, %v1544
  %v1546 = vpack.c.bf16 %v1545, %v1545
  %v1547 = vpack.c.bf16 %v1435, %v1435
  %1548 = vmatprep.subr.bf16.mxu0 %v985
  %1549 = vmatpush1.bf16.msra.mxu0 %v984
  %1550 = vmatprep.subr.bf16.mxu0 %v989
  %1551 = vmatpush1.bf16.msra.mxu0 %v988
  %1552 = vmatprep.subr.bf16.mxu0 %v993
  %1553 = vmatpush1.bf16.msra.mxu0 %v992
  %1554 = vmatprep.subr.bf16.mxu0 %v997
  %1555 = vmatpush1.bf16.msra.mxu0 %v996
  %1556 = vmatprep.subr.bf16.mxu0 %v1001
  %1557 = vmatpush1.bf16.msra.mxu0 %v1000
  %1558 = vmatprep.subr.bf16.mxu0 %v1005
  %1559 = vmatpush1.bf16.msra.mxu0 %v1004
  %1560 = vmatprep.subr.bf16.mxu0 %v1009
  %1561 = vmatpush1.bf16.msra.mxu0 %v1008
  %1562 = vmatprep.subr.bf16.mxu0 %v1013
  %1563 = vmatpush1.bf16.msra.mxu0 %v1012
  %1564 = vmatprep.subr.bf16.mxu0 %v1017
  %1565 = vmatpush1.bf16.msra.mxu0 %v1016
  %1566 = vmatprep.subr.bf16.mxu0 %v1021
  %1567 = vmatpush1.bf16.msra.mxu0 %v1020
  %1568 = vmatprep.subr.bf16.mxu0 %v1025
  %1569 = vmatpush1.bf16.msra.mxu0 %v1024
  %1570 = vmatprep.subr.bf16.mxu0 %v1029
  %1571 = vmatpush1.bf16.msra.mxu0 %v1028
  %1572 = vmatprep.subr.bf16.mxu0 %v1033
  %1573 = vmatpush1.bf16.msra.mxu0 %v1032
  %1574 = vmatprep.subr.bf16.mxu0 %v1037
  %1575 = vmatpush1.bf16.msra.mxu0 %v1036
  %1576 = vmatprep.subr.bf16.mxu0 %v1041
  %1577 = vmatpush1.bf16.msra.mxu0 %v1040
  %1578 = vmatprep.subr.bf16.mxu0 %v1045
  %1579 = vmatpush1.bf16.msra.mxu0 %v1044
  %1580 = vmatprep.mubr.bf16.mxu0 %v1547
  %1581 = vmatmul.mubr.bf16.gmra.mrb[0].mxu0 %v1546
  %v1582 = vpop.f32.mrb[0].mxu0
  %v1583 = vadd.f32 %v775, %v1582
  %v1584 = vpop.f32.mrb[0].mxu0
  %v1585 = vadd.f32 %v779, %v1584
  %v1586 = vpop.f32.mrb[0].mxu0
  %v1587 = vpop.f32.mrb[0].mxu0
  %1588 = vdwg.mxu0
  %1589 = vmatprep.subr.bf16.mxu0 %v987
  %1590 = vmatpush1.bf16.msra.mxu0 %v986
  %1591 = vmatprep.subr.bf16.mxu0 %v991
  %1592 = vmatpush1.bf16.msra.mxu0 %v990
  %1593 = vmatprep.subr.bf16.mxu0 %v995
  %1594 = vmatpush1.bf16.msra.mxu0 %v994
  %1595 = vmatprep.subr.bf16.mxu0 %v999
  %1596 = vmatpush1.bf16.msra.mxu0 %v998
  %1597 = vmatprep.subr.bf16.mxu0 %v1003
  %1598 = vmatpush1.bf16.msra.mxu0 %v1002
  %1599 = vmatprep.subr.bf16.mxu0 %v1007
  %1600 = vmatpush1.bf16.msra.mxu0 %v1006
  %1601 = vmatprep.subr.bf16.mxu0 %v1011
  %1602 = vmatpush1.bf16.msra.mxu0 %v1010
  %1603 = vmatprep.subr.bf16.mxu0 %v1015
  %1604 = vmatpush1.bf16.msra.mxu0 %v1014
  %1605 = vmatprep.subr.bf16.mxu0 %v1019
  %1606 = vmatpush1.bf16.msra.mxu0 %v1018
  %1607 = vmatprep.subr.bf16.mxu0 %v1023
  %1608 = vmatpush1.bf16.msra.mxu0 %v1022
  %1609 = vmatprep.subr.bf16.mxu0 %v1027
  %1610 = vmatpush1.bf16.msra.mxu0 %v1026
  %1611 = vmatprep.subr.bf16.mxu0 %v1031
  %1612 = vmatpush1.bf16.msra.mxu0 %v1030
  %1613 = vmatprep.subr.bf16.mxu0 %v1035
  %1614 = vmatpush1.bf16.msra.mxu0 %v1034
  %1615 = vmatprep.subr.bf16.mxu0 %v1039
  %1616 = vmatpush1.bf16.msra.mxu0 %v1038
  %1617 = vmatprep.subr.bf16.mxu0 %v1043
  %1618 = vmatpush1.bf16.msra.mxu0 %v1042
  %1619 = vmatprep.subr.bf16.mxu0 %v1047
  %1620 = vmatpush1.bf16.msra.mxu0 %v1046
  %1621 = vmatprep.mubr.bf16.mxu0 %v1547
  %1622 = vmatmul.mubr.bf16.gmra.mrb[0].mxu0 %v1546
  %v1623 = vpop.f32.mrb[0].mxu0
  %v1624 = vadd.f32 %v783, %v1623
  %v1625 = vpop.f32.mrb[0].mxu0
  %v1626 = vadd.f32 %v787, %v1625
  %v1627 = vpop.f32.mrb[0].mxu0
  %v1628 = vpop.f32.mrb[0].mxu0
  %1629 = vdwg.mxu0
  %v1630 = vxor.u32 %v1583, 2147483648
  %v1631 = vmul.f32 %v1630, 1.442695
  %v1632 = vpow.pop %v1631
  %v1633 = vadd.f32 %v1632, 1.0
  %v1634 = vrcp.pop %v1633
  %v1635 = vmul.f32 1.0, %v1634
  %v1636 = vxor.u32 %v1585, 2147483648
  %v1637 = vmul.f32 %v1636, 1.442695
  %v1638 = vpow.pop %v1637
  %v1639 = vadd.f32 %v1638, 1.0
  %v1640 = vrcp.pop %v1639
  %v1641 = vmul.f32 1.0, %v1640
  %v1642 = vtanh.pop %v1624
  %v1643 = vxor.u32 %v1626, 2147483648
  %v1644 = vmul.f32 %v1643, 1.442695
  %v1645 = vpow.pop %v1644
  %v1646 = vadd.f32 %v1645, 1.0
  %v1647 = vrcp.pop %v1646
  %v1648 = vmul.f32 1.0, %v1647
  %v1649 = vmul.f32 %v1641, %v1433
  %v1650 = vmul.f32 %v1635, %v1642
  %v1651 = vadd.f32 %v1649, %v1650
  %v1652 = vtanh.pop %v1651
  %v1653 = vmul.f32 %v1648, %v1652
  %1654 = vmatprep.subr.bf16.mxu0 %v531
  %1655 = vmatpush1.bf16.msra.mxu0 %v530
  %1656 = vmatprep.subr.bf16.mxu0 %v535
  %1657 = vmatpush1.bf16.msra.mxu0 %v534
  %1658 = vmatprep.subr.bf16.mxu0 %v539
  %1659 = vmatpush1.bf16.msra.mxu0 %v538
  %1660 = vmatprep.subr.bf16.mxu0 %v543
  %1661 = vmatpush1.bf16.msra.mxu0 %v542
  %1662 = vmatprep.subr.bf16.mxu0 %v547
  %1663 = vmatpush1.bf16.msra.mxu0 %v546
  %1664 = vmatprep.subr.bf16.mxu0 %v551
  %1665 = vmatpush1.bf16.msra.mxu0 %v550
  %1666 = vmatprep.subr.bf16.mxu0 %v555
  %1667 = vmatpush1.bf16.msra.mxu0 %v554
  %1668 = vmatprep.subr.bf16.mxu0 %v559
  %1669 = vmatpush1.bf16.msra.mxu0 %v558
  %1670 = vmatprep.subr.bf16.mxu0 0
  %1671 = vmatpush1.bf16.msra.mxu0 0
  %1672 = vmatprep.subr.bf16.mxu0 0
  %1673 = vmatpush1.bf16.msra.mxu0 0
  %1674 = vmatprep.subr.bf16.mxu0 0
  %1675 = vmatpush1.bf16.msra.mxu0 0
  %1676 = vmatprep.subr.bf16.mxu0 0
  %1677 = vmatpush1.bf16.msra.mxu0 0
  %1678 = vmatprep.subr.bf16.mxu0 0
  %1679 = vmatpush1.bf16.msra.mxu0 0
  %1680 = vmatprep.subr.bf16.mxu0 0
  %1681 = vmatpush1.bf16.msra.mxu0 0
  %1682 = vmatprep.subr.bf16.mxu0 0
  %1683 = vmatpush1.bf16.msra.mxu0 0
  %1684 = vmatprep.subr.bf16.mxu0 0
  %1685 = vmatpush1.bf16.msra.mxu0 0
  %1686 = vmatprep.mubr.bf16.mxu0 0
  %1687 = vmatmul.mubr.bf16.gmra.mrb[0].mxu0 %v1546
  %v1688 = vpop.f32.mrb[0].mxu0
  %v1689 = vadd.f32 0.0, %v1688
  %v1690 = vpop.f32.mrb[0].mxu0
  %v1691 = vadd.f32 0.0, %v1690
  %v1692 = vpop.f32.mrb[0].mxu0
  %v1693 = vpop.f32.mrb[0].mxu0
  %1694 = vdwg.mxu0
  %1695 = vmatprep.subr.bf16.mxu0 %v533
  %1696 = vmatpush1.bf16.msra.mxu0 %v532
  %1697 = vmatprep.subr.bf16.mxu0 %v537
  %1698 = vmatpush1.bf16.msra.mxu0 %v536
  %1699 = vmatprep.subr.bf16.mxu0 %v541
  %1700 = vmatpush1.bf16.msra.mxu0 %v540
  %1701 = vmatprep.subr.bf16.mxu0 %v545
  %1702 = vmatpush1.bf16.msra.mxu0 %v544
  %1703 = vmatprep.subr.bf16.mxu0 %v549
  %1704 = vmatpush1.bf16.msra.mxu0 %v548
  %1705 = vmatprep.subr.bf16.mxu0 %v553
  %1706 = vmatpush1.bf16.msra.mxu0 %v552
  %1707 = vmatprep.subr.bf16.mxu0 %v557
  %1708 = vmatpush1.bf16.msra.mxu0 %v556
  %1709 = vmatprep.subr.bf16.mxu0 %v561
  %1710 = vmatpush1.bf16.msra.mxu0 %v560
  %1711 = vmatprep.subr.bf16.mxu0 0
  %1712 = vmatpush1.bf16.msra.mxu0 0
  %1713 = vmatprep.subr.bf16.mxu0 0
  %1714 = vmatpush1.bf16.msra.mxu0 0
  %1715 = vmatprep.subr.bf16.mxu0 0
  %1716 = vmatpush1.bf16.msra.mxu0 0
  %1717 = vmatprep.subr.bf16.mxu0 0
  %1718 = vmatpush1.bf16.msra.mxu0 0
  %1719 = vmatprep.subr.bf16.mxu0 0
  %1720 = vmatpush1.bf16.msra.mxu0 0
  %1721 = vmatprep.subr.bf16.mxu0 0
  %1722 = vmatpush1.bf16.msra.mxu0 0
  %1723 = vmatprep.subr.bf16.mxu0 0
  %1724 = vmatpush1.bf16.msra.mxu0 0
  %1725 = vmatprep.subr.bf16.mxu0 0
  %1726 = vmatpush1.bf16.msra.mxu0 0
  %1727 = vmatprep.mubr.bf16.mxu0 0
  %1728 = vmatmul.mubr.bf16.gmra.mrb[0].mxu0 %v1546
  %v1729 = vpop.f32.mrb[0].mxu0
  %v1730 = vadd.f32 0.0, %v1729
  %v1731 = vpop.f32.mrb[0].mxu0
  %v1732 = vadd.f32 0.0, %v1731
  %v1733 = vpop.f32.mrb[0].mxu0
  %v1734 = vpop.f32.mrb[0].mxu0
  %1735 = vdwg.mxu0
  %v1736 = vadd.f32 %v305, %v1689
  %v1737 = vadd.f32 %v307, %v1691
  %v1738 = vadd.f32 %v378, %v1730
  %v1739 = vadd.f32 %v380, %v1732
  %v1740 = vxor.u32 %v1736, 2147483648
  %v1741 = vmul.f32 %v1740, 1.442695
  %v1742 = vpow.pop %v1741
  %v1743 = vadd.f32 %v1742, 1.0
  %v1744 = vrcp.pop %v1743
  %v1745 = vmul.f32 1.0, %v1744
  %v1746 = vxor.u32 %v1737, 2147483648
  %v1747 = vmul.f32 %v1746, 1.442695
  %v1748 = vpow.pop %v1747
  %v1749 = vadd.f32 %v1748, 1.0
  %v1750 = vrcp.pop %v1749
  %v1751 = vmul.f32 1.0, %v1750
  %v1752 = vtanh.pop %v1738
  %v1753 = vxor.u32 %v1739, 2147483648
  %v1754 = vmul.f32 %v1753, 1.442695
  %v1755 = vpow.pop %v1754
  %v1756 = vadd.f32 %v1755, 1.0
  %v1757 = vrcp.pop %v1756
  %v1758 = vmul.f32 1.0, %v1757
  %v1759 = vmul.f32 %v1751, %v1543
  %v1760 = vmul.f32 %v1745, %v1752
  %v1761 = vadd.f32 %v1759, %v1760
  %v1762 = vtanh.pop %v1761
  %v1763 = vmul.f32 %v1758, %v1762
  %v1764 = vpack.c.bf16 %v1763, %v1763
  %v1765 = vpack.c.bf16 %v1653, %v1653
  %1766 = vmatprep.subr.bf16.mxu0 %v985
  %1767 = vmatpush1.bf16.msra.mxu0 %v984
  %1768 = vmatprep.subr.bf16.mxu0 %v989
  %1769 = vmatpush1.bf16.msra.mxu0 %v988
  %1770 = vmatprep.subr.bf16.mxu0 %v993
  %1771 = vmatpush1.bf16.msra.mxu0 %v992
  %1772 = vmatprep.subr.bf16.mxu0 %v997
  %1773 = vmatpush1.bf16.msra.mxu0 %v996
  %1774 = vmatprep.subr.bf16.mxu0 %v1001
  %1775 = vmatpush1.bf16.msra.mxu0 %v1000
  %1776 = vmatprep.subr.bf16.mxu0 %v1005
  %1777 = vmatpush1.bf16.msra.mxu0 %v1004
  %1778 = vmatprep.subr.bf16.mxu0 %v1009
  %1779 = vmatpush1.bf16.msra.mxu0 %v1008
  %1780 = vmatprep.subr.bf16.mxu0 %v1013
  %1781 = vmatpush1.bf16.msra.mxu0 %v1012
  %1782 = vmatprep.subr.bf16.mxu0 %v1017
  %1783 = vmatpush1.bf16.msra.mxu0 %v1016
  %1784 = vmatprep.subr.bf16.mxu0 %v1021
  %1785 = vmatpush1.bf16.msra.mxu0 %v1020
  %1786 = vmatprep.subr.bf16.mxu0 %v1025
  %1787 = vmatpush1.bf16.msra.mxu0 %v1024
  %1788 = vmatprep.subr.bf16.mxu0 %v1029
  %1789 = vmatpush1.bf16.msra.mxu0 %v1028
  %1790 = vmatprep.subr.bf16.mxu0 %v1033
  %1791 = vmatpush1.bf16.msra.mxu0 %v1032
  %1792 = vmatprep.subr.bf16.mxu0 %v1037
  %1793 = vmatpush1.bf16.msra.mxu0 %v1036
  %1794 = vmatprep.subr.bf16.mxu0 %v1041
  %1795 = vmatpush1.bf16.msra.mxu0 %v1040
  %1796 = vmatprep.subr.bf16.mxu0 %v1045
  %1797 = vmatpush1.bf16.msra.mxu0 %v1044
  %1798 = vmatprep.mubr.bf16.mxu0 %v1765
  %1799 = vmatmul.mubr.bf16.gmra.mrb[0].mxu0 %v1764
  %v1800 = vpop.f32.mrb[0].mxu0
  %v1801 = vadd.f32 %v775, %v1800
  %v1802 = vpop.f32.mrb[0].mxu0
  %v1803 = vadd.f32 %v779, %v1802
  %v1804 = vpop.f32.mrb[0].mxu0
  %v1805 = vpop.f32.mrb[0].mxu0
  %1806 = vdwg.mxu0
  %1807 = vmatprep.subr.bf16.mxu0 %v987
  %1808 = vmatpush1.bf16.msra.mxu0 %v986
  %1809 = vmatprep.subr.bf16.mxu0 %v991
  %1810 = vmatpush1.bf16.msra.mxu0 %v990
  %1811 = vmatprep.subr.bf16.mxu0 %v995
  %1812 = vmatpush1.bf16.msra.mxu0 %v994
  %1813 = vmatprep.subr.bf16.mxu0 %v999
  %1814 = vmatpush1.bf16.msra.mxu0 %v998
  %1815 = vmatprep.subr.bf16.mxu0 %v1003
  %1816 = vmatpush1.bf16.msra.mxu0 %v1002
  %1817 = vmatprep.subr.bf16.mxu0 %v1007
  %1818 = vmatpush1.bf16.msra.mxu0 %v1006
  %1819 = vmatprep.subr.bf16.mxu0 %v1011
  %1820 = vmatpush1.bf16.msra.mxu0 %v1010
  %1821 = vmatprep.subr.bf16.mxu0 %v1015
  %1822 = vmatpush1.bf16.msra.mxu0 %v1014
  %1823 = vmatprep.subr.bf16.mxu0 %v1019
  %1824 = vmatpush1.bf16.msra.mxu0 %v1018
  %1825 = vmatprep.subr.bf16.mxu0 %v1023
  %1826 = vmatpush1.bf16.msra.mxu0 %v1022
  %1827 = vmatprep.subr.bf16.mxu0 %v1027
  %1828 = vmatpush1.bf16.msra.mxu0 %v1026
  %1829 = vmatprep.subr.bf16.mxu0 %v1031
  %1830 = vmatpush1.bf16.msra.mxu0 %v1030
  %1831 = vmatprep.subr.bf16.mxu0 %v1035
  %1832 = vmatpush1.bf16.msra.mxu0 %v1034
  %1833 = vmatprep.subr.bf16.mxu0 %v1039
  %1834 = vmatpush1.bf16.msra.mxu0 %v1038
  %1835 = vmatprep.subr.bf16.mxu0 %v1043
  %1836 = vmatpush1.bf16.msra.mxu0 %v1042
  %1837 = vmatprep.subr.bf16.mxu0 %v1047
  %1838 = vmatpush1.bf16.msra.mxu0 %v1046
  %1839 = vmatprep.mubr.bf16.mxu0 %v1765
  %1840 = vmatmul.mubr.bf16.gmra.mrb[0].mxu0 %v1764
  %v1841 = vpop.f32.mrb[0].mxu0
  %v1842 = vadd.f32 %v783, %v1841
  %v1843 = vpop.f32.mrb[0].mxu0
  %v1844 = vadd.f32 %v787, %v1843
  %v1845 = vpop.f32.mrb[0].mxu0
  %v1846 = vpop.f32.mrb[0].mxu0
  %1847 = vdwg.mxu0
  %v1848 = vxor.u32 %v1801, 2147483648
  %v1849 = vmul.f32 %v1848, 1.442695
  %v1850 = vpow.pop %v1849
  %v1851 = vadd.f32 %v1850, 1.0
  %v1852 = vrcp.pop %v1851
  %v1853 = vmul.f32 1.0, %v1852
  %v1854 = vxor.u32 %v1803, 2147483648
  %v1855 = vmul.f32 %v1854, 1.442695
  %v1856 = vpow.pop %v1855
  %v1857 = vadd.f32 %v1856, 1.0
  %v1858 = vrcp.pop %v1857
  %v1859 = vmul.f32 1.0, %v1858
  %v1860 = vtanh.pop %v1842
  %v1861 = vxor.u32 %v1844, 2147483648
  %v1862 = vmul.f32 %v1861, 1.442695
  %v1863 = vpow.pop %v1862
  %v1864 = vadd.f32 %v1863, 1.0
  %v1865 = vrcp.pop %v1864
  %v1866 = vmul.f32 1.0, %v1865
  %v1867 = vmul.f32 %v1859, %v1651
  %v1868 = vmul.f32 %v1853, %v1860
  %v1869 = vadd.f32 %v1867, %v1868
  %v1870 = vtanh.pop %v1869
  %v1871 = vmul.f32 %v1866, %v1870
  %1872 = vmatprep.subr.bf16.mxu0 %v531
  %1873 = vmatpush1.bf16.msra.mxu0 %v530
  %1874 = vmatprep.subr.bf16.mxu0 %v535
  %1875 = vmatpush1.bf16.msra.mxu0 %v534
  %1876 = vmatprep.subr.bf16.mxu0 %v539
  %1877 = vmatpush1.bf16.msra.mxu0 %v538
  %1878 = vmatprep.subr.bf16.mxu0 %v543
  %1879 = vmatpush1.bf16.msra.mxu0 %v542
  %1880 = vmatprep.subr.bf16.mxu0 %v547
  %1881 = vmatpush1.bf16.msra.mxu0 %v546
  %1882 = vmatprep.subr.bf16.mxu0 %v551
  %1883 = vmatpush1.bf16.msra.mxu0 %v550
  %1884 = vmatprep.subr.bf16.mxu0 %v555
  %1885 = vmatpush1.bf16.msra.mxu0 %v554
  %1886 = vmatprep.subr.bf16.mxu0 %v559
  %1887 = vmatpush1.bf16.msra.mxu0 %v558
  %1888 = vmatprep.subr.bf16.mxu0 0
  %1889 = vmatpush1.bf16.msra.mxu0 0
  %1890 = vmatprep.subr.bf16.mxu0 0
  %1891 = vmatpush1.bf16.msra.mxu0 0
  %1892 = vmatprep.subr.bf16.mxu0 0
  %1893 = vmatpush1.bf16.msra.mxu0 0
  %1894 = vmatprep.subr.bf16.mxu0 0
  %1895 = vmatpush1.bf16.msra.mxu0 0
  %1896 = vmatprep.subr.bf16.mxu0 0
  %1897 = vmatpush1.bf16.msra.mxu0 0
  %1898 = vmatprep.subr.bf16.mxu0 0
  %1899 = vmatpush1.bf16.msra.mxu0 0
  %1900 = vmatprep.subr.bf16.mxu0 0
  %1901 = vmatpush1.bf16.msra.mxu0 0
  %1902 = vmatprep.subr.bf16.mxu0 0
  %1903 = vmatpush1.bf16.msra.mxu0 0
  %1904 = vmatprep.mubr.bf16.mxu0 0
  %1905 = vmatmul.mubr.bf16.gmra.mrb[0].mxu0 %v1764
  %v1906 = vpop.f32.mrb[0].mxu0
  %v1907 = vadd.f32 0.0, %v1906
  %v1908 = vpop.f32.mrb[0].mxu0
  %v1909 = vadd.f32 0.0, %v1908
  %v1910 = vpop.f32.mrb[0].mxu0
  %v1911 = vpop.f32.mrb[0].mxu0
  %1912 = vdwg.mxu0
  %1913 = vmatprep.subr.bf16.mxu0 %v533
  %1914 = vmatpush1.bf16.msra.mxu0 %v532
  %1915 = vmatprep.subr.bf16.mxu0 %v537
  %1916 = vmatpush1.bf16.msra.mxu0 %v536
  %1917 = vmatprep.subr.bf16.mxu0 %v541
  %1918 = vmatpush1.bf16.msra.mxu0 %v540
  %1919 = vmatprep.subr.bf16.mxu0 %v545
  %1920 = vmatpush1.bf16.msra.mxu0 %v544
  %1921 = vmatprep.subr.bf16.mxu0 %v549
  %1922 = vmatpush1.bf16.msra.mxu0 %v548
  %1923 = vmatprep.subr.bf16.mxu0 %v553
  %1924 = vmatpush1.bf16.msra.mxu0 %v552
  %1925 = vmatprep.subr.bf16.mxu0 %v557
  %1926 = vmatpush1.bf16.msra.mxu0 %v556
  %1927 = vmatprep.subr.bf16.mxu0 %v561
  %1928 = vmatpush1.bf16.msra.mxu0 %v560
  %1929 = vmatprep.subr.bf16.mxu0 0
  %1930 = vmatpush1.bf16.msra.mxu0 0
  %1931 = vmatprep.subr.bf16.mxu0 0
  %1932 = vmatpush1.bf16.msra.mxu0 0
  %1933 = vmatprep.subr.bf16.mxu0 0
  %1934 = vmatpush1.bf16.msra.mxu0 0
  %1935 = vmatprep.subr.bf16.mxu0 0
  %1936 = vmatpush1.bf16.msra.mxu0 0
  %1937 = vmatprep.subr.bf16.mxu0 0
  %1938 = vmatpush1.bf16.msra.mxu0 0
  %1939 = vmatprep.subr.bf16.mxu0 0
  %1940 = vmatpush1.bf16.msra.mxu0 0
  %1941 = vmatprep.subr.bf16.mxu0 0
  %1942 = vmatpush1.bf16.msra.mxu0 0
  %1943 = vmatprep.subr.bf16.mxu0 0
  %1944 = vmatpush1.bf16.msra.mxu0 0
  %1945 = vmatprep.mubr.bf16.mxu0 0
  %1946 = vmatmul.mubr.bf16.gmra.mrb[0].mxu0 %v1764
  %v1947 = vpop.f32.mrb[0].mxu0
  %v1948 = vadd.f32 0.0, %v1947
  %v1949 = vpop.f32.mrb[0].mxu0
  %v1950 = vadd.f32 0.0, %v1949
  %v1951 = vpop.f32.mrb[0].mxu0
  %v1952 = vpop.f32.mrb[0].mxu0
  %1953 = vdwg.mxu0
  %v1954 = vadd.f32 %v311, %v1907
  %v1955 = vadd.f32 %v313, %v1909
  %v1956 = vadd.f32 %v384, %v1948
  %v1957 = vadd.f32 %v386, %v1950
  %v1958 = vxor.u32 %v1954, 2147483648
  %v1959 = vmul.f32 %v1958, 1.442695
  %v1960 = vpow.pop %v1959
  %v1961 = vadd.f32 %v1960, 1.0
  %v1962 = vrcp.pop %v1961
  %v1963 = vmul.f32 1.0, %v1962
  %v1964 = vxor.u32 %v1955, 2147483648
  %v1965 = vmul.f32 %v1964, 1.442695
  %v1966 = vpow.pop %v1965
  %v1967 = vadd.f32 %v1966, 1.0
  %v1968 = vrcp.pop %v1967
  %v1969 = vmul.f32 1.0, %v1968
  %v1970 = vtanh.pop %v1956
  %v1971 = vxor.u32 %v1957, 2147483648
  %v1972 = vmul.f32 %v1971, 1.442695
  %v1973 = vpow.pop %v1972
  %v1974 = vadd.f32 %v1973, 1.0
  %v1975 = vrcp.pop %v1974
  %v1976 = vmul.f32 1.0, %v1975
  %v1977 = vmul.f32 %v1969, %v1761
  %v1978 = vmul.f32 %v1963, %v1970
  %v1979 = vadd.f32 %v1977, %v1978
  %v1980 = vtanh.pop %v1979
  %v1981 = vmul.f32 %v1976, %v1980
  %v1982 = vpack.c.bf16 %v1981, %v1981
  %v1983 = vpack.c.bf16 %v1871, %v1871
  %1984 = vmatprep.subr.bf16.mxu0 %v985
  %1985 = vmatpush1.bf16.msra.mxu0 %v984
  %1986 = vmatprep.subr.bf16.mxu0 %v989
  %1987 = vmatpush1.bf16.msra.mxu0 %v988
  %1988 = vmatprep.subr.bf16.mxu0 %v993
  %1989 = vmatpush1.bf16.msra.mxu0 %v992
  %1990 = vmatprep.subr.bf16.mxu0 %v997
  %1991 = vmatpush1.bf16.msra.mxu0 %v996
  %1992 = vmatprep.subr.bf16.mxu0 %v1001
  %1993 = vmatpush1.bf16.msra.mxu0 %v1000
  %1994 = vmatprep.subr.bf16.mxu0 %v1005
  %1995 = vmatpush1.bf16.msra.mxu0 %v1004
  %1996 = vmatprep.subr.bf16.mxu0 %v1009
  %1997 = vmatpush1.bf16.msra.mxu0 %v1008
  %1998 = vmatprep.subr.bf16.mxu0 %v1013
  %1999 = vmatpush1.bf16.msra.mxu0 %v1012
  %2000 = vmatprep.subr.bf16.mxu0 %v1017
  %2001 = vmatpush1.bf16.msra.mxu0 %v1016
  %2002 = vmatprep.subr.bf16.mxu0 %v1021
  %2003 = vmatpush1.bf16.msra.mxu0 %v1020
  %2004 = vmatprep.subr.bf16.mxu0 %v1025
  %2005 = vmatpush1.bf16.msra.mxu0 %v1024
  %2006 = vmatprep.subr.bf16.mxu0 %v1029
  %2007 = vmatpush1.bf16.msra.mxu0 %v1028
  %2008 = vmatprep.subr.bf16.mxu0 %v1033
  %2009 = vmatpush1.bf16.msra.mxu0 %v1032
  %2010 = vmatprep.subr.bf16.mxu0 %v1037
  %2011 = vmatpush1.bf16.msra.mxu0 %v1036
  %2012 = vmatprep.subr.bf16.mxu0 %v1041
  %2013 = vmatpush1.bf16.msra.mxu0 %v1040
  %2014 = vmatprep.subr.bf16.mxu0 %v1045
  %2015 = vmatpush1.bf16.msra.mxu0 %v1044
  %2016 = vmatprep.mubr.bf16.mxu0 %v1983
  %2017 = vmatmul.mubr.bf16.gmra.mrb[0].mxu0 %v1982
  %v2018 = vpop.f32.mrb[0].mxu0
  %v2019 = vadd.f32 %v775, %v2018
  %v2020 = vpop.f32.mrb[0].mxu0
  %v2021 = vadd.f32 %v779, %v2020
  %v2022 = vpop.f32.mrb[0].mxu0
  %v2023 = vpop.f32.mrb[0].mxu0
  %2024 = vdwg.mxu0
  %2025 = vmatprep.subr.bf16.mxu0 %v987
  %2026 = vmatpush1.bf16.msra.mxu0 %v986
  %2027 = vmatprep.subr.bf16.mxu0 %v991
  %2028 = vmatpush1.bf16.msra.mxu0 %v990
  %2029 = vmatprep.subr.bf16.mxu0 %v995
  %2030 = vmatpush1.bf16.msra.mxu0 %v994
  %2031 = vmatprep.subr.bf16.mxu0 %v999
  %2032 = vmatpush1.bf16.msra.mxu0 %v998
  %2033 = vmatprep.subr.bf16.mxu0 %v1003
  %2034 = vmatpush1.bf16.msra.mxu0 %v1002
  %2035 = vmatprep.subr.bf16.mxu0 %v1007
  %2036 = vmatpush1.bf16.msra.mxu0 %v1006
  %2037 = vmatprep.subr.bf16.mxu0 %v1011
  %2038 = vmatpush1.bf16.msra.mxu0 %v1010
  %2039 = vmatprep.subr.bf16.mxu0 %v1015
  %2040 = vmatpush1.bf16.msra.mxu0 %v1014
  %2041 = vmatprep.subr.bf16.mxu0 %v1019
  %2042 = vmatpush1.bf16.msra.mxu0 %v1018
  %2043 = vmatprep.subr.bf16.mxu0 %v1023
  %2044 = vmatpush1.bf16.msra.mxu0 %v1022
  %2045 = vmatprep.subr.bf16.mxu0 %v1027
  %2046 = vmatpush1.bf16.msra.mxu0 %v1026
  %2047 = vmatprep.subr.bf16.mxu0 %v1031
  %2048 = vmatpush1.bf16.msra.mxu0 %v1030
  %2049 = vmatprep.subr.bf16.mxu0 %v1035
  %2050 = vmatpush1.bf16.msra.mxu0 %v1034
  %2051 = vmatprep.subr.bf16.mxu0 %v1039
  %2052 = vmatpush1.bf16.msra.mxu0 %v1038
  %2053 = vmatprep.subr.bf16.mxu0 %v1043
  %2054 = vmatpush1.bf16.msra.mxu0 %v1042
  %2055 = vmatprep.subr.bf16.mxu0 %v1047
  %2056 = vmatpush1.bf16.msra.mxu0 %v1046
  %2057 = vmatprep.mubr.bf16.mxu0 %v1983
  %2058 = vmatmul.mubr.bf16.gmra.mrb[0].mxu0 %v1982
  %v2059 = vpop.f32.mrb[0].mxu0
  %v2060 = vadd.f32 %v783, %v2059
  %v2061 = vpop.f32.mrb[0].mxu0
  %v2062 = vadd.f32 %v787, %v2061
  %v2063 = vpop.f32.mrb[0].mxu0
  %v2064 = vpop.f32.mrb[0].mxu0
  %2065 = vdwg.mxu0
  %v2066 = vxor.u32 %v2019, 2147483648
  %v2067 = vmul.f32 %v2066, 1.442695
  %v2068 = vpow.pop %v2067
  %v2069 = vadd.f32 %v2068, 1.0
  %v2070 = vrcp.pop %v2069
  %v2071 = vmul.f32 1.0, %v2070
  %v2072 = vxor.u32 %v2021, 2147483648
  %v2073 = vmul.f32 %v2072, 1.442695
  %v2074 = vpow.pop %v2073
  %v2075 = vadd.f32 %v2074, 1.0
  %v2076 = vrcp.pop %v2075
  %v2077 = vmul.f32 1.0, %v2076
  %v2078 = vtanh.pop %v2060
  %v2079 = vxor.u32 %v2062, 2147483648
  %v2080 = vmul.f32 %v2079, 1.442695
  %v2081 = vpow.pop %v2080
  %v2082 = vadd.f32 %v2081, 1.0
  %v2083 = vrcp.pop %v2082
  %v2084 = vmul.f32 1.0, %v2083
  %v2085 = vmul.f32 %v2077, %v1869
  %v2086 = vmul.f32 %v2071, %v2078
  %v2087 = vadd.f32 %v2085, %v2086
  %v2088 = vtanh.pop %v2087
  %v2089 = vmul.f32 %v2084, %v2088
  %2090 = vmatprep.subr.bf16.mxu0 %v531
  %2091 = vmatpush1.bf16.msra.mxu0 %v530
  %2092 = vmatprep.subr.bf16.mxu0 %v535
  %2093 = vmatpush1.bf16.msra.mxu0 %v534
  %2094 = vmatprep.subr.bf16.mxu0 %v539
  %2095 = vmatpush1.bf16.msra.mxu0 %v538
  %2096 = vmatprep.subr.bf16.mxu0 %v543
  %2097 = vmatpush1.bf16.msra.mxu0 %v542
  %2098 = vmatprep.subr.bf16.mxu0 %v547
  %2099 = vmatpush1.bf16.msra.mxu0 %v546
  %2100 = vmatprep.subr.bf16.mxu0 %v551
  %2101 = vmatpush1.bf16.msra.mxu0 %v550
  %2102 = vmatprep.subr.bf16.mxu0 %v555
  %2103 = vmatpush1.bf16.msra.mxu0 %v554
  %2104 = vmatprep.subr.bf16.mxu0 %v559
  %2105 = vmatpush1.bf16.msra.mxu0 %v558
  %2106 = vmatprep.subr.bf16.mxu0 0
  %2107 = vmatpush1.bf16.msra.mxu0 0
  %2108 = vmatprep.subr.bf16.mxu0 0
  %2109 = vmatpush1.bf16.msra.mxu0 0
  %2110 = vmatprep.subr.bf16.mxu0 0
  %2111 = vmatpush1.bf16.msra.mxu0 0
  %2112 = vmatprep.subr.bf16.mxu0 0
  %2113 = vmatpush1.bf16.msra.mxu0 0
  %2114 = vmatprep.subr.bf16.mxu0 0
  %2115 = vmatpush1.bf16.msra.mxu0 0
  %2116 = vmatprep.subr.bf16.mxu0 0
  %2117 = vmatpush1.bf16.msra.mxu0 0
  %2118 = vmatprep.subr.bf16.mxu0 0
  %2119 = vmatpush1.bf16.msra.mxu0 0
  %2120 = vmatprep.subr.bf16.mxu0 0
  %2121 = vmatpush1.bf16.msra.mxu0 0
  %2122 = vmatprep.mubr.bf16.mxu0 0
  %2123 = vmatmul.mubr.bf16.gmra.mrb[0].mxu0 %v1982
  %v2124 = vpop.f32.mrb[0].mxu0
  %v2125 = vadd.f32 0.0, %v2124
  %v2126 = vpop.f32.mrb[0].mxu0
  %v2127 = vadd.f32 0.0, %v2126
  %v2128 = vpop.f32.mrb[0].mxu0
  %v2129 = vpop.f32.mrb[0].mxu0
  %2130 = vdwg.mxu0
  %2131 = vmatprep.subr.bf16.mxu0 %v533
  %2132 = vmatpush1.bf16.msra.mxu0 %v532
  %2133 = vmatprep.subr.bf16.mxu0 %v537
  %2134 = vmatpush1.bf16.msra.mxu0 %v536
  %2135 = vmatprep.subr.bf16.mxu0 %v541
  %2136 = vmatpush1.bf16.msra.mxu0 %v540
  %2137 = vmatprep.subr.bf16.mxu0 %v545
  %2138 = vmatpush1.bf16.msra.mxu0 %v544
  %2139 = vmatprep.subr.bf16.mxu0 %v549
  %2140 = vmatpush1.bf16.msra.mxu0 %v548
  %2141 = vmatprep.subr.bf16.mxu0 %v553
  %2142 = vmatpush1.bf16.msra.mxu0 %v552
  %2143 = vmatprep.subr.bf16.mxu0 %v557
  %2144 = vmatpush1.bf16.msra.mxu0 %v556
  %2145 = vmatprep.subr.bf16.mxu0 %v561
  %2146 = vmatpush1.bf16.msra.mxu0 %v560
  %2147 = vmatprep.subr.bf16.mxu0 0
  %2148 = vmatpush1.bf16.msra.mxu0 0
  %2149 = vmatprep.subr.bf16.mxu0 0
  %2150 = vmatpush1.bf16.msra.mxu0 0
  %2151 = vmatprep.subr.bf16.mxu0 0
  %2152 = vmatpush1.bf16.msra.mxu0 0
  %2153 = vmatprep.subr.bf16.mxu0 0
  %2154 = vmatpush1.bf16.msra.mxu0 0
  %2155 = vmatprep.subr.bf16.mxu0 0
  %2156 = vmatpush1.bf16.msra.mxu0 0
  %2157 = vmatprep.subr.bf16.mxu0 0
  %2158 = vmatpush1.bf16.msra.mxu0 0
  %2159 = vmatprep.subr.bf16.mxu0 0
  %2160 = vmatpush1.bf16.msra.mxu0 0
  %2161 = vmatprep.subr.bf16.mxu0 0
  %2162 = vmatpush1.bf16.msra.mxu0 0
  %2163 = vmatprep.mubr.bf16.mxu0 0
  %2164 = vmatmul.mubr.bf16.gmra.mrb[0].mxu0 %v1982
  %v2165 = vpop.f32.mrb[0].mxu0
  %v2166 = vadd.f32 0.0, %v2165
  %v2167 = vpop.f32.mrb[0].mxu0
  %v2168 = vadd.f32 0.0, %v2167
  %v2169 = vpop.f32.mrb[0].mxu0
  %v2170 = vpop.f32.mrb[0].mxu0
  %2171 = vdwg.mxu0
  %v2172 = vadd.f32 %v315, %v2125
  %v2173 = vadd.f32 %v317, %v2127
  %v2174 = vadd.f32 %v388, %v2166
  %v2175 = vadd.f32 %v390, %v2168
  %v2176 = vxor.u32 %v2172, 2147483648
  %v2177 = vmul.f32 %v2176, 1.442695
  %v2178 = vpow.pop %v2177
  %v2179 = vadd.f32 %v2178, 1.0
  %v2180 = vrcp.pop %v2179
  %v2181 = vmul.f32 1.0, %v2180
  %v2182 = vxor.u32 %v2173, 2147483648
  %v2183 = vmul.f32 %v2182, 1.442695
  %v2184 = vpow.pop %v2183
  %v2185 = vadd.f32 %v2184, 1.0
  %v2186 = vrcp.pop %v2185
  %v2187 = vmul.f32 1.0, %v2186
  %v2188 = vtanh.pop %v2174
  %v2189 = vxor.u32 %v2175, 2147483648
  %v2190 = vmul.f32 %v2189, 1.442695
  %v2191 = vpow.pop %v2190
  %v2192 = vadd.f32 %v2191, 1.0
  %v2193 = vrcp.pop %v2192
  %v2194 = vmul.f32 1.0, %v2193
  %v2195 = vmul.f32 %v2187, %v1979
  %v2196 = vmul.f32 %v2181, %v2188
  %v2197 = vadd.f32 %v2195, %v2196
  %v2198 = vtanh.pop %v2197
  %v2199 = vmul.f32 %v2194, %v2198
  %v2200 = vpack.c.bf16 %v2199, %v2199
  %v2201 = vpack.c.bf16 %v2089, %v2089
  %2202 = vmatprep.subr.bf16.mxu0 %v985
  %2203 = vmatpush1.bf16.msra.mxu0 %v984
  %2204 = vmatprep.subr.bf16.mxu0 %v989
  %2205 = vmatpush1.bf16.msra.mxu0 %v988
  %2206 = vmatprep.subr.bf16.mxu0 %v993
  %2207 = vmatpush1.bf16.msra.mxu0 %v992
  %2208 = vmatprep.subr.bf16.mxu0 %v997
  %2209 = vmatpush1.bf16.msra.mxu0 %v996
  %2210 = vmatprep.subr.bf16.mxu0 %v1001
  %2211 = vmatpush1.bf16.msra.mxu0 %v1000
  %2212 = vmatprep.subr.bf16.mxu0 %v1005
  %2213 = vmatpush1.bf16.msra.mxu0 %v1004
  %2214 = vmatprep.subr.bf16.mxu0 %v1009
  %2215 = vmatpush1.bf16.msra.mxu0 %v1008
  %2216 = vmatprep.subr.bf16.mxu0 %v1013
  %2217 = vmatpush1.bf16.msra.mxu0 %v1012
  %2218 = vmatprep.subr.bf16.mxu0 %v1017
  %2219 = vmatpush1.bf16.msra.mxu0 %v1016
  %2220 = vmatprep.subr.bf16.mxu0 %v1021
  %2221 = vmatpush1.bf16.msra.mxu0 %v1020
  %2222 = vmatprep.subr.bf16.mxu0 %v1025
  %2223 = vmatpush1.bf16.msra.mxu0 %v1024
  %2224 = vmatprep.subr.bf16.mxu0 %v1029
  %2225 = vmatpush1.bf16.msra.mxu0 %v1028
  %2226 = vmatprep.subr.bf16.mxu0 %v1033
  %2227 = vmatpush1.bf16.msra.mxu0 %v1032
  %2228 = vmatprep.subr.bf16.mxu0 %v1037
  %2229 = vmatpush1.bf16.msra.mxu0 %v1036
  %2230 = vmatprep.subr.bf16.mxu0 %v1041
  %2231 = vmatpush1.bf16.msra.mxu0 %v1040
  %2232 = vmatprep.subr.bf16.mxu0 %v1045
  %2233 = vmatpush1.bf16.msra.mxu0 %v1044
  %2234 = vmatprep.mubr.bf16.mxu0 %v2201
  %2235 = vmatmul.mubr.bf16.gmra.mrb[0].mxu0 %v2200
  %v2236 = vpop.f32.mrb[0].mxu0
  %v2237 = vadd.f32 %v775, %v2236
  %v2238 = vpop.f32.mrb[0].mxu0
  %v2239 = vadd.f32 %v779, %v2238
  %v2240 = vpop.f32.mrb[0].mxu0
  %v2241 = vpop.f32.mrb[0].mxu0
  %2242 = vdwg.mxu0
  %2243 = vmatprep.subr.bf16.mxu0 %v987
  %2244 = vmatpush1.bf16.msra.mxu0 %v986
  %2245 = vmatprep.subr.bf16.mxu0 %v991
  %2246 = vmatpush1.bf16.msra.mxu0 %v990
  %2247 = vmatprep.subr.bf16.mxu0 %v995
  %2248 = vmatpush1.bf16.msra.mxu0 %v994
  %2249 = vmatprep.subr.bf16.mxu0 %v999
  %2250 = vmatpush1.bf16.msra.mxu0 %v998
  %2251 = vmatprep.subr.bf16.mxu0 %v1003
  %2252 = vmatpush1.bf16.msra.mxu0 %v1002
  %2253 = vmatprep.subr.bf16.mxu0 %v1007
  %2254 = vmatpush1.bf16.msra.mxu0 %v1006
  %2255 = vmatprep.subr.bf16.mxu0 %v1011
  %2256 = vmatpush1.bf16.msra.mxu0 %v1010
  %2257 = vmatprep.subr.bf16.mxu0 %v1015
  %2258 = vmatpush1.bf16.msra.mxu0 %v1014
  %2259 = vmatprep.subr.bf16.mxu0 %v1019
  %2260 = vmatpush1.bf16.msra.mxu0 %v1018
  %2261 = vmatprep.subr.bf16.mxu0 %v1023
  %2262 = vmatpush1.bf16.msra.mxu0 %v1022
  %2263 = vmatprep.subr.bf16.mxu0 %v1027
  %2264 = vmatpush1.bf16.msra.mxu0 %v1026
  %2265 = vmatprep.subr.bf16.mxu0 %v1031
  %2266 = vmatpush1.bf16.msra.mxu0 %v1030
  %2267 = vmatprep.subr.bf16.mxu0 %v1035
  %2268 = vmatpush1.bf16.msra.mxu0 %v1034
  %2269 = vmatprep.subr.bf16.mxu0 %v1039
  %2270 = vmatpush1.bf16.msra.mxu0 %v1038
  %2271 = vmatprep.subr.bf16.mxu0 %v1043
  %2272 = vmatpush1.bf16.msra.mxu0 %v1042
  %2273 = vmatprep.subr.bf16.mxu0 %v1047
  %2274 = vmatpush1.bf16.msra.mxu0 %v1046
  %2275 = vmatprep.mubr.bf16.mxu0 %v2201
  %2276 = vmatmul.mubr.bf16.gmra.mrb[0].mxu0 %v2200
  %v2277 = vpop.f32.mrb[0].mxu0
  %v2278 = vadd.f32 %v783, %v2277
  %v2279 = vpop.f32.mrb[0].mxu0
  %v2280 = vadd.f32 %v787, %v2279
  %v2281 = vpop.f32.mrb[0].mxu0
  %v2282 = vpop.f32.mrb[0].mxu0
  %2283 = vdwg.mxu0
  %v2284 = vxor.u32 %v2237, 2147483648
  %v2285 = vmul.f32 %v2284, 1.442695
  %v2286 = vpow.pop %v2285
  %v2287 = vadd.f32 %v2286, 1.0
  %v2288 = vrcp.pop %v2287
  %v2289 = vmul.f32 1.0, %v2288
  %v2290 = vxor.u32 %v2239, 2147483648
  %v2291 = vmul.f32 %v2290, 1.442695
  %v2292 = vpow.pop %v2291
  %v2293 = vadd.f32 %v2292, 1.0
  %v2294 = vrcp.pop %v2293
  %v2295 = vmul.f32 1.0, %v2294
  %v2296 = vtanh.pop %v2278
  %v2297 = vxor.u32 %v2280, 2147483648
  %v2298 = vmul.f32 %v2297, 1.442695
  %v2299 = vpow.pop %v2298
  %v2300 = vadd.f32 %v2299, 1.0
  %v2301 = vrcp.pop %v2300
  %v2302 = vmul.f32 1.0, %v2301
  %v2303 = vmul.f32 %v2295, %v2087
  %v2304 = vmul.f32 %v2289, %v2296
  %v2305 = vadd.f32 %v2303, %v2304
  %v2306 = vtanh.pop %v2305
  %v2307 = vmul.f32 %v2302, %v2306
  %2308 = vmatprep.subr.bf16.mxu0 %v531
  %2309 = vmatpush1.bf16.msra.mxu0 %v530
  %2310 = vmatprep.subr.bf16.mxu0 %v535
  %2311 = vmatpush1.bf16.msra.mxu0 %v534
  %2312 = vmatprep.subr.bf16.mxu0 %v539
  %2313 = vmatpush1.bf16.msra.mxu0 %v538
  %2314 = vmatprep.subr.bf16.mxu0 %v543
  %2315 = vmatpush1.bf16.msra.mxu0 %v542
  %2316 = vmatprep.subr.bf16.mxu0 %v547
  %2317 = vmatpush1.bf16.msra.mxu0 %v546
  %2318 = vmatprep.subr.bf16.mxu0 %v551
  %2319 = vmatpush1.bf16.msra.mxu0 %v550
  %2320 = vmatprep.subr.bf16.mxu0 %v555
  %2321 = vmatpush1.bf16.msra.mxu0 %v554
  %2322 = vmatprep.subr.bf16.mxu0 %v559
  %2323 = vmatpush1.bf16.msra.mxu0 %v558
  %2324 = vmatprep.subr.bf16.mxu0 0
  %2325 = vmatpush1.bf16.msra.mxu0 0
  %2326 = vmatprep.subr.bf16.mxu0 0
  %2327 = vmatpush1.bf16.msra.mxu0 0
  %2328 = vmatprep.subr.bf16.mxu0 0
  %2329 = vmatpush1.bf16.msra.mxu0 0
  %2330 = vmatprep.subr.bf16.mxu0 0
  %2331 = vmatpush1.bf16.msra.mxu0 0
  %2332 = vmatprep.subr.bf16.mxu0 0
  %2333 = vmatpush1.bf16.msra.mxu0 0
  %2334 = vmatprep.subr.bf16.mxu0 0
  %2335 = vmatpush1.bf16.msra.mxu0 0
  %2336 = vmatprep.subr.bf16.mxu0 0
  %2337 = vmatpush1.bf16.msra.mxu0 0
  %2338 = vmatprep.subr.bf16.mxu0 0
  %2339 = vmatpush1.bf16.msra.mxu0 0
  %2340 = vmatprep.mubr.bf16.mxu0 0
  %2341 = vmatmul.mubr.bf16.gmra.mrb[0].mxu0 %v2200
  %v2342 = vpop.f32.mrb[0].mxu0
  %v2343 = vadd.f32 0.0, %v2342
  %v2344 = vpop.f32.mrb[0].mxu0
  %v2345 = vadd.f32 0.0, %v2344
  %v2346 = vpop.f32.mrb[0].mxu0
  %v2347 = vpop.f32.mrb[0].mxu0
  %2348 = vdwg.mxu0
  %2349 = vmatprep.subr.bf16.mxu0 %v533
  %2350 = vmatpush1.bf16.msra.mxu0 %v532
  %2351 = vmatprep.subr.bf16.mxu0 %v537
  %2352 = vmatpush1.bf16.msra.mxu0 %v536
  %2353 = vmatprep.subr.bf16.mxu0 %v541
  %2354 = vmatpush1.bf16.msra.mxu0 %v540
  %2355 = vmatprep.subr.bf16.mxu0 %v545
  %2356 = vmatpush1.bf16.msra.mxu0 %v544
  %2357 = vmatprep.subr.bf16.mxu0 %v549
  %2358 = vmatpush1.bf16.msra.mxu0 %v548
  %2359 = vmatprep.subr.bf16.mxu0 %v553
  %2360 = vmatpush1.bf16.msra.mxu0 %v552
  %2361 = vmatprep.subr.bf16.mxu0 %v557
  %2362 = vmatpush1.bf16.msra.mxu0 %v556
  %2363 = vmatprep.subr.bf16.mxu0 %v561
  %2364 = vmatpush1.bf16.msra.mxu0 %v560
  %2365 = vmatprep.subr.bf16.mxu0 0
  %2366 = vmatpush1.bf16.msra.mxu0 0
  %2367 = vmatprep.subr.bf16.mxu0 0
  %2368 = vmatpush1.bf16.msra.mxu0 0
  %2369 = vmatprep.subr.bf16.mxu0 0
  %2370 = vmatpush1.bf16.msra.mxu0 0
  %2371 = vmatprep.subr.bf16.mxu0 0
  %2372 = vmatpush1.bf16.msra.mxu0 0
  %2373 = vmatprep.subr.bf16.mxu0 0
  %2374 = vmatpush1.bf16.msra.mxu0 0
  %2375 = vmatprep.subr.bf16.mxu0 0
  %2376 = vmatpush1.bf16.msra.mxu0 0
  %2377 = vmatprep.subr.bf16.mxu0 0
  %2378 = vmatpush1.bf16.msra.mxu0 0
  %2379 = vmatprep.subr.bf16.mxu0 0
  %2380 = vmatpush1.bf16.msra.mxu0 0
  %2381 = vmatprep.mubr.bf16.mxu0 0
  %2382 = vmatmul.mubr.bf16.gmra.mrb[0].mxu0 %v2200
  %v2383 = vpop.f32.mrb[0].mxu0
  %v2384 = vadd.f32 0.0, %v2383
  %v2385 = vpop.f32.mrb[0].mxu0
  %v2386 = vadd.f32 0.0, %v2385
  %v2387 = vpop.f32.mrb[0].mxu0
  %v2388 = vpop.f32.mrb[0].mxu0
  %2389 = vdwg.mxu0
  %v2390 = vadd.f32 %v321, %v2343
  %v2391 = vadd.f32 %v323, %v2345
  %v2392 = vadd.f32 %v394, %v2384
  %v2393 = vadd.f32 %v396, %v2386
  %v2394 = vxor.u32 %v2390, 2147483648
  %v2395 = vmul.f32 %v2394, 1.442695
  %v2396 = vpow.pop %v2395
  %v2397 = vadd.f32 %v2396, 1.0
  %v2398 = vrcp.pop %v2397
  %v2399 = vmul.f32 1.0, %v2398
  %v2400 = vxor.u32 %v2391, 2147483648
  %v2401 = vmul.f32 %v2400, 1.442695
  %v2402 = vpow.pop %v2401
  %v2403 = vadd.f32 %v2402, 1.0
  %v2404 = vrcp.pop %v2403
  %v2405 = vmul.f32 1.0, %v2404
  %v2406 = vtanh.pop %v2392
  %v2407 = vxor.u32 %v2393, 2147483648
  %v2408 = vmul.f32 %v2407, 1.442695
  %v2409 = vpow.pop %v2408
  %v2410 = vadd.f32 %v2409, 1.0
  %v2411 = vrcp.pop %v2410
  %v2412 = vmul.f32 1.0, %v2411
  %v2413 = vmul.f32 %v2405, %v2197
  %v2414 = vmul.f32 %v2399, %v2406
  %v2415 = vadd.f32 %v2413, %v2414
  %v2416 = vtanh.pop %v2415
  %v2417 = vmul.f32 %v2412, %v2416
  %v2418 = vpack.c.bf16 %v2417, %v2417
  %v2419 = vpack.c.bf16 %v2307, %v2307
  %2420 = vmatprep.subr.bf16.mxu0 %v985
  %2421 = vmatpush1.bf16.msra.mxu0 %v984
  %2422 = vmatprep.subr.bf16.mxu0 %v989
  %2423 = vmatpush1.bf16.msra.mxu0 %v988
  %2424 = vmatprep.subr.bf16.mxu0 %v993
  %2425 = vmatpush1.bf16.msra.mxu0 %v992
  %2426 = vmatprep.subr.bf16.mxu0 %v997
  %2427 = vmatpush1.bf16.msra.mxu0 %v996
  %2428 = vmatprep.subr.bf16.mxu0 %v1001
  %2429 = vmatpush1.bf16.msra.mxu0 %v1000
  %2430 = vmatprep.subr.bf16.mxu0 %v1005
  %2431 = vmatpush1.bf16.msra.mxu0 %v1004
  %2432 = vmatprep.subr.bf16.mxu0 %v1009
  %2433 = vmatpush1.bf16.msra.mxu0 %v1008
  %2434 = vmatprep.subr.bf16.mxu0 %v1013
  %2435 = vmatpush1.bf16.msra.mxu0 %v1012
  %2436 = vmatprep.subr.bf16.mxu0 %v1017
  %2437 = vmatpush1.bf16.msra.mxu0 %v1016
  %2438 = vmatprep.subr.bf16.mxu0 %v1021
  %2439 = vmatpush1.bf16.msra.mxu0 %v1020
  %2440 = vmatprep.subr.bf16.mxu0 %v1025
  %2441 = vmatpush1.bf16.msra.mxu0 %v1024
  %2442 = vmatprep.subr.bf16.mxu0 %v1029
  %2443 = vmatpush1.bf16.msra.mxu0 %v1028
  %2444 = vmatprep.subr.bf16.mxu0 %v1033
  %2445 = vmatpush1.bf16.msra.mxu0 %v1032
  %2446 = vmatprep.subr.bf16.mxu0 %v1037
  %2447 = vmatpush1.bf16.msra.mxu0 %v1036
  %2448 = vmatprep.subr.bf16.mxu0 %v1041
  %2449 = vmatpush1.bf16.msra.mxu0 %v1040
  %2450 = vmatprep.subr.bf16.mxu0 %v1045
  %2451 = vmatpush1.bf16.msra.mxu0 %v1044
  %2452 = vmatprep.mubr.bf16.mxu0 %v2419
  %2453 = vmatmul.mubr.bf16.gmra.mrb[0].mxu0 %v2418
  %v2454 = vpop.f32.mrb[0].mxu0
  %v2455 = vadd.f32 %v775, %v2454
  %v2456 = vpop.f32.mrb[0].mxu0
  %v2457 = vadd.f32 %v779, %v2456
  %v2458 = vpop.f32.mrb[0].mxu0
  %v2459 = vpop.f32.mrb[0].mxu0
  %2460 = vdwg.mxu0
  %2461 = vmatprep.subr.bf16.mxu0 %v987
  %2462 = vmatpush1.bf16.msra.mxu0 %v986
  %2463 = vmatprep.subr.bf16.mxu0 %v991
  %2464 = vmatpush1.bf16.msra.mxu0 %v990
  %2465 = vmatprep.subr.bf16.mxu0 %v995
  %2466 = vmatpush1.bf16.msra.mxu0 %v994
  %2467 = vmatprep.subr.bf16.mxu0 %v999
  %2468 = vmatpush1.bf16.msra.mxu0 %v998
  %2469 = vmatprep.subr.bf16.mxu0 %v1003
  %2470 = vmatpush1.bf16.msra.mxu0 %v1002
  %2471 = vmatprep.subr.bf16.mxu0 %v1007
  %2472 = vmatpush1.bf16.msra.mxu0 %v1006
  %2473 = vmatprep.subr.bf16.mxu0 %v1011
  %2474 = vmatpush1.bf16.msra.mxu0 %v1010
  %2475 = vmatprep.subr.bf16.mxu0 %v1015
  %2476 = vmatpush1.bf16.msra.mxu0 %v1014
  %2477 = vmatprep.subr.bf16.mxu0 %v1019
  %2478 = vmatpush1.bf16.msra.mxu0 %v1018
  %2479 = vmatprep.subr.bf16.mxu0 %v1023
  %2480 = vmatpush1.bf16.msra.mxu0 %v1022
  %2481 = vmatprep.subr.bf16.mxu0 %v1027
  %2482 = vmatpush1.bf16.msra.mxu0 %v1026
  %2483 = vmatprep.subr.bf16.mxu0 %v1031
  %2484 = vmatpush1.bf16.msra.mxu0 %v1030
  %2485 = vmatprep.subr.bf16.mxu0 %v1035
  %2486 = vmatpush1.bf16.msra.mxu0 %v1034
  %2487 = vmatprep.subr.bf16.mxu0 %v1039
  %2488 = vmatpush1.bf16.msra.mxu0 %v1038
  %2489 = vmatprep.subr.bf16.mxu0 %v1043
  %2490 = vmatpush1.bf16.msra.mxu0 %v1042
  %2491 = vmatprep.subr.bf16.mxu0 %v1047
  %2492 = vmatpush1.bf16.msra.mxu0 %v1046
  %2493 = vmatprep.mubr.bf16.mxu0 %v2419
  %2494 = vmatmul.mubr.bf16.gmra.mrb[0].mxu0 %v2418
  %v2495 = vpop.f32.mrb[0].mxu0
  %v2496 = vadd.f32 %v783, %v2495
  %v2497 = vpop.f32.mrb[0].mxu0
  %v2498 = vadd.f32 %v787, %v2497
  %v2499 = vpop.f32.mrb[0].mxu0
  %v2500 = vpop.f32.mrb[0].mxu0
  %2501 = vdwg.mxu0
  %v2502 = vxor.u32 %v2455, 2147483648
  %v2503 = vmul.f32 %v2502, 1.442695
  %v2504 = vpow.pop %v2503
  %v2505 = vadd.f32 %v2504, 1.0
  %v2506 = vrcp.pop %v2505
  %v2507 = vmul.f32 1.0, %v2506
  %v2508 = vxor.u32 %v2457, 2147483648
  %v2509 = vmul.f32 %v2508, 1.442695
  %v2510 = vpow.pop %v2509
  %v2511 = vadd.f32 %v2510, 1.0
  %v2512 = vrcp.pop %v2511
  %v2513 = vmul.f32 1.0, %v2512
  %v2514 = vtanh.pop %v2496
  %v2515 = vxor.u32 %v2498, 2147483648
  %v2516 = vmul.f32 %v2515, 1.442695
  %v2517 = vpow.pop %v2516
  %v2518 = vadd.f32 %v2517, 1.0
  %v2519 = vrcp.pop %v2518
  %v2520 = vmul.f32 1.0, %v2519
  %v2521 = vmul.f32 %v2513, %v2305
  %v2522 = vmul.f32 %v2507, %v2514
  %v2523 = vadd.f32 %v2521, %v2522
  %v2524 = vtanh.pop %v2523
  %v2525 = vmul.f32 %v2520, %v2524
  %2526 = vmatprep.subr.bf16.mxu0 %v531
  %2527 = vmatpush1.bf16.msra.mxu0 %v530
  %2528 = vmatprep.subr.bf16.mxu0 %v535
  %2529 = vmatpush1.bf16.msra.mxu0 %v534
  %2530 = vmatprep.subr.bf16.mxu0 %v539
  %2531 = vmatpush1.bf16.msra.mxu0 %v538
  %2532 = vmatprep.subr.bf16.mxu0 %v543
  %2533 = vmatpush1.bf16.msra.mxu0 %v542
  %2534 = vmatprep.subr.bf16.mxu0 %v547
  %2535 = vmatpush1.bf16.msra.mxu0 %v546
  %2536 = vmatprep.subr.bf16.mxu0 %v551
  %2537 = vmatpush1.bf16.msra.mxu0 %v550
  %2538 = vmatprep.subr.bf16.mxu0 %v555
  %2539 = vmatpush1.bf16.msra.mxu0 %v554
  %2540 = vmatprep.subr.bf16.mxu0 %v559
  %2541 = vmatpush1.bf16.msra.mxu0 %v558
  %2542 = vmatprep.subr.bf16.mxu0 0
  %2543 = vmatpush1.bf16.msra.mxu0 0
  %2544 = vmatprep.subr.bf16.mxu0 0
  %2545 = vmatpush1.bf16.msra.mxu0 0
  %2546 = vmatprep.subr.bf16.mxu0 0
  %2547 = vmatpush1.bf16.msra.mxu0 0
  %2548 = vmatprep.subr.bf16.mxu0 0
  %2549 = vmatpush1.bf16.msra.mxu0 0
  %2550 = vmatprep.subr.bf16.mxu0 0
  %2551 = vmatpush1.bf16.msra.mxu0 0
  %2552 = vmatprep.subr.bf16.mxu0 0
  %2553 = vmatpush1.bf16.msra.mxu0 0
  %2554 = vmatprep.subr.bf16.mxu0 0
  %2555 = vmatpush1.bf16.msra.mxu0 0
  %2556 = vmatprep.subr.bf16.mxu0 0
  %2557 = vmatpush1.bf16.msra.mxu0 0
  %2558 = vmatprep.mubr.bf16.mxu0 0
  %2559 = vmatmul.mubr.bf16.gmra.mrb[0].mxu0 %v2418
  %v2560 = vpop.f32.mrb[0].mxu0
  %v2561 = vadd.f32 0.0, %v2560
  %v2562 = vpop.f32.mrb[0].mxu0
  %v2563 = vadd.f32 0.0, %v2562
  %v2564 = vpop.f32.mrb[0].mxu0
  %v2565 = vpop.f32.mrb[0].mxu0
  %2566 = vdwg.mxu0
  %2567 = vmatprep.subr.bf16.mxu0 %v533
  %2568 = vmatpush1.bf16.msra.mxu0 %v532
  %2569 = vmatprep.subr.bf16.mxu0 %v537
  %2570 = vmatpush1.bf16.msra.mxu0 %v536
  %2571 = vmatprep.subr.bf16.mxu0 %v541
  %2572 = vmatpush1.bf16.msra.mxu0 %v540
  %2573 = vmatprep.subr.bf16.mxu0 %v545
  %2574 = vmatpush1.bf16.msra.mxu0 %v544
  %2575 = vmatprep.subr.bf16.mxu0 %v549
  %2576 = vmatpush1.bf16.msra.mxu0 %v548
  %2577 = vmatprep.subr.bf16.mxu0 %v553
  %2578 = vmatpush1.bf16.msra.mxu0 %v552
  %2579 = vmatprep.subr.bf16.mxu0 %v557
  %2580 = vmatpush1.bf16.msra.mxu0 %v556
  %2581 = vmatprep.subr.bf16.mxu0 %v561
  %2582 = vmatpush1.bf16.msra.mxu0 %v560
  %2583 = vmatprep.subr.bf16.mxu0 0
  %2584 = vmatpush1.bf16.msra.mxu0 0
  %2585 = vmatprep.subr.bf16.mxu0 0
  %2586 = vmatpush1.bf16.msra.mxu0 0
  %2587 = vmatprep.subr.bf16.mxu0 0
  %2588 = vmatpush1.bf16.msra.mxu0 0
  %2589 = vmatprep.subr.bf16.mxu0 0
  %2590 = vmatpush1.bf16.msra.mxu0 0
  %2591 = vmatprep.subr.bf16.mxu0 0
  %2592 = vmatpush1.bf16.msra.mxu0 0
  %2593 = vmatprep.subr.bf16.mxu0 0
  %2594 = vmatpush1.bf16.msra.mxu0 0
  %2595 = vmatprep.subr.bf16.mxu0 0
  %2596 = vmatpush1.bf16.msra.mxu0 0
  %2597 = vmatprep.subr.bf16.mxu0 0
  %2598 = vmatpush1.bf16.msra.mxu0 0
  %2599 = vmatprep.mubr.bf16.mxu0 0
  %2600 = vmatmul.mubr.bf16.gmra.mrb[0].mxu0 %v2418
  %v2601 = vpop.f32.mrb[0].mxu0
  %v2602 = vadd.f32 0.0, %v2601
  %v2603 = vpop.f32.mrb[0].mxu0
  %v2604 = vadd.f32 0.0, %v2603
  %v2605 = vpop.f32.mrb[0].mxu0
  %v2606 = vpop.f32.mrb[0].mxu0
  %2607 = vdwg.mxu0
  %v2608 = vadd.f32 %v325, %v2561
  %v2609 = vadd.f32 %v327, %v2563
  %v2610 = vadd.f32 %v398, %v2602
  %v2611 = vadd.f32 %v400, %v2604
  %v2612 = vxor.u32 %v2608, 2147483648
  %v2613 = vmul.f32 %v2612, 1.442695
  %v2614 = vpow.pop %v2613
  %v2615 = vadd.f32 %v2614, 1.0
  %v2616 = vrcp.pop %v2615
  %v2617 = vmul.f32 1.0, %v2616
  %v2618 = vxor.u32 %v2609, 2147483648
  %v2619 = vmul.f32 %v2618, 1.442695
  %v2620 = vpow.pop %v2619
  %v2621 = vadd.f32 %v2620, 1.0
  %v2622 = vrcp.pop %v2621
  %v2623 = vmul.f32 1.0, %v2622
  %v2624 = vtanh.pop %v2610
  %v2625 = vxor.u32 %v2611, 2147483648
  %v2626 = vmul.f32 %v2625, 1.442695
  %v2627 = vpow.pop %v2626
  %v2628 = vadd.f32 %v2627, 1.0
  %v2629 = vrcp.pop %v2628
  %v2630 = vmul.f32 1.0, %v2629
  %v2631 = vmul.f32 %v2623, %v2415
  %v2632 = vmul.f32 %v2617, %v2624
  %v2633 = vadd.f32 %v2631, %v2632
  %v2634 = vtanh.pop %v2633
  %v2635 = vmul.f32 %v2630, %v2634
  %v2636 = vpack.c.bf16 %v2635, %v2635
  %v2637 = vpack.c.bf16 %v2525, %v2525
  %2638 = vmatprep.subr.bf16.mxu0 %v985
  %2639 = vmatpush1.bf16.msra.mxu0 %v984
  %2640 = vmatprep.subr.bf16.mxu0 %v989
  %2641 = vmatpush1.bf16.msra.mxu0 %v988
  %2642 = vmatprep.subr.bf16.mxu0 %v993
  %2643 = vmatpush1.bf16.msra.mxu0 %v992
  %2644 = vmatprep.subr.bf16.mxu0 %v997
  %2645 = vmatpush1.bf16.msra.mxu0 %v996
  %2646 = vmatprep.subr.bf16.mxu0 %v1001
  %2647 = vmatpush1.bf16.msra.mxu0 %v1000
  %2648 = vmatprep.subr.bf16.mxu0 %v1005
  %2649 = vmatpush1.bf16.msra.mxu0 %v1004
  %2650 = vmatprep.subr.bf16.mxu0 %v1009
  %2651 = vmatpush1.bf16.msra.mxu0 %v1008
  %2652 = vmatprep.subr.bf16.mxu0 %v1013
  %2653 = vmatpush1.bf16.msra.mxu0 %v1012
  %2654 = vmatprep.subr.bf16.mxu0 %v1017
  %2655 = vmatpush1.bf16.msra.mxu0 %v1016
  %2656 = vmatprep.subr.bf16.mxu0 %v1021
  %2657 = vmatpush1.bf16.msra.mxu0 %v1020
  %2658 = vmatprep.subr.bf16.mxu0 %v1025
  %2659 = vmatpush1.bf16.msra.mxu0 %v1024
  %2660 = vmatprep.subr.bf16.mxu0 %v1029
  %2661 = vmatpush1.bf16.msra.mxu0 %v1028
  %2662 = vmatprep.subr.bf16.mxu0 %v1033
  %2663 = vmatpush1.bf16.msra.mxu0 %v1032
  %2664 = vmatprep.subr.bf16.mxu0 %v1037
  %2665 = vmatpush1.bf16.msra.mxu0 %v1036
  %2666 = vmatprep.subr.bf16.mxu0 %v1041
  %2667 = vmatpush1.bf16.msra.mxu0 %v1040
  %2668 = vmatprep.subr.bf16.mxu0 %v1045
  %2669 = vmatpush1.bf16.msra.mxu0 %v1044
  %2670 = vmatprep.mubr.bf16.mxu0 %v2637
  %2671 = vmatmul.mubr.bf16.gmra.mrb[0].mxu0 %v2636
  %v2672 = vpop.f32.mrb[0].mxu0
  %v2673 = vadd.f32 %v775, %v2672
  %v2674 = vpop.f32.mrb[0].mxu0
  %v2675 = vadd.f32 %v779, %v2674
  %v2676 = vpop.f32.mrb[0].mxu0
  %v2677 = vpop.f32.mrb[0].mxu0
  %2678 = vdwg.mxu0
  %2679 = vmatprep.subr.bf16.mxu0 %v987
  %2680 = vmatpush1.bf16.msra.mxu0 %v986
  %2681 = vmatprep.subr.bf16.mxu0 %v991
  %2682 = vmatpush1.bf16.msra.mxu0 %v990
  %2683 = vmatprep.subr.bf16.mxu0 %v995
  %2684 = vmatpush1.bf16.msra.mxu0 %v994
  %2685 = vmatprep.subr.bf16.mxu0 %v999
  %2686 = vmatpush1.bf16.msra.mxu0 %v998
  %2687 = vmatprep.subr.bf16.mxu0 %v1003
  %2688 = vmatpush1.bf16.msra.mxu0 %v1002
  %2689 = vmatprep.subr.bf16.mxu0 %v1007
  %2690 = vmatpush1.bf16.msra.mxu0 %v1006
  %2691 = vmatprep.subr.bf16.mxu0 %v1011
  %2692 = vmatpush1.bf16.msra.mxu0 %v1010
  %2693 = vmatprep.subr.bf16.mxu0 %v1015
  %2694 = vmatpush1.bf16.msra.mxu0 %v1014
  %2695 = vmatprep.subr.bf16.mxu0 %v1019
  %2696 = vmatpush1.bf16.msra.mxu0 %v1018
  %2697 = vmatprep.subr.bf16.mxu0 %v1023
  %2698 = vmatpush1.bf16.msra.mxu0 %v1022
  %2699 = vmatprep.subr.bf16.mxu0 %v1027
  %2700 = vmatpush1.bf16.msra.mxu0 %v1026
  %2701 = vmatprep.subr.bf16.mxu0 %v1031
  %2702 = vmatpush1.bf16.msra.mxu0 %v1030
  %2703 = vmatprep.subr.bf16.mxu0 %v1035
  %2704 = vmatpush1.bf16.msra.mxu0 %v1034
  %2705 = vmatprep.subr.bf16.mxu0 %v1039
  %2706 = vmatpush1.bf16.msra.mxu0 %v1038
  %2707 = vmatprep.subr.bf16.mxu0 %v1043
  %2708 = vmatpush1.bf16.msra.mxu0 %v1042
  %2709 = vmatprep.subr.bf16.mxu0 %v1047
  %2710 = vmatpush1.bf16.msra.mxu0 %v1046
  %2711 = vmatprep.mubr.bf16.mxu0 %v2637
  %2712 = vmatmul.mubr.bf16.gmra.mrb[0].mxu0 %v2636
  %v2713 = vpop.f32.mrb[0].mxu0
  %v2714 = vadd.f32 %v783, %v2713
  %v2715 = vpop.f32.mrb[0].mxu0
  %v2716 = vadd.f32 %v787, %v2715
  %v2717 = vpop.f32.mrb[0].mxu0
  %v2718 = vpop.f32.mrb[0].mxu0
  %2719 = vdwg.mxu0
  %v2720 = vxor.u32 %v2673, 2147483648
  %v2721 = vmul.f32 %v2720, 1.442695
  %v2722 = vpow.pop %v2721
  %v2723 = vadd.f32 %v2722, 1.0
  %v2724 = vrcp.pop %v2723
  %v2725 = vmul.f32 1.0, %v2724
  %v2726 = vxor.u32 %v2675, 2147483648
  %v2727 = vmul.f32 %v2726, 1.442695
  %v2728 = vpow.pop %v2727
  %v2729 = vadd.f32 %v2728, 1.0
  %v2730 = vrcp.pop %v2729
  %v2731 = vmul.f32 1.0, %v2730
  %v2732 = vtanh.pop %v2714
  %v2733 = vxor.u32 %v2716, 2147483648
  %v2734 = vmul.f32 %v2733, 1.442695
  %v2735 = vpow.pop %v2734
  %v2736 = vadd.f32 %v2735, 1.0
  %v2737 = vrcp.pop %v2736
  %v2738 = vmul.f32 1.0, %v2737
  %v2739 = vmul.f32 %v2731, %v2523
  %v2740 = vmul.f32 %v2725, %v2732
  %v2741 = vadd.f32 %v2739, %v2740
  %v2742 = vtanh.pop %v2741
  %v2743 = vmul.f32 %v2738, %v2742
  %v2744 = vpack.c.bf16 %v2743, %v2743
  %v2745 = vld [vmem:[%s6] sm:$0xf]
  %v2746 = vld [vmem:[%s6 + $0x4] sm:$0xf]
  %v2747 = vld [vmem:[%s6 + $0x8] sm:$0xf]
  %v2748 = vld [vmem:[%s6 + $0xc] sm:$0xf]
  %v2749 = vld [vmem:[%s6 + $0x10] sm:$0xf]
  %v2750 = vld [vmem:[%s6 + $0x14] sm:$0xf]
  %v2751 = vld [vmem:[%s6 + $0x18] sm:$0xf]
  %v2752 = vld [vmem:[%s6 + $0x1c] sm:$0xf]
  %v2753 = vld [vmem:[%s6 + $0x20] sm:$0xf]
  %v2754 = vld [vmem:[%s6 + $0x24] sm:$0xf]
  %v2755 = vld [vmem:[%s6 + $0x28] sm:$0xf]
  %v2756 = vld [vmem:[%s6 + $0x2c] sm:$0xf]
  %v2757 = vld [vmem:[%s6 + $0x30] sm:$0xf]
  %v2758 = vld [vmem:[%s6 + $0x34] sm:$0xf]
  %v2759 = vld [vmem:[%s6 + $0x38] sm:$0xf]
  %v2760 = vld [vmem:[%s6 + $0x3c] sm:$0xf]
  %v2761 = vld [vmem:[%s7] sm:$0x1]
  %v2763 = vlaneseq
  %v2764 = vshrl.u32 %v2763, 7
  %v2765 = vsub.s32 0, %v2764
  %v2766 = vrot.slane %v2761, %v2765
  %v2784 = vunpack.c.l.b16 %v2745
  %v2785 = vunpack.c.l.b16 %v2746
  %v2786 = vunpack.c.l.b16 %v2747
  %v2787 = vunpack.c.l.b16 %v2748
  %v2788 = vunpack.c.l.b16 %v2749
  %v2789 = vunpack.c.l.b16 %v2750
  %v2790 = vunpack.c.l.b16 %v2751
  %v2791 = vunpack.c.l.b16 %v2752
  %v2792 = vunpack.c.l.b16 %v2753
  %v2793 = vunpack.c.l.b16 %v2754
  %v2794 = vunpack.c.l.b16 %v2755
  %v2795 = vunpack.c.l.b16 %v2756
  %v2796 = vunpack.c.l.b16 %v2757
  %v2797 = vunpack.c.l.b16 %v2758
  %v2798 = vunpack.c.l.b16 %v2759
  %v2799 = vunpack.c.l.b16 %v2760
  %v2800 = vpack.c.b16 %v2785, %v2784
  %v2801 = vpack.c.b16 %v2787, %v2786
  %v2802 = vpack.c.b16 %v2789, %v2788
  %v2803 = vpack.c.b16 %v2791, %v2790
  %v2804 = vpack.c.b16 %v2793, %v2792
  %v2805 = vpack.c.b16 %v2795, %v2794
  %v2806 = vpack.c.b16 %v2797, %v2796
  %v2807 = vpack.c.b16 %v2799, %v2798
  %2816 = vmatprep.subr.bf16.mxu0 0
  %2817 = vmatpush1.bf16.msra.mxu0 %v2800
  %2818 = vmatprep.subr.bf16.mxu0 0
  %2819 = vmatpush1.bf16.msra.mxu0 %v2801
  %2820 = vmatprep.subr.bf16.mxu0 0
  %2821 = vmatpush1.bf16.msra.mxu0 %v2802
  %2822 = vmatprep.subr.bf16.mxu0 0
  %2823 = vmatpush1.bf16.msra.mxu0 %v2803
  %2824 = vmatprep.subr.bf16.mxu0 0
  %2825 = vmatpush1.bf16.msra.mxu0 %v2804
  %2826 = vmatprep.subr.bf16.mxu0 0
  %2827 = vmatpush1.bf16.msra.mxu0 %v2805
  %2828 = vmatprep.subr.bf16.mxu0 0
  %2829 = vmatpush1.bf16.msra.mxu0 %v2806
  %2830 = vmatprep.subr.bf16.mxu0 0
  %2831 = vmatpush1.bf16.msra.mxu0 %v2807
  %2832 = vmatprep.subr.bf16.mxu0 0
  %2833 = vmatpush1.bf16.msra.mxu0 0
  %2834 = vmatprep.subr.bf16.mxu0 0
  %2835 = vmatpush1.bf16.msra.mxu0 0
  %2836 = vmatprep.subr.bf16.mxu0 0
  %2837 = vmatpush1.bf16.msra.mxu0 0
  %2838 = vmatprep.subr.bf16.mxu0 0
  %2839 = vmatpush1.bf16.msra.mxu0 0
  %2840 = vmatprep.subr.bf16.mxu0 0
  %2841 = vmatpush1.bf16.msra.mxu0 0
  %2842 = vmatprep.subr.bf16.mxu0 0
  %2843 = vmatpush1.bf16.msra.mxu0 0
  %2844 = vmatprep.subr.bf16.mxu0 0
  %2845 = vmatpush1.bf16.msra.mxu0 0
  %2846 = vmatprep.subr.bf16.mxu0 0
  %2847 = vmatpush1.bf16.msra.mxu0 0
  %2848 = vmatprep.mubr.bf16.mxu0 0
  %2849 = vmatmul.mubr.bf16.gmra.mrb[0].mxu0 %v2744
  %v2850 = vpop.f32.mrb[0].mxu0
  %v2851 = vadd.f32 %v2766, %v2850
  %v2852 = vpop.f32.mrb[0].mxu0
  %v2853 = vpop.f32.mrb[0].mxu0
  %v2854 = vpop.f32.mrb[0].mxu0
  %2855 = vdwg.mxu0
  %vm2856 = vcmask 39936
  %v2857 = vsel %vm2856, %v2851, -inf
  %2858 = vmax.xlane.f32.xlu0 %v2857
  %v2859 = vpop.xlane.xlu0 %2858
  %v2860 = vsub.f32 %v2851, %v2859
  %v2861 = vmul.f32 %v2860, 1.442695
  %v2862 = vpow.pop %v2861
  %v2863 = vsel %vm2856, %v2862, 0.0
  %2864 = vadd.xlane.f32.xlu0 %v2863
  %v2865 = vpop.xlane.xlu0 %2864
  %v2866 = vlog2.pop %v2865
  %v2867 = vmul.f32 %v2866, 0.6931472
  %v2868 = vsub.f32 %v2860, %v2867
  %2869 = vst.msk [vmem:[%s8] sm:$0xff] %vm2856, %v2868
  // Predicated region
  $region34: #{seq_model_forward.1} parent=0 // pred_check
    _
  $region35: #{seq_model_forward.1} parent=0 // pred_check_branch
    %2871 = sbr.rel (0) target = $region37
  $region36: #{seq_model_forward.1} parent=0 // pred_region
    _
  $region37: #{seq_model_forward.1} parent=0 // pred_fallthru
    _
  // Predicated region
  $region38: #{seq_model_forward.1} parent=0 // pred_check
    _
  $region39: #{seq_model_forward.1} parent=0 // pred_check_branch
    %2873 = sbr.rel (0) target = $region41
  $region40: #{seq_model_forward.1} parent=0 // pred_region
    _
  $region41: #{seq_model_forward.1} parent=0 // pred_fallthru
    _

</llo_original>
